<compile_context>
chip_gen: v5e
topology: v5e:2x2
jax: 0.10.0
libtpu: 0.0.40
codegen_flags: <defaults>
</compile_context>

<pallas_src>
import functools

import jax
import jax.numpy as jnp
from jax.experimental import pallas as pl
from jax.experimental.pallas import tpu as pltpu

# ---------------- config (small, consistent with patch14 ViT) ----------------
BATCH = 2
IN_CH = 3
IMG = 28          # 2x2 = 4 patches of 14x14
PATCH = 14
EMBED = 32
HEADS = 2
HEAD_DIM = EMBED // HEADS
DEPTH = 2
MLP_HIDDEN = 4 * EMBED
NUM_LABELS = 1000
EPS = 1e-6

NUM_PATCHES = (IMG // PATCH) ** 2      # 4
TOKENS = NUM_PATCHES + 1               # 5
PATCH_K = IN_CH * PATCH * PATCH        # 588
KPAD = 640                             # 588 padded to a multiple of 128
HEAD_PAD = 1024                        # 1000 padded to a multiple of 128

_VMEM = pl.BlockSpec(memory_space=pltpu.MemorySpace.VMEM)


# ------------------------------ fused Pallas kernel --------------------------
def _layernorm(x, g, b):
    """LayerNorm over the last dim in f32."""
    mu = jnp.mean(x, axis=-1, keepdims=True)
    xc = x - mu
    var = jnp.mean(xc * xc, axis=-1, keepdims=True)
    return xc * jax.lax.rsqrt(var + EPS) * g + b


def _dinov2_fused_kernel(
    patches_ref, patch_w_ref, tok_bias_ref,
    ln1_g_ref, ln1_b_ref,
    qw_ref, qb_ref, kw_ref, kb_ref, vw_ref, vb_ref,
    pw_ref, pb_ref, ls1_ref,
    ln2_g_ref, ln2_b_ref,
    fc1_w_ref, fc1_b_ref, fc2_w_ref, fc2_b_ref, ls2_ref,
    norm_g_ref, norm_b_ref,
    hw_cls_ref, hw_mean_ref, head_b_ref,
    out_ref,
    *, batch, tokens, num_patches,
):
    f32 = jnp.float32
    bf16 = jnp.bfloat16
    depth, heads, embed, head_dim = qw_ref.shape
    bt = batch * tokens
    scale = 1.0 / (head_dim ** 0.5)

    # ---- patch embedding ----
    # The cls-token row of `patches` is all-zeros; cls token, positional
    # embedding and the patch-embed bias are folded into tok_bias.
    tok = jnp.dot(patches_ref[...], patch_w_ref[...], preferred_element_type=f32)
    xt = tok + tok_bias_ref[...]                                   # [B*T, D] f32

    # ---- transformer blocks ----
    for i in range(depth):
        # MHSA
        h = _layernorm(xt, ln1_g_ref[i], ln1_b_ref[i])
        h_b = h.astype(bf16)
        proj = jnp.zeros((bt, embed), f32)
        for hh in range(heads):
            q = jnp.dot(h_b, qw_ref[i, hh], preferred_element_type=f32) + qb_ref[i, hh]
            k = jnp.dot(h_b, kw_ref[i, hh], preferred_element_type=f32) + kb_ref[i, hh]
            v = jnp.dot(h_b, vw_ref[i, hh], preferred_element_type=f32) + vb_ref[i, hh]
            q3 = (q * scale).reshape(batch, tokens, head_dim).astype(bf16)
            k3 = k.reshape(batch, tokens, head_dim).astype(bf16)
            v3 = v.reshape(batch, tokens, head_dim).astype(bf16)
            s = jnp.einsum("btd,bsd->bts", q3, k3, preferred_element_type=f32)
            s = s - jnp.max(s, axis=-1, keepdims=True)
            p = jnp.exp(s)
            p = p * pl.reciprocal(jnp.sum(p, axis=-1, keepdims=True), approx=True)
            o3 = jnp.einsum("bts,bsd->btd", p.astype(bf16), v3,
                            preferred_element_type=f32)
            o2 = o3.reshape(bt, head_dim).astype(bf16)
            # output projection, accumulated per head (proj_w pre-split by rows)
            proj = proj + jnp.dot(o2, pw_ref[i, hh], preferred_element_type=f32)
        proj = proj + pb_ref[i]
        xt = xt + ls1_ref[i] * proj                                # LayerScale + residual

        # MLP
        h2 = _layernorm(xt, ln2_g_ref[i], ln2_b_ref[i])
        m = jnp.dot(h2.astype(bf16), fc1_w_ref[i],
                    preferred_element_type=f32) + fc1_b_ref[i]
        # TODO(synk): DINOv2 MLP uses exact (erf) GELU; tanh approximation here.
        m = jax.nn.gelu(m, approximate=True)
        m2 = jnp.dot(m.astype(bf16), fc2_w_ref[i],
                     preferred_element_type=f32) + fc2_b_ref[i]
        xt = xt + ls2_ref[i] * m2                                  # LayerScale + residual

    # ---- final norm + lc head on [cls, mean(patch_tokens)] ----
    xn = _layernorm(xt, norm_g_ref[...], norm_b_ref[...])
    xn3 = xn.reshape(batch, tokens, embed)
    row = jax.lax.broadcasted_iota(jnp.int32, (batch, tokens, embed), 1)
    cls_tok = jnp.sum(jnp.where(row == 0, xn3, 0.0), axis=1)       # [B, D]
    patch_mean = (jnp.sum(xn3, axis=1) - cls_tok) * (1.0 / num_patches)
    # head_w split by rows == Linear on concat([cls, patch_mean]); padded to 1024 lanes
    logits = (
        jnp.dot(cls_tok.astype(bf16), hw_cls_ref[...], preferred_element_type=f32)
        + jnp.dot(patch_mean.astype(bf16), hw_mean_ref[...], preferred_element_type=f32)
        + head_b_ref[...]
    )
    out_ref[...] = logits.astype(out_ref.dtype)


# ------------------------------- JAX glue ------------------------------------
def patchify(x):
    """NCHW image -> [B, num_patches, C*p*p] with (C, ph, pw) flattening order
    (matches PyTorch Conv2d weight flattening)."""
    b, c, h, w = x.shape
    nh, nw = h // PATCH, w // PATCH
    x = x.reshape(b, c, nh, PATCH, nw, PATCH)
    x = x.transpose(0, 2, 4, 1, 3, 5)          # [B, nh, nw, C, p, p]
    return x.reshape(b, nh * nw, c * PATCH * PATCH)


def init_params(key):
    ks = iter(jax.random.split(key, 64))
    norm = lambda shape, s=0.02: (s * jax.random.normal(next(ks), shape)).astype(jnp.float32)
    zeros = lambda shape: jnp.zeros(shape, jnp.float32)
    ones = lambda shape: jnp.ones(shape, jnp.float32)

    params = {
        "patch_w": norm((PATCH_K, EMBED)),
        "patch_b": zeros((1, EMBED)),
        "cls_token": norm((1, 1, EMBED)),
        "pos_embed": norm((1, TOKENS, EMBED)),
        "norm_g": ones((1, EMBED)),
        "norm_b": zeros((1, EMBED)),
        "head_w": norm((2 * EMBED, NUM_LABELS)),
        "head_b": zeros((1, NUM_LABELS)),
        "blocks": [],
    }
    for _ in range(DEPTH):
        params["blocks"].append({
            "ln1_g": ones((1, EMBED)), "ln1_b": zeros((1, EMBED)),
            "qkv_w": norm((EMBED, 3 * EMBED)), "qkv_b": zeros((1, 3 * EMBED)),
            "proj_w": norm((EMBED, EMBED)), "proj_b": zeros((1, EMBED)),
            "ls1": jnp.full((EMBED,), 1e-5, jnp.float32),
            "ln2_g": ones((1, EMBED)), "ln2_b": zeros((1, EMBED)),
            "fc1_w": norm((EMBED, MLP_HIDDEN)), "fc1_b": zeros((1, MLP_HIDDEN)),
            "fc2_w": norm((MLP_HIDDEN, EMBED)), "fc2_b": zeros((1, EMBED)),
            "ls2": jnp.full((EMBED,), 1e-5, jnp.float32),
        })
    return params


def _pack_params(p):
    """Reorganize logical params into the fused kernel layout: depth-stacked,
    per-head-split attention weights, lane-padded head, bf16 MXU operands."""
    bf16 = jnp.bfloat16

    patch_w = jnp.pad(p["patch_w"], ((0, KPAD - PATCH_K), (0, 0))).astype(bf16)

    # additive per-token bias: pos_embed + (cls token on row 0, patch bias elsewhere)
    row = jnp.arange(TOKENS)[:, None]
    tok_bias = p["pos_embed"][0] + jnp.where(row == 0, p["cls_token"][0], p["patch_b"])

    def stack(name):
        return jnp.stack([blk[name] for blk in p["blocks"]])

    qkv_w = stack("qkv_w").reshape(DEPTH, EMBED, 3, HEADS, HEAD_DIM)
    qkv_w = qkv_w.transpose(0, 2, 3, 1, 4)          # [depth, 3, heads, D, Dh]
    qkv_b = stack("qkv_b").reshape(DEPTH, 1, 3, HEADS, HEAD_DIM)
    qkv_b = qkv_b.transpose(0, 2, 3, 1, 4)          # [depth, 3, heads, 1, Dh]

    head_w = jnp.pad(p["head_w"], ((0, 0), (0, HEAD_PAD - NUM_LABELS)))
    head_b = jnp.pad(p["head_b"], ((0, 0), (0, HEAD_PAD - NUM_LABELS)))

    return dict(
        patch_w=patch_w,
        tok_bias=tok_bias,                                          # [T, D] f32
        ln1_g=stack("ln1_g"), ln1_b=stack("ln1_b"),
        qw=qkv_w[:, 0].astype(bf16), qb=qkv_b[:, 0],
        kw=qkv_w[:, 1].astype(bf16), kb=qkv_b[:, 1],
        vw=qkv_w[:, 2].astype(bf16), vb=qkv_b[:, 2],
        pw=stack("proj_w").reshape(DEPTH, HEADS, HEAD_DIM, EMBED).astype(bf16),
        pb=stack("proj_b"),
        ls1=jnp.stack([blk["ls1"][None, :] for blk in p["blocks"]]),
        ln2_g=stack("ln2_g"), ln2_b=stack("ln2_b"),
        fc1_w=stack("fc1_w").astype(bf16), fc1_b=stack("fc1_b"),
        fc2_w=stack("fc2_w").astype(bf16), fc2_b=stack("fc2_b"),
        ls2=jnp.stack([blk["ls2"][None, :] for blk in p["blocks"]]),
        norm_g=p["norm_g"], norm_b=p["norm_b"],
        hw_cls=head_w[:EMBED].astype(bf16),
        hw_mean=head_w[EMBED:].astype(bf16),
        head_b=head_b,
    )


def dinov2_forward(params, x):
    b = x.shape[0]
    pk = _pack_params(params)

    # patchify (im2col) + zero "cls slot" row + pad K 588 -> 640 for aligned MXU loads
    patches = patchify(x)                                           # [B, N, 588]
    patches = jnp.pad(patches, ((0, 0), (1, 0), (0, KPAD - PATCH_K)))  # [B, T, 640]
    patches = patches.reshape(b * TOKENS, KPAD).astype(jnp.bfloat16)
    tok_bias = jnp.tile(pk["tok_bias"], (b, 1))                     # [B*T, D]

    kernel = functools.partial(
        _dinov2_fused_kernel, batch=b, tokens=TOKENS, num_patches=NUM_PATCHES)

    logits_padded = pl.pallas_call(
        kernel,
        out_shape=jax.ShapeDtypeStruct((b, HEAD_PAD), jnp.float32),
        in_specs=[_VMEM] * 26,
        out_specs=_VMEM,
    )(
        patches, pk["patch_w"], tok_bias,
        pk["ln1_g"], pk["ln1_b"],
        pk["qw"], pk["qb"], pk["kw"], pk["kb"], pk["vw"], pk["vb"],
        pk["pw"], pk["pb"], pk["ls1"],
        pk["ln2_g"], pk["ln2_b"],
        pk["fc1_w"], pk["fc1_b"], pk["fc2_w"], pk["fc2_b"], pk["ls2"],
        pk["norm_g"], pk["norm_b"],
        pk["hw_cls"], pk["hw_mean"], pk["head_b"],
    )
    return logits_padded[:, :NUM_LABELS]


if __name__ == "__main__":
    key = jax.random.PRNGKey(0)
    pkey, xkey = jax.random.split(key)
    params = init_params(pkey)
    x = jax.random.normal(xkey, (BATCH, IN_CH, IMG, IMG), dtype=jnp.float32)

    logits = jax.jit(dinov2_forward)(params, x)
    jax.block_until_ready(logits)
    assert logits.shape == (BATCH, NUM_LABELS), logits.shape
    assert bool(jnp.all(jnp.isfinite(logits)))
    print("KERNEL_OK")
</pallas_src>

<mosaic_0001>
module attributes {stable_mosaic.version = 11 : i64} {
  func.func @_dinov2_fused_kernel(%arg0: memref<10x640xbf16, #tpu.memory_space<vmem>>, %arg1: memref<640x32xbf16, #tpu.memory_space<vmem>>, %arg2: memref<10x32xf32, #tpu.memory_space<vmem>>, %arg3: memref<2x1x32xf32, #tpu.memory_space<vmem>>, %arg4: memref<2x1x32xf32, #tpu.memory_space<vmem>>, %arg5: memref<2x2x32x16xbf16, #tpu.memory_space<vmem>>, %arg6: memref<2x2x1x16xf32, #tpu.memory_space<vmem>>, %arg7: memref<2x2x32x16xbf16, #tpu.memory_space<vmem>>, %arg8: memref<2x2x1x16xf32, #tpu.memory_space<vmem>>, %arg9: memref<2x2x32x16xbf16, #tpu.memory_space<vmem>>, %arg10: memref<2x2x1x16xf32, #tpu.memory_space<vmem>>, %arg11: memref<2x2x16x32xbf16, #tpu.memory_space<vmem>>, %arg12: memref<2x1x32xf32, #tpu.memory_space<vmem>>, %arg13: memref<2x1x32xf32, #tpu.memory_space<vmem>>, %arg14: memref<2x1x32xf32, #tpu.memory_space<vmem>>, %arg15: memref<2x1x32xf32, #tpu.memory_space<vmem>>, %arg16: memref<2x32x128xbf16, #tpu.memory_space<vmem>>, %arg17: memref<2x1x128xf32, #tpu.memory_space<vmem>>, %arg18: memref<2x128x32xbf16, #tpu.memory_space<vmem>>, %arg19: memref<2x1x32xf32, #tpu.memory_space<vmem>>, %arg20: memref<2x1x32xf32, #tpu.memory_space<vmem>>, %arg21: memref<1x32xf32, #tpu.memory_space<vmem>>, %arg22: memref<1x32xf32, #tpu.memory_space<vmem>>, %arg23: memref<32x1024xbf16, #tpu.memory_space<vmem>>, %arg24: memref<32x1024xbf16, #tpu.memory_space<vmem>>, %arg25: memref<1x1024xf32, #tpu.memory_space<vmem>>, %arg26: memref<2x1024xf32, #tpu.memory_space<vmem>>) attributes {dimension_semantics = [], scalar_prefetch = 0 : i64, scratch_operands = 0 : i64, tpu.core_type = #tpu.core_type<tc>} {
    %c0 = arith.constant 0 : index
    %c0_0 = arith.constant 0 : index
    %0 = vector.load %arg0[%c0, %c0_0] : memref<10x640xbf16, #tpu.memory_space<vmem>>, vector<10x640xbf16>
    %c0_1 = arith.constant 0 : index
    %c0_2 = arith.constant 0 : index
    %1 = vector.load %arg1[%c0_1, %c0_2] : memref<640x32xbf16, #tpu.memory_space<vmem>>, vector<640x32xbf16>
    %cst = arith.constant dense<0.000000e+00> : vector<10x32xf32>
    %2 = tpu.matmul %0, %1, %cst {dimension_numbers = #tpu.dot_dimension_numbers<[1], [0], [0], [1], [0, 0, 1, 1], [], []>} : vector<10x640xbf16>, vector<640x32xbf16>, vector<10x32xf32> -> vector<10x32xf32>
    %c0_3 = arith.constant 0 : index
    %c0_4 = arith.constant 0 : index
    %3 = vector.load %arg2[%c0_3, %c0_4] : memref<10x32xf32, #tpu.memory_space<vmem>>, vector<10x32xf32>
    %4 = arith.addf %2, %3 : vector<10x32xf32>
    %c0_5 = arith.constant 0 : index
    %c0_6 = arith.constant 0 : index
    %c0_7 = arith.constant 0 : index
    %5 = vector.load %arg3[%c0_5, %c0_6, %c0_7] : memref<2x1x32xf32, #tpu.memory_space<vmem>>, vector<1x1x32xf32>
    %6 = vector.shape_cast %5 : vector<1x1x32xf32> to vector<1x32xf32>
    %c0_8 = arith.constant 0 : index
    %c0_9 = arith.constant 0 : index
    %c0_10 = arith.constant 0 : index
    %7 = vector.load %arg4[%c0_8, %c0_9, %c0_10] : memref<2x1x32xf32, #tpu.memory_space<vmem>>, vector<1x1x32xf32>
    %8 = vector.shape_cast %7 : vector<1x1x32xf32> to vector<1x32xf32>
    %cst_11 = arith.constant dense<0.000000e+00> : vector<10xf32>
    %9 = vector.multi_reduction <add>, %4, %cst_11 [1] : vector<10x32xf32> to vector<10xf32>
    %10 = vector.shape_cast %9 : vector<10xf32> to vector<10x1xf32>
    %cst_12 = arith.constant 3.200000e+01 : f32
    %11 = vector.broadcast %cst_12 : f32 to vector<10x1xf32>
    %12 = arith.divf %10, %11 : vector<10x1xf32>
    %13 = vector.broadcast %12 : vector<10x1xf32> to vector<10x32xf32>
    %14 = arith.subf %4, %13 : vector<10x32xf32>
    %15 = arith.mulf %14, %14 : vector<10x32xf32>
    %cst_13 = arith.constant dense<0.000000e+00> : vector<10xf32>
    %16 = vector.multi_reduction <add>, %15, %cst_13 [1] : vector<10x32xf32> to vector<10xf32>
    %17 = vector.shape_cast %16 : vector<10xf32> to vector<10x1xf32>
    %cst_14 = arith.constant 3.200000e+01 : f32
    %18 = vector.broadcast %cst_14 : f32 to vector<10x1xf32>
    %19 = arith.divf %17, %18 : vector<10x1xf32>
    %cst_15 = arith.constant 9.99999997E-7 : f32
    %20 = vector.broadcast %cst_15 : f32 to vector<10x1xf32>
    %21 = arith.addf %19, %20 : vector<10x1xf32>
    %22 = math.rsqrt %21 : vector<10x1xf32>
    %23 = vector.broadcast %22 : vector<10x1xf32> to vector<10x32xf32>
    %24 = arith.mulf %14, %23 : vector<10x32xf32>
    %25 = vector.broadcast %6 : vector<1x32xf32> to vector<10x32xf32>
    %26 = arith.mulf %24, %25 : vector<10x32xf32>
    %27 = vector.broadcast %8 : vector<1x32xf32> to vector<10x32xf32>
    %28 = arith.addf %26, %27 : vector<10x32xf32>
    %29 = arith.truncf %28 : vector<10x32xf32> to vector<10x32xbf16>
    %cst_16 = arith.constant 0.000000e+00 : f32
    %30 = vector.broadcast %cst_16 : f32 to vector<10x32xf32>
    %c0_17 = arith.constant 0 : index
    %c0_18 = arith.constant 0 : index
    %c0_19 = arith.constant 0 : index
    %c0_20 = arith.constant 0 : index
    %31 = vector.load %arg5[%c0_17, %c0_18, %c0_19, %c0_20] : memref<2x2x32x16xbf16, #tpu.memory_space<vmem>>, vector<1x1x32x16xbf16>
    %32 = vector.shape_cast %31 : vector<1x1x32x16xbf16> to vector<32x16xbf16>
    %cst_21 = arith.constant dense<0.000000e+00> : vector<10x16xf32>
    %33 = tpu.matmul %29, %32, %cst_21 {dimension_numbers = #tpu.dot_dimension_numbers<[1], [0], [0], [1], [0, 0, 1, 1], [], []>} : vector<10x32xbf16>, vector<32x16xbf16>, vector<10x16xf32> -> vector<10x16xf32>
    %c0_22 = arith.constant 0 : index
    %c0_23 = arith.constant 0 : index
    %c0_24 = arith.constant 0 : index
    %c0_25 = arith.constant 0 : index
    %34 = vector.load %arg6[%c0_22, %c0_23, %c0_24, %c0_25] : memref<2x2x1x16xf32, #tpu.memory_space<vmem>>, vector<1x1x1x16xf32>
    %35 = vector.shape_cast %34 : vector<1x1x1x16xf32> to vector<1x16xf32>
    %36 = vector.broadcast %35 : vector<1x16xf32> to vector<10x16xf32>
    %37 = arith.addf %33, %36 : vector<10x16xf32>
    %c0_26 = arith.constant 0 : index
    %c0_27 = arith.constant 0 : index
    %c0_28 = arith.constant 0 : index
    %c0_29 = arith.constant 0 : index
    %38 = vector.load %arg7[%c0_26, %c0_27, %c0_28, %c0_29] : memref<2x2x32x16xbf16, #tpu.memory_space<vmem>>, vector<1x1x32x16xbf16>
    %39 = vector.shape_cast %38 : vector<1x1x32x16xbf16> to vector<32x16xbf16>
    %cst_30 = arith.constant dense<0.000000e+00> : vector<10x16xf32>
    %40 = tpu.matmul %29, %39, %cst_30 {dimension_numbers = #tpu.dot_dimension_numbers<[1], [0], [0], [1], [0, 0, 1, 1], [], []>} : vector<10x32xbf16>, vector<32x16xbf16>, vector<10x16xf32> -> vector<10x16xf32>
    %c0_31 = arith.constant 0 : index
    %c0_32 = arith.constant 0 : index
    %c0_33 = arith.constant 0 : index
    %c0_34 = arith.constant 0 : index
    %41 = vector.load %arg8[%c0_31, %c0_32, %c0_33, %c0_34] : memref<2x2x1x16xf32, #tpu.memory_space<vmem>>, vector<1x1x1x16xf32>
    %42 = vector.shape_cast %41 : vector<1x1x1x16xf32> to vector<1x16xf32>
    %43 = vector.broadcast %42 : vector<1x16xf32> to vector<10x16xf32>
    %44 = arith.addf %40, %43 : vector<10x16xf32>
    %c0_35 = arith.constant 0 : index
    %c0_36 = arith.constant 0 : index
    %c0_37 = arith.constant 0 : index
    %c0_38 = arith.constant 0 : index
    %45 = vector.load %arg9[%c0_35, %c0_36, %c0_37, %c0_38] : memref<2x2x32x16xbf16, #tpu.memory_space<vmem>>, vector<1x1x32x16xbf16>
    %46 = vector.shape_cast %45 : vector<1x1x32x16xbf16> to vector<32x16xbf16>
    %cst_39 = arith.constant dense<0.000000e+00> : vector<10x16xf32>
    %47 = tpu.matmul %29, %46, %cst_39 {dimension_numbers = #tpu.dot_dimension_numbers<[1], [0], [0], [1], [0, 0, 1, 1], [], []>} : vector<10x32xbf16>, vector<32x16xbf16>, vector<10x16xf32> -> vector<10x16xf32>
    %c0_40 = arith.constant 0 : index
    %c0_41 = arith.constant 0 : index
    %c0_42 = arith.constant 0 : index
    %c0_43 = arith.constant 0 : index
    %48 = vector.load %arg10[%c0_40, %c0_41, %c0_42, %c0_43] : memref<2x2x1x16xf32, #tpu.memory_space<vmem>>, vector<1x1x1x16xf32>
    %49 = vector.shape_cast %48 : vector<1x1x1x16xf32> to vector<1x16xf32>
    %50 = vector.broadcast %49 : vector<1x16xf32> to vector<10x16xf32>
    %51 = arith.addf %47, %50 : vector<10x16xf32>
    %cst_44 = arith.constant 2.500000e-01 : f32
    %52 = vector.broadcast %cst_44 : f32 to vector<10x16xf32>
    %53 = arith.mulf %37, %52 : vector<10x16xf32>
    %54 = vector.shape_cast %53 : vector<10x16xf32> to vector<2x5x16xf32>
    %55 = arith.truncf %54 : vector<2x5x16xf32> to vector<2x5x16xbf16>
    %56 = vector.shape_cast %44 : vector<10x16xf32> to vector<2x5x16xf32>
    %57 = arith.truncf %56 : vector<2x5x16xf32> to vector<2x5x16xbf16>
    %58 = vector.shape_cast %51 : vector<10x16xf32> to vector<2x5x16xf32>
    %59 = arith.truncf %58 : vector<2x5x16xf32> to vector<2x5x16xbf16>
    "tpu.trace_start"() <{level = 10 : i32, message = "btd,bsd->bts"}> : () -> ()
    %cst_45 = arith.constant dense<0.000000e+00> : vector<2x5x5xf32>
    %60 = tpu.matmul %55, %57, %cst_45 {dimension_numbers = #tpu.dot_dimension_numbers<[2], [2], [1], [1], [0, 0, 0, 1, 1, 1], [0], [0]>} : vector<2x5x16xbf16>, vector<2x5x16xbf16>, vector<2x5x5xf32> -> vector<2x5x5xf32>
    "tpu.trace_stop"() : () -> ()
    %cst_46 = arith.constant dense<0xFF800000> : vector<2x5xf32>
    %61 = vector.multi_reduction <maximumf>, %60, %cst_46 [2] : vector<2x5x5xf32> to vector<2x5xf32>
    %62 = vector.shape_cast %61 : vector<2x5xf32> to vector<2x5x1xf32>
    %63 = vector.broadcast %62 : vector<2x5x1xf32> to vector<2x5x5xf32>
    %64 = arith.subf %60, %63 : vector<2x5x5xf32>
    %65 = math.exp %64 : vector<2x5x5xf32>
    %cst_47 = arith.constant dense<0.000000e+00> : vector<2x5xf32>
    %66 = vector.multi_reduction <add>, %65, %cst_47 [2] : vector<2x5x5xf32> to vector<2x5xf32>
    %67 = vector.shape_cast %66 : vector<2x5xf32> to vector<2x5x1xf32>
    %68 = tpu.reciprocal %67 {approx = true} : vector<2x5x1xf32> -> vector<2x5x1xf32>
    %69 = vector.broadcast %68 : vector<2x5x1xf32> to vector<2x5x5xf32>
    %70 = arith.mulf %65, %69 : vector<2x5x5xf32>
    %71 = arith.truncf %70 : vector<2x5x5xf32> to vector<2x5x5xbf16>
    "tpu.trace_start"() <{level = 10 : i32, message = "bts,bsd->btd"}> : () -> ()
    %cst_48 = arith.constant dense<0.000000e+00> : vector<2x5x16xf32>
    %72 = tpu.matmul %71, %59, %cst_48 {dimension_numbers = #tpu.dot_dimension_numbers<[2], [1], [1], [2], [0, 0, 0, 1, 1, 2], [0], [0]>} : vector<2x5x5xbf16>, vector<2x5x16xbf16>, vector<2x5x16xf32> -> vector<2x5x16xf32>
    "tpu.trace_stop"() : () -> ()
    %73 = vector.shape_cast %72 : vector<2x5x16xf32> to vector<10x16xf32>
    %74 = arith.truncf %73 : vector<10x16xf32> to vector<10x16xbf16>
    %c0_49 = arith.constant 0 : index
    %c0_50 = arith.constant 0 : index
    %c0_51 = arith.constant 0 : index
    %c0_52 = arith.constant 0 : index
    %75 = vector.load %arg11[%c0_49, %c0_50, %c0_51, %c0_52] : memref<2x2x16x32xbf16, #tpu.memory_space<vmem>>, vector<1x1x16x32xbf16>
    %76 = vector.shape_cast %75 : vector<1x1x16x32xbf16> to vector<16x32xbf16>
    %cst_53 = arith.constant dense<0.000000e+00> : vector<10x32xf32>
    %77 = tpu.matmul %74, %76, %cst_53 {dimension_numbers = #tpu.dot_dimension_numbers<[1], [0], [0], [1], [0, 0, 1, 1], [], []>} : vector<10x16xbf16>, vector<16x32xbf16>, vector<10x32xf32> -> vector<10x32xf32>
    %78 = arith.addf %30, %77 : vector<10x32xf32>
    %c0_54 = arith.constant 0 : index
    %c1 = arith.constant 1 : index
    %c0_55 = arith.constant 0 : index
    %c0_56 = arith.constant 0 : index
    %79 = vector.load %arg5[%c0_54, %c1, %c0_55, %c0_56] : memref<2x2x32x16xbf16, #tpu.memory_space<vmem>>, vector<1x1x32x16xbf16>
    %80 = vector.shape_cast %79 : vector<1x1x32x16xbf16> to vector<32x16xbf16>
    %cst_57 = arith.constant dense<0.000000e+00> : vector<10x16xf32>
    %81 = tpu.matmul %29, %80, %cst_57 {dimension_numbers = #tpu.dot_dimension_numbers<[1], [0], [0], [1], [0, 0, 1, 1], [], []>} : vector<10x32xbf16>, vector<32x16xbf16>, vector<10x16xf32> -> vector<10x16xf32>
    %c0_58 = arith.constant 0 : index
    %c1_59 = arith.constant 1 : index
    %c0_60 = arith.constant 0 : index
    %c0_61 = arith.constant 0 : index
    %82 = vector.load %arg6[%c0_58, %c1_59, %c0_60, %c0_61] : memref<2x2x1x16xf32, #tpu.memory_space<vmem>>, vector<1x1x1x16xf32>
    %83 = vector.shape_cast %82 : vector<1x1x1x16xf32> to vector<1x16xf32>
    %84 = vector.broadcast %83 : vector<1x16xf32> to vector<10x16xf32>
    %85 = arith.addf %81, %84 : vector<10x16xf32>
    %c0_62 = arith.constant 0 : index
    %c1_63 = arith.constant 1 : index
    %c0_64 = arith.constant 0 : index
    %c0_65 = arith.constant 0 : index
    %86 = vector.load %arg7[%c0_62, %c1_63, %c0_64, %c0_65] : memref<2x2x32x16xbf16, #tpu.memory_space<vmem>>, vector<1x1x32x16xbf16>
    %87 = vector.shape_cast %86 : vector<1x1x32x16xbf16> to vector<32x16xbf16>
    %cst_66 = arith.constant dense<0.000000e+00> : vector<10x16xf32>
    %88 = tpu.matmul %29, %87, %cst_66 {dimension_numbers = #tpu.dot_dimension_numbers<[1], [0], [0], [1], [0, 0, 1, 1], [], []>} : vector<10x32xbf16>, vector<32x16xbf16>, vector<10x16xf32> -> vector<10x16xf32>
    %c0_67 = arith.constant 0 : index
    %c1_68 = arith.constant 1 : index
    %c0_69 = arith.constant 0 : index
    %c0_70 = arith.constant 0 : index
    %89 = vector.load %arg8[%c0_67, %c1_68, %c0_69, %c0_70] : memref<2x2x1x16xf32, #tpu.memory_space<vmem>>, vector<1x1x1x16xf32>
    %90 = vector.shape_cast %89 : vector<1x1x1x16xf32> to vector<1x16xf32>
    %91 = vector.broadcast %90 : vector<1x16xf32> to vector<10x16xf32>
    %92 = arith.addf %88, %91 : vector<10x16xf32>
    %c0_71 = arith.constant 0 : index
    %c1_72 = arith.constant 1 : index
    %c0_73 = arith.constant 0 : index
    %c0_74 = arith.constant 0 : index
    %93 = vector.load %arg9[%c0_71, %c1_72, %c0_73, %c0_74] : memref<2x2x32x16xbf16, #tpu.memory_space<vmem>>, vector<1x1x32x16xbf16>
    %94 = vector.shape_cast %93 : vector<1x1x32x16xbf16> to vector<32x16xbf16>
    %cst_75 = arith.constant dense<0.000000e+00> : vector<10x16xf32>
    %95 = tpu.matmul %29, %94, %cst_75 {dimension_numbers = #tpu.dot_dimension_numbers<[1], [0], [0], [1], [0, 0, 1, 1], [], []>} : vector<10x32xbf16>, vector<32x16xbf16>, vector<10x16xf32> -> vector<10x16xf32>
    %c0_76 = arith.constant 0 : index
    %c1_77 = arith.constant 1 : index
    %c0_78 = arith.constant 0 : index
    %c0_79 = arith.constant 0 : index
    %96 = vector.load %arg10[%c0_76, %c1_77, %c0_78, %c0_79] : memref<2x2x1x16xf32, #tpu.memory_space<vmem>>, vector<1x1x1x16xf32>
    %97 = vector.shape_cast %96 : vector<1x1x1x16xf32> to vector<1x16xf32>
    %98 = vector.broadcast %97 : vector<1x16xf32> to vector<10x16xf32>
    %99 = arith.addf %95, %98 : vector<10x16xf32>
    %cst_80 = arith.constant 2.500000e-01 : f32
    %100 = vector.broadcast %cst_80 : f32 to vector<10x16xf32>
    %101 = arith.mulf %85, %100 : vector<10x16xf32>
    %102 = vector.shape_cast %101 : vector<10x16xf32> to vector<2x5x16xf32>
    %103 = arith.truncf %102 : vector<2x5x16xf32> to vector<2x5x16xbf16>
    %104 = vector.shape_cast %92 : vector<10x16xf32> to vector<2x5x16xf32>
    %105 = arith.truncf %104 : vector<2x5x16xf32> to vector<2x5x16xbf16>
    %106 = vector.shape_cast %99 : vector<10x16xf32> to vector<2x5x16xf32>
    %107 = arith.truncf %106 : vector<2x5x16xf32> to vector<2x5x16xbf16>
    "tpu.trace_start"() <{level = 10 : i32, message = "btd,bsd->bts"}> : () -> ()
    %cst_81 = arith.constant dense<0.000000e+00> : vector<2x5x5xf32>
    %108 = tpu.matmul %103, %105, %cst_81 {dimension_numbers = #tpu.dot_dimension_numbers<[2], [2], [1], [1], [0, 0, 0, 1, 1, 1], [0], [0]>} : vector<2x5x16xbf16>, vector<2x5x16xbf16>, vector<2x5x5xf32> -> vector<2x5x5xf32>
    "tpu.trace_stop"() : () -> ()
    %cst_82 = arith.constant dense<0xFF800000> : vector<2x5xf32>
    %109 = vector.multi_reduction <maximumf>, %108, %cst_82 [2] : vector<2x5x5xf32> to vector<2x5xf32>
    %110 = vector.shape_cast %109 : vector<2x5xf32> to vector<2x5x1xf32>
    %111 = vector.broadcast %110 : vector<2x5x1xf32> to vector<2x5x5xf32>
    %112 = arith.subf %108, %111 : vector<2x5x5xf32>
    %113 = math.exp %112 : vector<2x5x5xf32>
    %cst_83 = arith.constant dense<0.000000e+00> : vector<2x5xf32>
    %114 = vector.multi_reduction <add>, %113, %cst_83 [2] : vector<2x5x5xf32> to vector<2x5xf32>
    %115 = vector.shape_cast %114 : vector<2x5xf32> to vector<2x5x1xf32>
    %116 = tpu.reciprocal %115 {approx = true} : vector<2x5x1xf32> -> vector<2x5x1xf32>
    %117 = vector.broadcast %116 : vector<2x5x1xf32> to vector<2x5x5xf32>
    %118 = arith.mulf %113, %117 : vector<2x5x5xf32>
    %119 = arith.truncf %118 : vector<2x5x5xf32> to vector<2x5x5xbf16>
    "tpu.trace_start"() <{level = 10 : i32, message = "bts,bsd->btd"}> : () -> ()
    %cst_84 = arith.constant dense<0.000000e+00> : vector<2x5x16xf32>
    %120 = tpu.matmul %119, %107, %cst_84 {dimension_numbers = #tpu.dot_dimension_numbers<[2], [1], [1], [2], [0, 0, 0, 1, 1, 2], [0], [0]>} : vector<2x5x5xbf16>, vector<2x5x16xbf16>, vector<2x5x16xf32> -> vector<2x5x16xf32>
    "tpu.trace_stop"() : () -> ()
    %121 = vector.shape_cast %120 : vector<2x5x16xf32> to vector<10x16xf32>
    %122 = arith.truncf %121 : vector<10x16xf32> to vector<10x16xbf16>
    %c0_85 = arith.constant 0 : index
    %c1_86 = arith.constant 1 : index
    %c0_87 = arith.constant 0 : index
    %c0_88 = arith.constant 0 : index
    %123 = vector.load %arg11[%c0_85, %c1_86, %c0_87, %c0_88] : memref<2x2x16x32xbf16, #tpu.memory_space<vmem>>, vector<1x1x16x32xbf16>
    %124 = vector.shape_cast %123 : vector<1x1x16x32xbf16> to vector<16x32xbf16>
    %cst_89 = arith.constant dense<0.000000e+00> : vector<10x32xf32>
    %125 = tpu.matmul %122, %124, %cst_89 {dimension_numbers = #tpu.dot_dimension_numbers<[1], [0], [0], [1], [0, 0, 1, 1], [], []>} : vector<10x16xbf16>, vector<16x32xbf16>, vector<10x32xf32> -> vector<10x32xf32>
    %126 = arith.addf %78, %125 : vector<10x32xf32>
    %c0_90 = arith.constant 0 : index
    %c0_91 = arith.constant 0 : index
    %c0_92 = arith.constant 0 : index
    %127 = vector.load %arg12[%c0_90, %c0_91, %c0_92] : memref<2x1x32xf32, #tpu.memory_space<vmem>>, vector<1x1x32xf32>
    %128 = vector.shape_cast %127 : vector<1x1x32xf32> to vector<1x32xf32>
    %129 = vector.broadcast %128 : vector<1x32xf32> to vector<10x32xf32>
    %130 = arith.addf %126, %129 : vector<10x32xf32>
    %c0_93 = arith.constant 0 : index
    %c0_94 = arith.constant 0 : index
    %c0_95 = arith.constant 0 : index
    %131 = vector.load %arg13[%c0_93, %c0_94, %c0_95] : memref<2x1x32xf32, #tpu.memory_space<vmem>>, vector<1x1x32xf32>
    %132 = vector.shape_cast %131 : vector<1x1x32xf32> to vector<1x32xf32>
    %133 = vector.broadcast %132 : vector<1x32xf32> to vector<10x32xf32>
    %134 = arith.mulf %133, %130 : vector<10x32xf32>
    %135 = arith.addf %4, %134 : vector<10x32xf32>
    %c0_96 = arith.constant 0 : index
    %c0_97 = arith.constant 0 : index
    %c0_98 = arith.constant 0 : index
    %136 = vector.load %arg14[%c0_96, %c0_97, %c0_98] : memref<2x1x32xf32, #tpu.memory_space<vmem>>, vector<1x1x32xf32>
    %137 = vector.shape_cast %136 : vector<1x1x32xf32> to vector<1x32xf32>
    %c0_99 = arith.constant 0 : index
    %c0_100 = arith.constant 0 : index
    %c0_101 = arith.constant 0 : index
    %138 = vector.load %arg15[%c0_99, %c0_100, %c0_101] : memref<2x1x32xf32, #tpu.memory_space<vmem>>, vector<1x1x32xf32>
    %139 = vector.shape_cast %138 : vector<1x1x32xf32> to vector<1x32xf32>
    %cst_102 = arith.constant dense<0.000000e+00> : vector<10xf32>
    %140 = vector.multi_reduction <add>, %135, %cst_102 [1] : vector<10x32xf32> to vector<10xf32>
    %141 = vector.shape_cast %140 : vector<10xf32> to vector<10x1xf32>
    %cst_103 = arith.constant 3.200000e+01 : f32
    %142 = vector.broadcast %cst_103 : f32 to vector<10x1xf32>
    %143 = arith.divf %141, %142 : vector<10x1xf32>
    %144 = vector.broadcast %143 : vector<10x1xf32> to vector<10x32xf32>
    %145 = arith.subf %135, %144 : vector<10x32xf32>
    %146 = arith.mulf %145, %145 : vector<10x32xf32>
    %cst_104 = arith.constant dense<0.000000e+00> : vector<10xf32>
    %147 = vector.multi_reduction <add>, %146, %cst_104 [1] : vector<10x32xf32> to vector<10xf32>
    %148 = vector.shape_cast %147 : vector<10xf32> to vector<10x1xf32>
    %cst_105 = arith.constant 3.200000e+01 : f32
    %149 = vector.broadcast %cst_105 : f32 to vector<10x1xf32>
    %150 = arith.divf %148, %149 : vector<10x1xf32>
    %cst_106 = arith.constant 9.99999997E-7 : f32
    %151 = vector.broadcast %cst_106 : f32 to vector<10x1xf32>
    %152 = arith.addf %150, %151 : vector<10x1xf32>
    %153 = math.rsqrt %152 : vector<10x1xf32>
    %154 = vector.broadcast %153 : vector<10x1xf32> to vector<10x32xf32>
    %155 = arith.mulf %145, %154 : vector<10x32xf32>
    %156 = vector.broadcast %137 : vector<1x32xf32> to vector<10x32xf32>
    %157 = arith.mulf %155, %156 : vector<10x32xf32>
    %158 = vector.broadcast %139 : vector<1x32xf32> to vector<10x32xf32>
    %159 = arith.addf %157, %158 : vector<10x32xf32>
    %160 = arith.truncf %159 : vector<10x32xf32> to vector<10x32xbf16>
    %c0_107 = arith.constant 0 : index
    %c0_108 = arith.constant 0 : index
    %c0_109 = arith.constant 0 : index
    %161 = vector.load %arg16[%c0_107, %c0_108, %c0_109] : memref<2x32x128xbf16, #tpu.memory_space<vmem>>, vector<1x32x128xbf16>
    %162 = vector.shape_cast %161 : vector<1x32x128xbf16> to vector<32x128xbf16>
    %cst_110 = arith.constant dense<0.000000e+00> : vector<10x128xf32>
    %163 = tpu.matmul %160, %162, %cst_110 {dimension_numbers = #tpu.dot_dimension_numbers<[1], [0], [0], [1], [0, 0, 1, 1], [], []>} : vector<10x32xbf16>, vector<32x128xbf16>, vector<10x128xf32> -> vector<10x128xf32>
    %c0_111 = arith.constant 0 : index
    %c0_112 = arith.constant 0 : index
    %c0_113 = arith.constant 0 : index
    %164 = vector.load %arg17[%c0_111, %c0_112, %c0_113] : memref<2x1x128xf32, #tpu.memory_space<vmem>>, vector<1x1x128xf32>
    %165 = vector.shape_cast %164 : vector<1x1x128xf32> to vector<1x128xf32>
    %166 = vector.broadcast %165 : vector<1x128xf32> to vector<10x128xf32>
    %167 = arith.addf %163, %166 : vector<10x128xf32>
    %168 = arith.mulf %167, %167 : vector<10x128xf32>
    %169 = arith.mulf %167, %168 : vector<10x128xf32>
    %cst_114 = arith.constant 4.471500e-02 : f32
    %170 = vector.broadcast %cst_114 : f32 to vector<10x128xf32>
    %171 = arith.mulf %170, %169 : vector<10x128xf32>
    %172 = arith.addf %167, %171 : vector<10x128xf32>
    %cst_115 = arith.constant 0.797884583 : f32
    %173 = vector.broadcast %cst_115 : f32 to vector<10x128xf32>
    %174 = arith.mulf %173, %172 : vector<10x128xf32>
    %175 = math.tanh %174 : vector<10x128xf32>
    %cst_116 = arith.constant 1.000000e+00 : f32
    %176 = vector.broadcast %cst_116 : f32 to vector<10x128xf32>
    %177 = arith.addf %176, %175 : vector<10x128xf32>
    %cst_117 = arith.constant 5.000000e-01 : f32
    %178 = vector.broadcast %cst_117 : f32 to vector<10x128xf32>
    %179 = arith.mulf %178, %177 : vector<10x128xf32>
    %180 = arith.mulf %167, %179 : vector<10x128xf32>
    %181 = arith.truncf %180 : vector<10x128xf32> to vector<10x128xbf16>
    %c0_118 = arith.constant 0 : index
    %c0_119 = arith.constant 0 : index
    %c0_120 = arith.constant 0 : index
    %182 = vector.load %arg18[%c0_118, %c0_119, %c0_120] : memref<2x128x32xbf16, #tpu.memory_space<vmem>>, vector<1x128x32xbf16>
    %183 = vector.shape_cast %182 : vector<1x128x32xbf16> to vector<128x32xbf16>
    %cst_121 = arith.constant dense<0.000000e+00> : vector<10x32xf32>
    %184 = tpu.matmul %181, %183, %cst_121 {dimension_numbers = #tpu.dot_dimension_numbers<[1], [0], [0], [1], [0, 0, 1, 1], [], []>} : vector<10x128xbf16>, vector<128x32xbf16>, vector<10x32xf32> -> vector<10x32xf32>
    %c0_122 = arith.constant 0 : index
    %c0_123 = arith.constant 0 : index
    %c0_124 = arith.constant 0 : index
    %185 = vector.load %arg19[%c0_122, %c0_123, %c0_124] : memref<2x1x32xf32, #tpu.memory_space<vmem>>, vector<1x1x32xf32>
    %186 = vector.shape_cast %185 : vector<1x1x32xf32> to vector<1x32xf32>
    %187 = vector.broadcast %186 : vector<1x32xf32> to vector<10x32xf32>
    %188 = arith.addf %184, %187 : vector<10x32xf32>
    %c0_125 = arith.constant 0 : index
    %c0_126 = arith.constant 0 : index
    %c0_127 = arith.constant 0 : index
    %189 = vector.load %arg20[%c0_125, %c0_126, %c0_127] : memref<2x1x32xf32, #tpu.memory_space<vmem>>, vector<1x1x32xf32>
    %190 = vector.shape_cast %189 : vector<1x1x32xf32> to vector<1x32xf32>
    %191 = vector.broadcast %190 : vector<1x32xf32> to vector<10x32xf32>
    %192 = arith.mulf %191, %188 : vector<10x32xf32>
    %193 = arith.addf %135, %192 : vector<10x32xf32>
    %c1_128 = arith.constant 1 : index
    %c0_129 = arith.constant 0 : index
    %c0_130 = arith.constant 0 : index
    %194 = vector.load %arg3[%c1_128, %c0_129, %c0_130] : memref<2x1x32xf32, #tpu.memory_space<vmem>>, vector<1x1x32xf32>
    %195 = vector.shape_cast %194 : vector<1x1x32xf32> to vector<1x32xf32>
    %c1_131 = arith.constant 1 : index
    %c0_132 = arith.constant 0 : index
    %c0_133 = arith.constant 0 : index
    %196 = vector.load %arg4[%c1_131, %c0_132, %c0_133] : memref<2x1x32xf32, #tpu.memory_space<vmem>>, vector<1x1x32xf32>
    %197 = vector.shape_cast %196 : vector<1x1x32xf32> to vector<1x32xf32>
    %cst_134 = arith.constant dense<0.000000e+00> : vector<10xf32>
    %198 = vector.multi_reduction <add>, %193, %cst_134 [1] : vector<10x32xf32> to vector<10xf32>
    %199 = vector.shape_cast %198 : vector<10xf32> to vector<10x1xf32>
    %cst_135 = arith.constant 3.200000e+01 : f32
    %200 = vector.broadcast %cst_135 : f32 to vector<10x1xf32>
    %201 = arith.divf %199, %200 : vector<10x1xf32>
    %202 = vector.broadcast %201 : vector<10x1xf32> to vector<10x32xf32>
    %203 = arith.subf %193, %202 : vector<10x32xf32>
    %204 = arith.mulf %203, %203 : vector<10x32xf32>
    %cst_136 = arith.constant dense<0.000000e+00> : vector<10xf32>
    %205 = vector.multi_reduction <add>, %204, %cst_136 [1] : vector<10x32xf32> to vector<10xf32>
    %206 = vector.shape_cast %205 : vector<10xf32> to vector<10x1xf32>
    %cst_137 = arith.constant 3.200000e+01 : f32
    %207 = vector.broadcast %cst_137 : f32 to vector<10x1xf32>
    %208 = arith.divf %206, %207 : vector<10x1xf32>
    %cst_138 = arith.constant 9.99999997E-7 : f32
    %209 = vector.broadcast %cst_138 : f32 to vector<10x1xf32>
    %210 = arith.addf %208, %209 : vector<10x1xf32>
    %211 = math.rsqrt %210 : vector<10x1xf32>
    %212 = vector.broadcast %211 : vector<10x1xf32> to vector<10x32xf32>
    %213 = arith.mulf %203, %212 : vector<10x32xf32>
    %214 = vector.broadcast %195 : vector<1x32xf32> to vector<10x32xf32>
    %215 = arith.mulf %213, %214 : vector<10x32xf32>
    %216 = vector.broadcast %197 : vector<1x32xf32> to vector<10x32xf32>
    %217 = arith.addf %215, %216 : vector<10x32xf32>
    %218 = arith.truncf %217 : vector<10x32xf32> to vector<10x32xbf16>
    %cst_139 = arith.constant 0.000000e+00 : f32
    %219 = vector.broadcast %cst_139 : f32 to vector<10x32xf32>
    %c1_140 = arith.constant 1 : index
    %c0_141 = arith.constant 0 : index
    %c0_142 = arith.constant 0 : index
    %c0_143 = arith.constant 0 : index
    %220 = vector.load %arg5[%c1_140, %c0_141, %c0_142, %c0_143] : memref<2x2x32x16xbf16, #tpu.memory_space<vmem>>, vector<1x1x32x16xbf16>
    %221 = vector.shape_cast %220 : vector<1x1x32x16xbf16> to vector<32x16xbf16>
    %cst_144 = arith.constant dense<0.000000e+00> : vector<10x16xf32>
    %222 = tpu.matmul %218, %221, %cst_144 {dimension_numbers = #tpu.dot_dimension_numbers<[1], [0], [0], [1], [0, 0, 1, 1], [], []>} : vector<10x32xbf16>, vector<32x16xbf16>, vector<10x16xf32> -> vector<10x16xf32>
    %c1_145 = arith.constant 1 : index
    %c0_146 = arith.constant 0 : index
    %c0_147 = arith.constant 0 : index
    %c0_148 = arith.constant 0 : index
    %223 = vector.load %arg6[%c1_145, %c0_146, %c0_147, %c0_148] : memref<2x2x1x16xf32, #tpu.memory_space<vmem>>, vector<1x1x1x16xf32>
    %224 = vector.shape_cast %223 : vector<1x1x1x16xf32> to vector<1x16xf32>
    %225 = vector.broadcast %224 : vector<1x16xf32> to vector<10x16xf32>
    %226 = arith.addf %222, %225 : vector<10x16xf32>
    %c1_149 = arith.constant 1 : index
    %c0_150 = arith.constant 0 : index
    %c0_151 = arith.constant 0 : index
    %c0_152 = arith.constant 0 : index
    %227 = vector.load %arg7[%c1_149, %c0_150, %c0_151, %c0_152] : memref<2x2x32x16xbf16, #tpu.memory_space<vmem>>, vector<1x1x32x16xbf16>
    %228 = vector.shape_cast %227 : vector<1x1x32x16xbf16> to vector<32x16xbf16>
    %cst_153 = arith.constant dense<0.000000e+00> : vector<10x16xf32>
    %229 = tpu.matmul %218, %228, %cst_153 {dimension_numbers = #tpu.dot_dimension_numbers<[1], [0], [0], [1], [0, 0, 1, 1], [], []>} : vector<10x32xbf16>, vector<32x16xbf16>, vector<10x16xf32> -> vector<10x16xf32>
    %c1_154 = arith.constant 1 : index
    %c0_155 = arith.constant 0 : index
    %c0_156 = arith.constant 0 : index
    %c0_157 = arith.constant 0 : index
    %230 = vector.load %arg8[%c1_154, %c0_155, %c0_156, %c0_157] : memref<2x2x1x16xf32, #tpu.memory_space<vmem>>, vector<1x1x1x16xf32>
    %231 = vector.shape_cast %230 : vector<1x1x1x16xf32> to vector<1x16xf32>
    %232 = vector.broadcast %231 : vector<1x16xf32> to vector<10x16xf32>
    %233 = arith.addf %229, %232 : vector<10x16xf32>
    %c1_158 = arith.constant 1 : index
    %c0_159 = arith.constant 0 : index
    %c0_160 = arith.constant 0 : index
    %c0_161 = arith.constant 0 : index
    %234 = vector.load %arg9[%c1_158, %c0_159, %c0_160, %c0_161] : memref<2x2x32x16xbf16, #tpu.memory_space<vmem>>, vector<1x1x32x16xbf16>
    %235 = vector.shape_cast %234 : vector<1x1x32x16xbf16> to vector<32x16xbf16>
    %cst_162 = arith.constant dense<0.000000e+00> : vector<10x16xf32>
    %236 = tpu.matmul %218, %235, %cst_162 {dimension_numbers = #tpu.dot_dimension_numbers<[1], [0], [0], [1], [0, 0, 1, 1], [], []>} : vector<10x32xbf16>, vector<32x16xbf16>, vector<10x16xf32> -> vector<10x16xf32>
    %c1_163 = arith.constant 1 : index
    %c0_164 = arith.constant 0 : index
    %c0_165 = arith.constant 0 : index
    %c0_166 = arith.constant 0 : index
    %237 = vector.load %arg10[%c1_163, %c0_164, %c0_165, %c0_166] : memref<2x2x1x16xf32, #tpu.memory_space<vmem>>, vector<1x1x1x16xf32>
    %238 = vector.shape_cast %237 : vector<1x1x1x16xf32> to vector<1x16xf32>
    %239 = vector.broadcast %238 : vector<1x16xf32> to vector<10x16xf32>
    %240 = arith.addf %236, %239 : vector<10x16xf32>
    %cst_167 = arith.constant 2.500000e-01 : f32
    %241 = vector.broadcast %cst_167 : f32 to vector<10x16xf32>
    %242 = arith.mulf %226, %241 : vector<10x16xf32>
    %243 = vector.shape_cast %242 : vector<10x16xf32> to vector<2x5x16xf32>
    %244 = arith.truncf %243 : vector<2x5x16xf32> to vector<2x5x16xbf16>
    %245 = vector.shape_cast %233 : vector<10x16xf32> to vector<2x5x16xf32>
    %246 = arith.truncf %245 : vector<2x5x16xf32> to vector<2x5x16xbf16>
    %247 = vector.shape_cast %240 : vector<10x16xf32> to vector<2x5x16xf32>
    %248 = arith.truncf %247 : vector<2x5x16xf32> to vector<2x5x16xbf16>
    "tpu.trace_start"() <{level = 10 : i32, message = "btd,bsd->bts"}> : () -> ()
    %cst_168 = arith.constant dense<0.000000e+00> : vector<2x5x5xf32>
    %249 = tpu.matmul %244, %246, %cst_168 {dimension_numbers = #tpu.dot_dimension_numbers<[2], [2], [1], [1], [0, 0, 0, 1, 1, 1], [0], [0]>} : vector<2x5x16xbf16>, vector<2x5x16xbf16>, vector<2x5x5xf32> -> vector<2x5x5xf32>
    "tpu.trace_stop"() : () -> ()
    %cst_169 = arith.constant dense<0xFF800000> : vector<2x5xf32>
    %250 = vector.multi_reduction <maximumf>, %249, %cst_169 [2] : vector<2x5x5xf32> to vector<2x5xf32>
    %251 = vector.shape_cast %250 : vector<2x5xf32> to vector<2x5x1xf32>
    %252 = vector.broadcast %251 : vector<2x5x1xf32> to vector<2x5x5xf32>
    %253 = arith.subf %249, %252 : vector<2x5x5xf32>
    %254 = math.exp %253 : vector<2x5x5xf32>
    %cst_170 = arith.constant dense<0.000000e+00> : vector<2x5xf32>
    %255 = vector.multi_reduction <add>, %254, %cst_170 [2] : vector<2x5x5xf32> to vector<2x5xf32>
    %256 = vector.shape_cast %255 : vector<2x5xf32> to vector<2x5x1xf32>
    %257 = tpu.reciprocal %256 {approx = true} : vector<2x5x1xf32> -> vector<2x5x1xf32>
    %258 = vector.broadcast %257 : vector<2x5x1xf32> to vector<2x5x5xf32>
    %259 = arith.mulf %254, %258 : vector<2x5x5xf32>
    %260 = arith.truncf %259 : vector<2x5x5xf32> to vector<2x5x5xbf16>
    "tpu.trace_start"() <{level = 10 : i32, message = "bts,bsd->btd"}> : () -> ()
    %cst_171 = arith.constant dense<0.000000e+00> : vector<2x5x16xf32>
    %261 = tpu.matmul %260, %248, %cst_171 {dimension_numbers = #tpu.dot_dimension_numbers<[2], [1], [1], [2], [0, 0, 0, 1, 1, 2], [0], [0]>} : vector<2x5x5xbf16>, vector<2x5x16xbf16>, vector<2x5x16xf32> -> vector<2x5x16xf32>
    "tpu.trace_stop"() : () -> ()
    %262 = vector.shape_cast %261 : vector<2x5x16xf32> to vector<10x16xf32>
    %263 = arith.truncf %262 : vector<10x16xf32> to vector<10x16xbf16>
    %c1_172 = arith.constant 1 : index
    %c0_173 = arith.constant 0 : index
    %c0_174 = arith.constant 0 : index
    %c0_175 = arith.constant 0 : index
    %264 = vector.load %arg11[%c1_172, %c0_173, %c0_174, %c0_175] : memref<2x2x16x32xbf16, #tpu.memory_space<vmem>>, vector<1x1x16x32xbf16>
    %265 = vector.shape_cast %264 : vector<1x1x16x32xbf16> to vector<16x32xbf16>
    %cst_176 = arith.constant dense<0.000000e+00> : vector<10x32xf32>
    %266 = tpu.matmul %263, %265, %cst_176 {dimension_numbers = #tpu.dot_dimension_numbers<[1], [0], [0], [1], [0, 0, 1, 1], [], []>} : vector<10x16xbf16>, vector<16x32xbf16>, vector<10x32xf32> -> vector<10x32xf32>
    %267 = arith.addf %219, %266 : vector<10x32xf32>
    %c1_177 = arith.constant 1 : index
    %c1_178 = arith.constant 1 : index
    %c0_179 = arith.constant 0 : index
    %c0_180 = arith.constant 0 : index
    %268 = vector.load %arg5[%c1_177, %c1_178, %c0_179, %c0_180] : memref<2x2x32x16xbf16, #tpu.memory_space<vmem>>, vector<1x1x32x16xbf16>
    %269 = vector.shape_cast %268 : vector<1x1x32x16xbf16> to vector<32x16xbf16>
    %cst_181 = arith.constant dense<0.000000e+00> : vector<10x16xf32>
    %270 = tpu.matmul %218, %269, %cst_181 {dimension_numbers = #tpu.dot_dimension_numbers<[1], [0], [0], [1], [0, 0, 1, 1], [], []>} : vector<10x32xbf16>, vector<32x16xbf16>, vector<10x16xf32> -> vector<10x16xf32>
    %c1_182 = arith.constant 1 : index
    %c1_183 = arith.constant 1 : index
    %c0_184 = arith.constant 0 : index
    %c0_185 = arith.constant 0 : index
    %271 = vector.load %arg6[%c1_182, %c1_183, %c0_184, %c0_185] : memref<2x2x1x16xf32, #tpu.memory_space<vmem>>, vector<1x1x1x16xf32>
    %272 = vector.shape_cast %271 : vector<1x1x1x16xf32> to vector<1x16xf32>
    %273 = vector.broadcast %272 : vector<1x16xf32> to vector<10x16xf32>
    %274 = arith.addf %270, %273 : vector<10x16xf32>
    %c1_186 = arith.constant 1 : index
    %c1_187 = arith.constant 1 : index
    %c0_188 = arith.constant 0 : index
    %c0_189 = arith.constant 0 : index
    %275 = vector.load %arg7[%c1_186, %c1_187, %c0_188, %c0_189] : memref<2x2x32x16xbf16, #tpu.memory_space<vmem>>, vector<1x1x32x16xbf16>
    %276 = vector.shape_cast %275 : vector<1x1x32x16xbf16> to vector<32x16xbf16>
    %cst_190 = arith.constant dense<0.000000e+00> : vector<10x16xf32>
    %277 = tpu.matmul %218, %276, %cst_190 {dimension_numbers = #tpu.dot_dimension_numbers<[1], [0], [0], [1], [0, 0, 1, 1], [], []>} : vector<10x32xbf16>, vector<32x16xbf16>, vector<10x16xf32> -> vector<10x16xf32>
    %c1_191 = arith.constant 1 : index
    %c1_192 = arith.constant 1 : index
    %c0_193 = arith.constant 0 : index
    %c0_194 = arith.constant 0 : index
    %278 = vector.load %arg8[%c1_191, %c1_192, %c0_193, %c0_194] : memref<2x2x1x16xf32, #tpu.memory_space<vmem>>, vector<1x1x1x16xf32>
    %279 = vector.shape_cast %278 : vector<1x1x1x16xf32> to vector<1x16xf32>
    %280 = vector.broadcast %279 : vector<1x16xf32> to vector<10x16xf32>
    %281 = arith.addf %277, %280 : vector<10x16xf32>
    %c1_195 = arith.constant 1 : index
    %c1_196 = arith.constant 1 : index
    %c0_197 = arith.constant 0 : index
    %c0_198 = arith.constant 0 : index
    %282 = vector.load %arg9[%c1_195, %c1_196, %c0_197, %c0_198] : memref<2x2x32x16xbf16, #tpu.memory_space<vmem>>, vector<1x1x32x16xbf16>
    %283 = vector.shape_cast %282 : vector<1x1x32x16xbf16> to vector<32x16xbf16>
    %cst_199 = arith.constant dense<0.000000e+00> : vector<10x16xf32>
    %284 = tpu.matmul %218, %283, %cst_199 {dimension_numbers = #tpu.dot_dimension_numbers<[1], [0], [0], [1], [0, 0, 1, 1], [], []>} : vector<10x32xbf16>, vector<32x16xbf16>, vector<10x16xf32> -> vector<10x16xf32>
    %c1_200 = arith.constant 1 : index
    %c1_201 = arith.constant 1 : index
    %c0_202 = arith.constant 0 : index
    %c0_203 = arith.constant 0 : index
    %285 = vector.load %arg10[%c1_200, %c1_201, %c0_202, %c0_203] : memref<2x2x1x16xf32, #tpu.memory_space<vmem>>, vector<1x1x1x16xf32>
    %286 = vector.shape_cast %285 : vector<1x1x1x16xf32> to vector<1x16xf32>
    %287 = vector.broadcast %286 : vector<1x16xf32> to vector<10x16xf32>
    %288 = arith.addf %284, %287 : vector<10x16xf32>
    %cst_204 = arith.constant 2.500000e-01 : f32
    %289 = vector.broadcast %cst_204 : f32 to vector<10x16xf32>
    %290 = arith.mulf %274, %289 : vector<10x16xf32>
    %291 = vector.shape_cast %290 : vector<10x16xf32> to vector<2x5x16xf32>
    %292 = arith.truncf %291 : vector<2x5x16xf32> to vector<2x5x16xbf16>
    %293 = vector.shape_cast %281 : vector<10x16xf32> to vector<2x5x16xf32>
    %294 = arith.truncf %293 : vector<2x5x16xf32> to vector<2x5x16xbf16>
    %295 = vector.shape_cast %288 : vector<10x16xf32> to vector<2x5x16xf32>
    %296 = arith.truncf %295 : vector<2x5x16xf32> to vector<2x5x16xbf16>
    "tpu.trace_start"() <{level = 10 : i32, message = "btd,bsd->bts"}> : () -> ()
    %cst_205 = arith.constant dense<0.000000e+00> : vector<2x5x5xf32>
    %297 = tpu.matmul %292, %294, %cst_205 {dimension_numbers = #tpu.dot_dimension_numbers<[2], [2], [1], [1], [0, 0, 0, 1, 1, 1], [0], [0]>} : vector<2x5x16xbf16>, vector<2x5x16xbf16>, vector<2x5x5xf32> -> vector<2x5x5xf32>
    "tpu.trace_stop"() : () -> ()
    %cst_206 = arith.constant dense<0xFF800000> : vector<2x5xf32>
    %298 = vector.multi_reduction <maximumf>, %297, %cst_206 [2] : vector<2x5x5xf32> to vector<2x5xf32>
    %299 = vector.shape_cast %298 : vector<2x5xf32> to vector<2x5x1xf32>
    %300 = vector.broadcast %299 : vector<2x5x1xf32> to vector<2x5x5xf32>
    %301 = arith.subf %297, %300 : vector<2x5x5xf32>
    %302 = math.exp %301 : vector<2x5x5xf32>
    %cst_207 = arith.constant dense<0.000000e+00> : vector<2x5xf32>
    %303 = vector.multi_reduction <add>, %302, %cst_207 [2] : vector<2x5x5xf32> to vector<2x5xf32>
    %304 = vector.shape_cast %303 : vector<2x5xf32> to vector<2x5x1xf32>
    %305 = tpu.reciprocal %304 {approx = true} : vector<2x5x1xf32> -> vector<2x5x1xf32>
    %306 = vector.broadcast %305 : vector<2x5x1xf32> to vector<2x5x5xf32>
    %307 = arith.mulf %302, %306 : vector<2x5x5xf32>
    %308 = arith.truncf %307 : vector<2x5x5xf32> to vector<2x5x5xbf16>
    "tpu.trace_start"() <{level = 10 : i32, message = "bts,bsd->btd"}> : () -> ()
    %cst_208 = arith.constant dense<0.000000e+00> : vector<2x5x16xf32>
    %309 = tpu.matmul %308, %296, %cst_208 {dimension_numbers = #tpu.dot_dimension_numbers<[2], [1], [1], [2], [0, 0, 0, 1, 1, 2], [0], [0]>} : vector<2x5x5xbf16>, vector<2x5x16xbf16>, vector<2x5x16xf32> -> vector<2x5x16xf32>
    "tpu.trace_stop"() : () -> ()
    %310 = vector.shape_cast %309 : vector<2x5x16xf32> to vector<10x16xf32>
    %311 = arith.truncf %310 : vector<10x16xf32> to vector<10x16xbf16>
    %c1_209 = arith.constant 1 : index
    %c1_210 = arith.constant 1 : index
    %c0_211 = arith.constant 0 : index
    %c0_212 = arith.constant 0 : index
    %312 = vector.load %arg11[%c1_209, %c1_210, %c0_211, %c0_212] : memref<2x2x16x32xbf16, #tpu.memory_space<vmem>>, vector<1x1x16x32xbf16>
    %313 = vector.shape_cast %312 : vector<1x1x16x32xbf16> to vector<16x32xbf16>
    %cst_213 = arith.constant dense<0.000000e+00> : vector<10x32xf32>
    %314 = tpu.matmul %311, %313, %cst_213 {dimension_numbers = #tpu.dot_dimension_numbers<[1], [0], [0], [1], [0, 0, 1, 1], [], []>} : vector<10x16xbf16>, vector<16x32xbf16>, vector<10x32xf32> -> vector<10x32xf32>
    %315 = arith.addf %267, %314 : vector<10x32xf32>
    %c1_214 = arith.constant 1 : index
    %c0_215 = arith.constant 0 : index
    %c0_216 = arith.constant 0 : index
    %316 = vector.load %arg12[%c1_214, %c0_215, %c0_216] : memref<2x1x32xf32, #tpu.memory_space<vmem>>, vector<1x1x32xf32>
    %317 = vector.shape_cast %316 : vector<1x1x32xf32> to vector<1x32xf32>
    %318 = vector.broadcast %317 : vector<1x32xf32> to vector<10x32xf32>
    %319 = arith.addf %315, %318 : vector<10x32xf32>
    %c1_217 = arith.constant 1 : index
    %c0_218 = arith.constant 0 : index
    %c0_219 = arith.constant 0 : index
    %320 = vector.load %arg13[%c1_217, %c0_218, %c0_219] : memref<2x1x32xf32, #tpu.memory_space<vmem>>, vector<1x1x32xf32>
    %321 = vector.shape_cast %320 : vector<1x1x32xf32> to vector<1x32xf32>
    %322 = vector.broadcast %321 : vector<1x32xf32> to vector<10x32xf32>
    %323 = arith.mulf %322, %319 : vector<10x32xf32>
    %324 = arith.addf %193, %323 : vector<10x32xf32>
    %c1_220 = arith.constant 1 : index
    %c0_221 = arith.constant 0 : index
    %c0_222 = arith.constant 0 : index
    %325 = vector.load %arg14[%c1_220, %c0_221, %c0_222] : memref<2x1x32xf32, #tpu.memory_space<vmem>>, vector<1x1x32xf32>
    %326 = vector.shape_cast %325 : vector<1x1x32xf32> to vector<1x32xf32>
    %c1_223 = arith.constant 1 : index
    %c0_224 = arith.constant 0 : index
    %c0_225 = arith.constant 0 : index
    %327 = vector.load %arg15[%c1_223, %c0_224, %c0_225] : memref<2x1x32xf32, #tpu.memory_space<vmem>>, vector<1x1x32xf32>
    %328 = vector.shape_cast %327 : vector<1x1x32xf32> to vector<1x32xf32>
    %cst_226 = arith.constant dense<0.000000e+00> : vector<10xf32>
    %329 = vector.multi_reduction <add>, %324, %cst_226 [1] : vector<10x32xf32> to vector<10xf32>
    %330 = vector.shape_cast %329 : vector<10xf32> to vector<10x1xf32>
    %cst_227 = arith.constant 3.200000e+01 : f32
    %331 = vector.broadcast %cst_227 : f32 to vector<10x1xf32>
    %332 = arith.divf %330, %331 : vector<10x1xf32>
    %333 = vector.broadcast %332 : vector<10x1xf32> to vector<10x32xf32>
    %334 = arith.subf %324, %333 : vector<10x32xf32>
    %335 = arith.mulf %334, %334 : vector<10x32xf32>
    %cst_228 = arith.constant dense<0.000000e+00> : vector<10xf32>
    %336 = vector.multi_reduction <add>, %335, %cst_228 [1] : vector<10x32xf32> to vector<10xf32>
    %337 = vector.shape_cast %336 : vector<10xf32> to vector<10x1xf32>
    %cst_229 = arith.constant 3.200000e+01 : f32
    %338 = vector.broadcast %cst_229 : f32 to vector<10x1xf32>
    %339 = arith.divf %337, %338 : vector<10x1xf32>
    %cst_230 = arith.constant 9.99999997E-7 : f32
    %340 = vector.broadcast %cst_230 : f32 to vector<10x1xf32>
    %341 = arith.addf %339, %340 : vector<10x1xf32>
    %342 = math.rsqrt %341 : vector<10x1xf32>
    %343 = vector.broadcast %342 : vector<10x1xf32> to vector<10x32xf32>
    %344 = arith.mulf %334, %343 : vector<10x32xf32>
    %345 = vector.broadcast %326 : vector<1x32xf32> to vector<10x32xf32>
    %346 = arith.mulf %344, %345 : vector<10x32xf32>
    %347 = vector.broadcast %328 : vector<1x32xf32> to vector<10x32xf32>
    %348 = arith.addf %346, %347 : vector<10x32xf32>
    %349 = arith.truncf %348 : vector<10x32xf32> to vector<10x32xbf16>
    %c1_231 = arith.constant 1 : index
    %c0_232 = arith.constant 0 : index
    %c0_233 = arith.constant 0 : index
    %350 = vector.load %arg16[%c1_231, %c0_232, %c0_233] : memref<2x32x128xbf16, #tpu.memory_space<vmem>>, vector<1x32x128xbf16>
    %351 = vector.shape_cast %350 : vector<1x32x128xbf16> to vector<32x128xbf16>
    %cst_234 = arith.constant dense<0.000000e+00> : vector<10x128xf32>
    %352 = tpu.matmul %349, %351, %cst_234 {dimension_numbers = #tpu.dot_dimension_numbers<[1], [0], [0], [1], [0, 0, 1, 1], [], []>} : vector<10x32xbf16>, vector<32x128xbf16>, vector<10x128xf32> -> vector<10x128xf32>
    %c1_235 = arith.constant 1 : index
    %c0_236 = arith.constant 0 : index
    %c0_237 = arith.constant 0 : index
    %353 = vector.load %arg17[%c1_235, %c0_236, %c0_237] : memref<2x1x128xf32, #tpu.memory_space<vmem>>, vector<1x1x128xf32>
    %354 = vector.shape_cast %353 : vector<1x1x128xf32> to vector<1x128xf32>
    %355 = vector.broadcast %354 : vector<1x128xf32> to vector<10x128xf32>
    %356 = arith.addf %352, %355 : vector<10x128xf32>
    %357 = arith.mulf %356, %356 : vector<10x128xf32>
    %358 = arith.mulf %356, %357 : vector<10x128xf32>
    %cst_238 = arith.constant 4.471500e-02 : f32
    %359 = vector.broadcast %cst_238 : f32 to vector<10x128xf32>
    %360 = arith.mulf %359, %358 : vector<10x128xf32>
    %361 = arith.addf %356, %360 : vector<10x128xf32>
    %cst_239 = arith.constant 0.797884583 : f32
    %362 = vector.broadcast %cst_239 : f32 to vector<10x128xf32>
    %363 = arith.mulf %362, %361 : vector<10x128xf32>
    %364 = math.tanh %363 : vector<10x128xf32>
    %cst_240 = arith.constant 1.000000e+00 : f32
    %365 = vector.broadcast %cst_240 : f32 to vector<10x128xf32>
    %366 = arith.addf %365, %364 : vector<10x128xf32>
    %cst_241 = arith.constant 5.000000e-01 : f32
    %367 = vector.broadcast %cst_241 : f32 to vector<10x128xf32>
    %368 = arith.mulf %367, %366 : vector<10x128xf32>
    %369 = arith.mulf %356, %368 : vector<10x128xf32>
    %370 = arith.truncf %369 : vector<10x128xf32> to vector<10x128xbf16>
    %c1_242 = arith.constant 1 : index
    %c0_243 = arith.constant 0 : index
    %c0_244 = arith.constant 0 : index
    %371 = vector.load %arg18[%c1_242, %c0_243, %c0_244] : memref<2x128x32xbf16, #tpu.memory_space<vmem>>, vector<1x128x32xbf16>
    %372 = vector.shape_cast %371 : vector<1x128x32xbf16> to vector<128x32xbf16>
    %cst_245 = arith.constant dense<0.000000e+00> : vector<10x32xf32>
    %373 = tpu.matmul %370, %372, %cst_245 {dimension_numbers = #tpu.dot_dimension_numbers<[1], [0], [0], [1], [0, 0, 1, 1], [], []>} : vector<10x128xbf16>, vector<128x32xbf16>, vector<10x32xf32> -> vector<10x32xf32>
    %c1_246 = arith.constant 1 : index
    %c0_247 = arith.constant 0 : index
    %c0_248 = arith.constant 0 : index
    %374 = vector.load %arg19[%c1_246, %c0_247, %c0_248] : memref<2x1x32xf32, #tpu.memory_space<vmem>>, vector<1x1x32xf32>
    %375 = vector.shape_cast %374 : vector<1x1x32xf32> to vector<1x32xf32>
    %376 = vector.broadcast %375 : vector<1x32xf32> to vector<10x32xf32>
    %377 = arith.addf %373, %376 : vector<10x32xf32>
    %c1_249 = arith.constant 1 : index
    %c0_250 = arith.constant 0 : index
    %c0_251 = arith.constant 0 : index
    %378 = vector.load %arg20[%c1_249, %c0_250, %c0_251] : memref<2x1x32xf32, #tpu.memory_space<vmem>>, vector<1x1x32xf32>
    %379 = vector.shape_cast %378 : vector<1x1x32xf32> to vector<1x32xf32>
    %380 = vector.broadcast %379 : vector<1x32xf32> to vector<10x32xf32>
    %381 = arith.mulf %380, %377 : vector<10x32xf32>
    %382 = arith.addf %324, %381 : vector<10x32xf32>
    %c0_252 = arith.constant 0 : index
    %c0_253 = arith.constant 0 : index
    %383 = vector.load %arg21[%c0_252, %c0_253] : memref<1x32xf32, #tpu.memory_space<vmem>>, vector<1x32xf32>
    %c0_254 = arith.constant 0 : index
    %c0_255 = arith.constant 0 : index
    %384 = vector.load %arg22[%c0_254, %c0_255] : memref<1x32xf32, #tpu.memory_space<vmem>>, vector<1x32xf32>
    %cst_256 = arith.constant dense<0.000000e+00> : vector<10xf32>
    %385 = vector.multi_reduction <add>, %382, %cst_256 [1] : vector<10x32xf32> to vector<10xf32>
    %386 = vector.shape_cast %385 : vector<10xf32> to vector<10x1xf32>
    %cst_257 = arith.constant 3.200000e+01 : f32
    %387 = vector.broadcast %cst_257 : f32 to vector<10x1xf32>
    %388 = arith.divf %386, %387 : vector<10x1xf32>
    %389 = vector.broadcast %388 : vector<10x1xf32> to vector<10x32xf32>
    %390 = arith.subf %382, %389 : vector<10x32xf32>
    %391 = arith.mulf %390, %390 : vector<10x32xf32>
    %cst_258 = arith.constant dense<0.000000e+00> : vector<10xf32>
    %392 = vector.multi_reduction <add>, %391, %cst_258 [1] : vector<10x32xf32> to vector<10xf32>
    %393 = vector.shape_cast %392 : vector<10xf32> to vector<10x1xf32>
    %cst_259 = arith.constant 3.200000e+01 : f32
    %394 = vector.broadcast %cst_259 : f32 to vector<10x1xf32>
    %395 = arith.divf %393, %394 : vector<10x1xf32>
    %cst_260 = arith.constant 9.99999997E-7 : f32
    %396 = vector.broadcast %cst_260 : f32 to vector<10x1xf32>
    %397 = arith.addf %395, %396 : vector<10x1xf32>
    %398 = math.rsqrt %397 : vector<10x1xf32>
    %399 = vector.broadcast %398 : vector<10x1xf32> to vector<10x32xf32>
    %400 = arith.mulf %390, %399 : vector<10x32xf32>
    %401 = vector.broadcast %383 : vector<1x32xf32> to vector<10x32xf32>
    %402 = arith.mulf %400, %401 : vector<10x32xf32>
    %403 = vector.broadcast %384 : vector<1x32xf32> to vector<10x32xf32>
    %404 = arith.addf %402, %403 : vector<10x32xf32>
    %405 = vector.shape_cast %404 : vector<10x32xf32> to vector<2x5x32xf32>
    %406 = tpu.iota {dimensions = array<i32: 1>} : vector<2x5x32xi32>
    %c0_i32 = arith.constant 0 : i32
    %407 = vector.broadcast %c0_i32 : i32 to vector<2x5x32xi32>
    %408 = arith.cmpi eq, %406, %407 : vector<2x5x32xi32>
    %cst_261 = arith.constant 0.000000e+00 : f32
    %409 = vector.broadcast %cst_261 : f32 to vector<2x5x32xf32>
    %410 = arith.select %408, %405, %409 : vector<2x5x32xi1>, vector<2x5x32xf32>
    %cst_262 = arith.constant dense<0.000000e+00> : vector<2x32xf32>
    %411 = vector.multi_reduction <add>, %410, %cst_262 [1] : vector<2x5x32xf32> to vector<2x32xf32>
    %cst_263 = arith.constant dense<0.000000e+00> : vector<2x32xf32>
    %412 = vector.multi_reduction <add>, %405, %cst_263 [1] : vector<2x5x32xf32> to vector<2x32xf32>
    %413 = arith.subf %412, %411 : vector<2x32xf32>
    %cst_264 = arith.constant 2.500000e-01 : f32
    %414 = vector.broadcast %cst_264 : f32 to vector<2x32xf32>
    %415 = arith.mulf %413, %414 : vector<2x32xf32>
    %416 = arith.truncf %411 : vector<2x32xf32> to vector<2x32xbf16>
    %c0_265 = arith.constant 0 : index
    %c0_266 = arith.constant 0 : index
    %417 = vector.load %arg23[%c0_265, %c0_266] : memref<32x1024xbf16, #tpu.memory_space<vmem>>, vector<32x1024xbf16>
    %cst_267 = arith.constant dense<0.000000e+00> : vector<2x1024xf32>
    %418 = tpu.matmul %416, %417, %cst_267 {dimension_numbers = #tpu.dot_dimension_numbers<[1], [0], [0], [1], [0, 0, 1, 1], [], []>} : vector<2x32xbf16>, vector<32x1024xbf16>, vector<2x1024xf32> -> vector<2x1024xf32>
    %419 = arith.truncf %415 : vector<2x32xf32> to vector<2x32xbf16>
    %c0_268 = arith.constant 0 : index
    %c0_269 = arith.constant 0 : index
    %420 = vector.load %arg24[%c0_268, %c0_269] : memref<32x1024xbf16, #tpu.memory_space<vmem>>, vector<32x1024xbf16>
    %cst_270 = arith.constant dense<0.000000e+00> : vector<2x1024xf32>
    %421 = tpu.matmul %419, %420, %cst_270 {dimension_numbers = #tpu.dot_dimension_numbers<[1], [0], [0], [1], [0, 0, 1, 1], [], []>} : vector<2x32xbf16>, vector<32x1024xbf16>, vector<2x1024xf32> -> vector<2x1024xf32>
    %422 = arith.addf %418, %421 : vector<2x1024xf32>
    %c0_271 = arith.constant 0 : index
    %c0_272 = arith.constant 0 : index
    %423 = vector.load %arg25[%c0_271, %c0_272] : memref<1x1024xf32, #tpu.memory_space<vmem>>, vector<1x1024xf32>
    %424 = vector.broadcast %423 : vector<1x1024xf32> to vector<2x1024xf32>
    %425 = arith.addf %422, %424 : vector<2x1024xf32>
    %c0_273 = arith.constant 0 : index
    %c0_274 = arith.constant 0 : index
    %426 = vector.load %arg26[%c0_273, %c0_274] : memref<2x1024xf32, #tpu.memory_space<vmem>>, vector<2x1024xf32>
    tpu.vector_store %arg26[%c0_273, %c0_274], %425 {strides = array<i32>} : memref<2x1024xf32, #tpu.memory_space<vmem>>, vector<2x1024xf32>,
    return
  }
}

</mosaic_0001>

<llo_original>
// kernel: tile.9
$region0: #{tile.9}
  %s0 = inlined_call_operand.vmem [shape: f32[2,5,32], index: 0, kind: input, shape index: {}]
  %s1 = inlined_call_operand.vmem [shape: f32[10,32], index: 1, kind: output, shape index: {}]
  %v2 = vld [vmem:[%s0] sm:$0x1f]
  %vm3 = vcmask 261120
  %4 = vst.msk [vmem:[%s1] sm:$0x1f] %vm3, %v2
  %s5 = scalar_lea.vmem %s0, 8
  %v6 = vld [vmem:[%s5] sm:$0x1f]
  %vm7 = vcmask 261120
  %s8 = scalar_lea.vmem %s1, 5
  %9 = vst.msk [vmem:[%s8] sm:$0x1f] %vm7, %v6

// kernel: dinov2_forward.1
$region0: #{dinov2_forward.1}
  #allocation0 [shape = 'u32[]', space=smem, size = 0x4, offset = 0x4, fixed_abs, tag = 'smem constant byte address 0x4 - core index']
  #allocation1 [shape = 'u32[72,128]{1,0:T(1,128)}', space=vmem, size = 0x9000, scoped, tag = 'internal scratch']
  %s0 = inlined_call_operand.vmem [shape: bf16[10,640], index: 0, kind: input, shape index: {}]
  %s1 = inlined_call_operand.vmem [shape: bf16[640,32], index: 1, kind: input, shape index: {}]
  %s2 = inlined_call_operand.vmem [shape: f32[10,32], index: 2, kind: input, shape index: {}]
  %s3 = inlined_call_operand.vmem [shape: f32[2,1,32], index: 3, kind: input, shape index: {}]
  %s4 = inlined_call_operand.vmem [shape: f32[2,1,32], index: 4, kind: input, shape index: {}]
  %s5 = inlined_call_operand.vmem [shape: bf16[2,2,32,16], index: 5, kind: input, shape index: {}]
  %s6 = inlined_call_operand.vmem [shape: f32[2,2,1,16], index: 6, kind: input, shape index: {}]
  %s7 = inlined_call_operand.vmem [shape: bf16[2,2,32,16], index: 7, kind: input, shape index: {}]
  %s8 = inlined_call_operand.vmem [shape: f32[2,2,1,16], index: 8, kind: input, shape index: {}]
  %s9 = inlined_call_operand.vmem [shape: bf16[2,2,32,16], index: 9, kind: input, shape index: {}]
  %s10 = inlined_call_operand.vmem [shape: f32[2,2,1,16], index: 10, kind: input, shape index: {}]
  %s11 = inlined_call_operand.vmem [shape: bf16[2,2,16,32], index: 11, kind: input, shape index: {}]
  %s12 = inlined_call_operand.vmem [shape: f32[2,1,32], index: 12, kind: input, shape index: {}]
  %s13 = inlined_call_operand.vmem [shape: f32[2,1,32], index: 13, kind: input, shape index: {}]
  %s14 = inlined_call_operand.vmem [shape: f32[2,1,32], index: 14, kind: input, shape index: {}]
  %s15 = inlined_call_operand.vmem [shape: f32[2,1,32], index: 15, kind: input, shape index: {}]
  %s16 = inlined_call_operand.vmem [shape: bf16[2,32,128], index: 16, kind: input, shape index: {}]
  %s17 = inlined_call_operand.vmem [shape: f32[2,1,128], index: 17, kind: input, shape index: {}]
  %s18 = inlined_call_operand.vmem [shape: bf16[2,128,32], index: 18, kind: input, shape index: {}]
  %s19 = inlined_call_operand.vmem [shape: f32[2,1,32], index: 19, kind: input, shape index: {}]
  %s20 = inlined_call_operand.vmem [shape: f32[2,1,32], index: 20, kind: input, shape index: {}]
  %s21 = inlined_call_operand.vmem [shape: f32[1,32], index: 21, kind: input, shape index: {}]
  %s22 = inlined_call_operand.vmem [shape: f32[1,32], index: 22, kind: input, shape index: {}]
  %s23 = inlined_call_operand.vmem [shape: bf16[32,1024], index: 23, kind: input, shape index: {}]
  %s24 = inlined_call_operand.vmem [shape: bf16[32,1024], index: 24, kind: input, shape index: {}]
  %s25 = inlined_call_operand.vmem [shape: f32[1,1024], index: 25, kind: input, shape index: {}]
  %s26 = inlined_call_operand.hbm [shape: f32[2,1024], index: 26, kind: output, shape index: {}]
  %s27 = sld [smem:[#allocation0]]
  $region114: #{dinov2_forward.1} parent=0
    _
  %s29 = ssub.s32 1, %s27
  %s30 = scalar_select 0, %s29, %s27
  $region1: #{dinov2_forward.1} parent=0
    #allocation2 [shape = 'u8[8192]{0}', space=vmem, size = 0x2000, scoped, tag = 'output window, operand 0, single buffered']
    #allocation3 [shape = 's32[1]{0}', space=sflag, size = 0x4, scoped, tag = 'scoped memory for dinov2_forward.1']
    %31 = vsyncpa [#allocation3], 0
    // Predicated region
    $region2: #{dinov2_forward.1} parent=1 // pred_check
      _
    $region3: #{dinov2_forward.1} parent=1 // pred_check_branch
      %33 = sbr.rel (0) target = $region5
    $region4: #{dinov2_forward.1} parent=1 // pred_region
      _
    $region5: #{dinov2_forward.1} parent=1 // pred_fallthru
      _
    // Predicated region
    $region6: #{dinov2_forward.1} parent=1 // pred_check
      _
    $region7: #{dinov2_forward.1} parent=1 // pred_check_branch
      %35 = sbr.rel (0) target = $region9
    $region8: #{dinov2_forward.1} parent=1 // pred_region
      _
    $region9: #{dinov2_forward.1} parent=1 // pred_fallthru
      _
    // Predicated region
    $region10: #{dinov2_forward.1} parent=1 // pred_check
      _
    $region11: #{dinov2_forward.1} parent=1 // pred_check_branch
      %37 = sbr.rel (0) target = $region13
    $region12: #{dinov2_forward.1} parent=1 // pred_region
      _
    $region13: #{dinov2_forward.1} parent=1 // pred_fallthru
      _
    // Predicated region
    $region14: #{dinov2_forward.1} parent=1 // pred_check
      _
    $region15: #{dinov2_forward.1} parent=1 // pred_check_branch
      %39 = sbr.rel (0) target = $region17
    $region16: #{dinov2_forward.1} parent=1 // pred_region
      _
    $region17: #{dinov2_forward.1} parent=1 // pred_fallthru
      _
    // Predicated region
    $region18: #{dinov2_forward.1} parent=1 // pred_check
      _
    $region19: #{dinov2_forward.1} parent=1 // pred_check_branch
      %41 = sbr.rel (0) target = $region21
    $region20: #{dinov2_forward.1} parent=1 // pred_region
      _
    $region21: #{dinov2_forward.1} parent=1 // pred_fallthru
      _
    // Predicated region
    $region22: #{dinov2_forward.1} parent=1 // pred_check
      _
    $region23: #{dinov2_forward.1} parent=1 // pred_check_branch
      %43 = sbr.rel (0) target = $region25
    $region24: #{dinov2_forward.1} parent=1 // pred_region
      _
    $region25: #{dinov2_forward.1} parent=1 // pred_fallthru
      _
    // Predicated region
    $region26: #{dinov2_forward.1} parent=1 // pred_check
      _
    $region27: #{dinov2_forward.1} parent=1 // pred_check_branch
      %45 = sbr.rel (0) target = $region29
    $region28: #{dinov2_forward.1} parent=1 // pred_region
      _
    $region29: #{dinov2_forward.1} parent=1 // pred_fallthru
      _
    // Predicated region
    $region30: #{dinov2_forward.1} parent=1 // pred_check
      _
    $region31: #{dinov2_forward.1} parent=1 // pred_check_branch
      %47 = sbr.rel (0) target = $region33
    $region32: #{dinov2_forward.1} parent=1 // pred_region
      _
    $region33: #{dinov2_forward.1} parent=1 // pred_fallthru
      _
    // Predicated region
    $region34: #{dinov2_forward.1} parent=1 // pred_check
      _
    $region35: #{dinov2_forward.1} parent=1 // pred_check_branch
      %49 = sbr.rel (0) target = $region37
    $region36: #{dinov2_forward.1} parent=1 // pred_region
      _
    $region37: #{dinov2_forward.1} parent=1 // pred_fallthru
      _
    // Predicated region
    $region38: #{dinov2_forward.1} parent=1 // pred_check
      _
    $region39: #{dinov2_forward.1} parent=1 // pred_check_branch
      %51 = sbr.rel (0) target = $region41
    $region40: #{dinov2_forward.1} parent=1 // pred_region
      _
    $region41: #{dinov2_forward.1} parent=1 // pred_fallthru
      _
    // Predicated region
    $region42: #{dinov2_forward.1} parent=1 // pred_check
      _
    $region43: #{dinov2_forward.1} parent=1 // pred_check_branch
      %53 = sbr.rel (0) target = $region45
    $region44: #{dinov2_forward.1} parent=1 // pred_region
      _
    $region45: #{dinov2_forward.1} parent=1 // pred_fallthru
      _
    // Predicated region
    $region46: #{dinov2_forward.1} parent=1 // pred_check
      _
    $region47: #{dinov2_forward.1} parent=1 // pred_check_branch
      %55 = sbr.rel (0) target = $region49
    $region48: #{dinov2_forward.1} parent=1 // pred_region
      _
    $region49: #{dinov2_forward.1} parent=1 // pred_fallthru
      _
    // Predicated region
    $region50: #{dinov2_forward.1} parent=1 // pred_check
      _
    $region51: #{dinov2_forward.1} parent=1 // pred_check_branch
      %57 = sbr.rel (0) target = $region53
    $region52: #{dinov2_forward.1} parent=1 // pred_region
      _
    $region53: #{dinov2_forward.1} parent=1 // pred_fallthru
      _
    // Predicated region
    $region54: #{dinov2_forward.1} parent=1 // pred_check
      _
    $region55: #{dinov2_forward.1} parent=1 // pred_check_branch
      %59 = sbr.rel (0) target = $region57
    $region56: #{dinov2_forward.1} parent=1 // pred_region
      _
    $region57: #{dinov2_forward.1} parent=1 // pred_fallthru
      _
    // Predicated region
    $region58: #{dinov2_forward.1} parent=1 // pred_check
      _
    $region59: #{dinov2_forward.1} parent=1 // pred_check_branch
      %61 = sbr.rel (0) target = $region61
    $region60: #{dinov2_forward.1} parent=1 // pred_region
      _
    $region61: #{dinov2_forward.1} parent=1 // pred_fallthru
      _
    // Predicated region
    $region62: #{dinov2_forward.1} parent=1 // pred_check
      _
    $region63: #{dinov2_forward.1} parent=1 // pred_check_branch
      %63 = sbr.rel (0) target = $region65
    $region64: #{dinov2_forward.1} parent=1 // pred_region
      _
    $region65: #{dinov2_forward.1} parent=1 // pred_fallthru
      _
    // Predicated region
    $region66: #{dinov2_forward.1} parent=1 // pred_check
      _
    $region67: #{dinov2_forward.1} parent=1 // pred_check_branch
      %65 = sbr.rel (0) target = $region69
    $region68: #{dinov2_forward.1} parent=1 // pred_region
      _
    $region69: #{dinov2_forward.1} parent=1 // pred_fallthru
      _
    // Predicated region
    $region70: #{dinov2_forward.1} parent=1 // pred_check
      _
    $region71: #{dinov2_forward.1} parent=1 // pred_check_branch
      %67 = sbr.rel (0) target = $region73
    $region72: #{dinov2_forward.1} parent=1 // pred_region
      _
    $region73: #{dinov2_forward.1} parent=1 // pred_fallthru
      _
    // Predicated region
    $region74: #{dinov2_forward.1} parent=1 // pred_check
      _
    $region75: #{dinov2_forward.1} parent=1 // pred_check_branch
      %69 = sbr.rel (0) target = $region77
    $region76: #{dinov2_forward.1} parent=1 // pred_region
      _
    $region77: #{dinov2_forward.1} parent=1 // pred_fallthru
      _
    // Predicated region
    $region78: #{dinov2_forward.1} parent=1 // pred_check
      _
    $region79: #{dinov2_forward.1} parent=1 // pred_check_branch
      %71 = sbr.rel (0) target = $region81
    $region80: #{dinov2_forward.1} parent=1 // pred_region
      _
    $region81: #{dinov2_forward.1} parent=1 // pred_fallthru
      _
    // Predicated region
    $region82: #{dinov2_forward.1} parent=1 // pred_check
      _
    $region83: #{dinov2_forward.1} parent=1 // pred_check_branch
      %73 = sbr.rel (0) target = $region85
    $region84: #{dinov2_forward.1} parent=1 // pred_region
      _
    $region85: #{dinov2_forward.1} parent=1 // pred_fallthru
      _
    // Predicated region
    $region86: #{dinov2_forward.1} parent=1 // pred_check
      _
    $region87: #{dinov2_forward.1} parent=1 // pred_check_branch
      %75 = sbr.rel (0) target = $region89
    $region88: #{dinov2_forward.1} parent=1 // pred_region
      _
    $region89: #{dinov2_forward.1} parent=1 // pred_fallthru
      _
    // Predicated region
    $region90: #{dinov2_forward.1} parent=1 // pred_check
      _
    $region91: #{dinov2_forward.1} parent=1 // pred_check_branch
      %77 = sbr.rel (0) target = $region93
    $region92: #{dinov2_forward.1} parent=1 // pred_region
      _
    $region93: #{dinov2_forward.1} parent=1 // pred_fallthru
      _
    // Predicated region
    $region94: #{dinov2_forward.1} parent=1 // pred_check
      _
    $region95: #{dinov2_forward.1} parent=1 // pred_check_branch
      %79 = sbr.rel (0) target = $region97
    $region96: #{dinov2_forward.1} parent=1 // pred_region
      _
    $region97: #{dinov2_forward.1} parent=1 // pred_fallthru
      _
    // Predicated region
    $region98: #{dinov2_forward.1} parent=1 // pred_check
      _
    $region99: #{dinov2_forward.1} parent=1 // pred_check_branch
      %81 = sbr.rel (0) target = $region101
    $region100: #{dinov2_forward.1} parent=1 // pred_region
      _
    $region101: #{dinov2_forward.1} parent=1 // pred_fallthru
      _
    // Predicated region
    $region102: #{dinov2_forward.1} parent=1 // pred_check
      _
    $region103: #{dinov2_forward.1} parent=1 // pred_check_branch
      %83 = sbr.rel (0) target = $region105
    $region104: #{dinov2_forward.1} parent=1 // pred_region
      _
    $region105: #{dinov2_forward.1} parent=1 // pred_fallthru
      _
    %v85 = vld [vmem:[%s0] sm:$0xff]
    %v86 = vld [vmem:[%s0 + $0x8] sm:$0xff]
    %v87 = vld [vmem:[%s0 + $0x10] sm:$0xf]
    %v88 = vld [vmem:[%s0 + $0x14] sm:$0x11]
    %v89 = vld [vmem:[%s0 + $0x1c] sm:$0x11]
    %v90 = vld [vmem:[%s0 + $0x24] sm:$0x1]
    %v91 = vld [vmem:[%s1] sm:$0xf]
    %v92 = vld [vmem:[%s1 + $0x4] sm:$0xf]
    %v93 = vld [vmem:[%s1 + $0x8] sm:$0xf]
    %v94 = vld [vmem:[%s1 + $0xc] sm:$0xf]
    %v95 = vld [vmem:[%s1 + $0x10] sm:$0xf]
    %v96 = vld [vmem:[%s1 + $0x14] sm:$0xf]
    %v97 = vld [vmem:[%s1 + $0x18] sm:$0xf]
    %v98 = vld [vmem:[%s1 + $0x1c] sm:$0xf]
    %v99 = vld [vmem:[%s1 + $0x20] sm:$0xf]
    %v100 = vld [vmem:[%s1 + $0x24] sm:$0xf]
    %v101 = vld [vmem:[%s1 + $0x28] sm:$0xf]
    %v102 = vld [vmem:[%s1 + $0x2c] sm:$0xf]
    %v103 = vld [vmem:[%s1 + $0x30] sm:$0xf]
    %v104 = vld [vmem:[%s1 + $0x34] sm:$0xf]
    %v105 = vld [vmem:[%s1 + $0x38] sm:$0xf]
    %v106 = vld [vmem:[%s1 + $0x3c] sm:$0xf]
    %v107 = vld [vmem:[%s1 + $0x40] sm:$0xf]
    %v108 = vld [vmem:[%s1 + $0x44] sm:$0xf]
    %v109 = vld [vmem:[%s1 + $0x48] sm:$0xf]
    %v110 = vld [vmem:[%s1 + $0x4c] sm:$0xf]
    %v111 = vld [vmem:[%s1 + $0x50] sm:$0xf]
    %v112 = vld [vmem:[%s1 + $0x54] sm:$0xf]
    %v113 = vld [vmem:[%s1 + $0x58] sm:$0xf]
    %v114 = vld [vmem:[%s1 + $0x5c] sm:$0xf]
    %v115 = vld [vmem:[%s1 + $0x60] sm:$0xf]
    %v116 = vld [vmem:[%s1 + $0x64] sm:$0xf]
    %v117 = vld [vmem:[%s1 + $0x68] sm:$0xf]
    %v118 = vld [vmem:[%s1 + $0x6c] sm:$0xf]
    %v119 = vld [vmem:[%s1 + $0x70] sm:$0xf]
    %v120 = vld [vmem:[%s1 + $0x74] sm:$0xf]
    %v121 = vld [vmem:[%s1 + $0x78] sm:$0xf]
    %v122 = vld [vmem:[%s1 + $0x7c] sm:$0xf]
    %v123 = vld [vmem:[%s1 + $0x80] sm:$0xf]
    %v124 = vld [vmem:[%s1 + $0x84] sm:$0xf]
    %v125 = vld [vmem:[%s1 + $0x88] sm:$0xf]
    %v126 = vld [vmem:[%s1 + $0x8c] sm:$0xf]
    %v127 = vld [vmem:[%s1 + $0x90] sm:$0xf]
    %v128 = vld [vmem:[%s1 + $0x94] sm:$0xf]
    %v129 = vld [vmem:[%s1 + $0x98] sm:$0xf]
    %v130 = vld [vmem:[%s1 + $0x9c] sm:$0xf]
    %v131 = vld [vmem:[%s1 + $0xa0] sm:$0xf]
    %v132 = vld [vmem:[%s1 + $0xa4] sm:$0xf]
    %v133 = vld [vmem:[%s1 + $0xa8] sm:$0xf]
    %v134 = vld [vmem:[%s1 + $0xac] sm:$0xf]
    %v135 = vld [vmem:[%s1 + $0xb0] sm:$0xf]
    %v136 = vld [vmem:[%s1 + $0xb4] sm:$0xf]
    %v137 = vld [vmem:[%s1 + $0xb8] sm:$0xf]
    %v138 = vld [vmem:[%s1 + $0xbc] sm:$0xf]
    %v139 = vld [vmem:[%s1 + $0xc0] sm:$0xf]
    %v140 = vld [vmem:[%s1 + $0xc4] sm:$0xf]
    %v141 = vld [vmem:[%s1 + $0xc8] sm:$0xf]
    %v142 = vld [vmem:[%s1 + $0xcc] sm:$0xf]
    %v143 = vld [vmem:[%s1 + $0xd0] sm:$0xf]
    %v144 = vld [vmem:[%s1 + $0xd4] sm:$0xf]
    %v145 = vld [vmem:[%s1 + $0xd8] sm:$0xf]
    %v146 = vld [vmem:[%s1 + $0xdc] sm:$0xf]
    %v147 = vld [vmem:[%s1 + $0xe0] sm:$0xf]
    %v148 = vld [vmem:[%s1 + $0xe4] sm:$0xf]
    %v149 = vld [vmem:[%s1 + $0xe8] sm:$0xf]
    %v150 = vld [vmem:[%s1 + $0xec] sm:$0xf]
    %v151 = vld [vmem:[%s1 + $0xf0] sm:$0xf]
    %v152 = vld [vmem:[%s1 + $0xf4] sm:$0xf]
    %v153 = vld [vmem:[%s1 + $0xf8] sm:$0xf]
    %v154 = vld [vmem:[%s1 + $0xfc] sm:$0xf]
    %v155 = vld [vmem:[%s1 + $0x100] sm:$0xf]
    %v156 = vld [vmem:[%s1 + $0x104] sm:$0xf]
    %v157 = vld [vmem:[%s1 + $0x108] sm:$0xf]
    %v158 = vld [vmem:[%s1 + $0x10c] sm:$0xf]
    %v159 = vld [vmem:[%s1 + $0x110] sm:$0xf]
    %v160 = vld [vmem:[%s1 + $0x114] sm:$0xf]
    %v161 = vld [vmem:[%s1 + $0x118] sm:$0xf]
    %v162 = vld [vmem:[%s1 + $0x11c] sm:$0xf]
    %v163 = vld [vmem:[%s1 + $0x120] sm:$0xf]
    %v164 = vld [vmem:[%s1 + $0x124] sm:$0xf]
    %v165 = vld [vmem:[%s1 + $0x128] sm:$0xf]
    %v166 = vld [vmem:[%s1 + $0x12c] sm:$0xf]
    %v167 = vld [vmem:[%s1 + $0x130] sm:$0xf]
    %v168 = vld [vmem:[%s1 + $0x134] sm:$0xf]
    %v169 = vld [vmem:[%s1 + $0x138] sm:$0xf]
    %v170 = vld [vmem:[%s1 + $0x13c] sm:$0xf]
    %v171 = vld [vmem:[%s2] sm:$0xff]
    %v172 = vld [vmem:[%s2 + $0x8] sm:$0x3]
    %v179 = vunpack.c.l.b16 %v85
    %v180 = vunpack.c.h.b16 %v85
    %v181 = vunpack.c.l.b16 %v86
    %v182 = vunpack.c.h.b16 %v86
    %v183 = vunpack.c.l.b16 %v87
    %v184 = vunpack.c.l.b16 %v88
    %v185 = vunpack.c.h.b16 %v88
    %v186 = vunpack.c.l.b16 %v89
    %v187 = vunpack.c.h.b16 %v89
    %v188 = vunpack.c.l.b16 %v90
    %v189 = vpack.c.b16 %v184, %v179
    %v190 = vpack.c.b16 %v185, %v180
    %v191 = vpack.c.b16 %v186, %v181
    %v192 = vpack.c.b16 %v187, %v182
    %v193 = vpack.c.b16 %v188, %v183
    %v279 = vunpack.c.l.b16 %v91
    %v280 = vunpack.c.l.b16 %v92
    %v281 = vunpack.c.l.b16 %v93
    %v282 = vunpack.c.l.b16 %v94
    %v283 = vunpack.c.l.b16 %v95
    %v284 = vunpack.c.l.b16 %v96
    %v285 = vunpack.c.l.b16 %v97
    %v286 = vunpack.c.l.b16 %v98
    %v287 = vunpack.c.l.b16 %v99
    %v288 = vunpack.c.l.b16 %v100
    %v289 = vunpack.c.l.b16 %v101
    %v290 = vunpack.c.l.b16 %v102
    %v291 = vunpack.c.l.b16 %v103
    %v292 = vunpack.c.l.b16 %v104
    %v293 = vunpack.c.l.b16 %v105
    %v294 = vunpack.c.l.b16 %v106
    %v295 = vunpack.c.l.b16 %v107
    %v296 = vunpack.c.l.b16 %v108
    %v297 = vunpack.c.l.b16 %v109
    %v298 = vunpack.c.l.b16 %v110
    %v299 = vunpack.c.l.b16 %v111
    %v300 = vunpack.c.l.b16 %v112
    %v301 = vunpack.c.l.b16 %v113
    %v302 = vunpack.c.l.b16 %v114
    %v303 = vunpack.c.l.b16 %v115
    %v304 = vunpack.c.l.b16 %v116
    %v305 = vunpack.c.l.b16 %v117
    %v306 = vunpack.c.l.b16 %v118
    %v307 = vunpack.c.l.b16 %v119
    %v308 = vunpack.c.l.b16 %v120
    %v309 = vunpack.c.l.b16 %v121
    %v310 = vunpack.c.l.b16 %v122
    %v311 = vunpack.c.l.b16 %v123
    %v312 = vunpack.c.l.b16 %v124
    %v313 = vunpack.c.l.b16 %v125
    %v314 = vunpack.c.l.b16 %v126
    %v315 = vunpack.c.l.b16 %v127
    %v316 = vunpack.c.l.b16 %v128
    %v317 = vunpack.c.l.b16 %v129
    %v318 = vunpack.c.l.b16 %v130
    %v319 = vunpack.c.l.b16 %v131
    %v320 = vunpack.c.l.b16 %v132
    %v321 = vunpack.c.l.b16 %v133
    %v322 = vunpack.c.l.b16 %v134
    %v323 = vunpack.c.l.b16 %v135
    %v324 = vunpack.c.l.b16 %v136
    %v325 = vunpack.c.l.b16 %v137
    %v326 = vunpack.c.l.b16 %v138
    %v327 = vunpack.c.l.b16 %v139
    %v328 = vunpack.c.l.b16 %v140
    %v329 = vunpack.c.l.b16 %v141
    %v330 = vunpack.c.l.b16 %v142
    %v331 = vunpack.c.l.b16 %v143
    %v332 = vunpack.c.l.b16 %v144
    %v333 = vunpack.c.l.b16 %v145
    %v334 = vunpack.c.l.b16 %v146
    %v335 = vunpack.c.l.b16 %v147
    %v336 = vunpack.c.l.b16 %v148
    %v337 = vunpack.c.l.b16 %v149
    %v338 = vunpack.c.l.b16 %v150
    %v339 = vunpack.c.l.b16 %v151
    %v340 = vunpack.c.l.b16 %v152
    %v341 = vunpack.c.l.b16 %v153
    %v342 = vunpack.c.l.b16 %v154
    %v343 = vunpack.c.l.b16 %v155
    %v344 = vunpack.c.l.b16 %v156
    %v345 = vunpack.c.l.b16 %v157
    %v346 = vunpack.c.l.b16 %v158
    %v347 = vunpack.c.l.b16 %v159
    %v348 = vunpack.c.l.b16 %v160
    %v349 = vunpack.c.l.b16 %v161
    %v350 = vunpack.c.l.b16 %v162
    %v351 = vunpack.c.l.b16 %v163
    %v352 = vunpack.c.l.b16 %v164
    %v353 = vunpack.c.l.b16 %v165
    %v354 = vunpack.c.l.b16 %v166
    %v355 = vunpack.c.l.b16 %v167
    %v356 = vunpack.c.l.b16 %v168
    %v357 = vunpack.c.l.b16 %v169
    %v358 = vunpack.c.l.b16 %v170
    %v359 = vpack.c.b16 %v280, %v279
    %v360 = vpack.c.b16 %v282, %v281
    %v361 = vpack.c.b16 %v284, %v283
    %v362 = vpack.c.b16 %v286, %v285
    %v363 = vpack.c.b16 %v288, %v287
    %v364 = vpack.c.b16 %v290, %v289
    %v365 = vpack.c.b16 %v292, %v291
    %v366 = vpack.c.b16 %v294, %v293
    %v367 = vpack.c.b16 %v296, %v295
    %v368 = vpack.c.b16 %v298, %v297
    %v369 = vpack.c.b16 %v300, %v299
    %v370 = vpack.c.b16 %v302, %v301
    %v371 = vpack.c.b16 %v304, %v303
    %v372 = vpack.c.b16 %v306, %v305
    %v373 = vpack.c.b16 %v308, %v307
    %v374 = vpack.c.b16 %v310, %v309
    %v375 = vpack.c.b16 %v312, %v311
    %v376 = vpack.c.b16 %v314, %v313
    %v377 = vpack.c.b16 %v316, %v315
    %v378 = vpack.c.b16 %v318, %v317
    %v379 = vpack.c.b16 %v320, %v319
    %v380 = vpack.c.b16 %v322, %v321
    %v381 = vpack.c.b16 %v324, %v323
    %v382 = vpack.c.b16 %v326, %v325
    %v383 = vpack.c.b16 %v328, %v327
    %v384 = vpack.c.b16 %v330, %v329
    %v385 = vpack.c.b16 %v332, %v331
    %v386 = vpack.c.b16 %v334, %v333
    %v387 = vpack.c.b16 %v336, %v335
    %v388 = vpack.c.b16 %v338, %v337
    %v389 = vpack.c.b16 %v340, %v339
    %v390 = vpack.c.b16 %v342, %v341
    %v391 = vpack.c.b16 %v344, %v343
    %v392 = vpack.c.b16 %v346, %v345
    %v393 = vpack.c.b16 %v348, %v347
    %v394 = vpack.c.b16 %v350, %v349
    %v395 = vpack.c.b16 %v352, %v351
    %v396 = vpack.c.b16 %v354, %v353
    %v397 = vpack.c.b16 %v356, %v355
    %v398 = vpack.c.b16 %v358, %v357
    %439 = vmatpush.bf16.msra.mxu0 %v366
    %440 = vmatpush.bf16.msra.mxu0 %v365
    %441 = vmatpush.bf16.msra.mxu0 %v364
    %442 = vmatpush.bf16.msra.mxu0 %v363
    %443 = vmatpush.bf16.msra.mxu0 %v362
    %444 = vmatpush.bf16.msra.mxu0 %v361
    %445 = vmatpush.bf16.msra.mxu0 %v360
    %446 = vmatpush.bf16.msra.mxu0 %v359
    %447 = vmatmul.bf16.gmra.mxu0 %v189
    %v448 = vpop.f32.mrf.mxu0
    %v449 = vadd.f32 %v171, %v448
    %v450 = vpop.f32.mrf.mxu0
    %v451 = vadd.f32 %v172, %v450
    %452 = vdwg.mxu0
    %453 = vmatpush.bf16.msra.mxu0 %v374
    %454 = vmatpush.bf16.msra.mxu0 %v373
    %455 = vmatpush.bf16.msra.mxu0 %v372
    %456 = vmatpush.bf16.msra.mxu0 %v371
    %457 = vmatpush.bf16.msra.mxu0 %v370
    %458 = vmatpush.bf16.msra.mxu0 %v369
    %459 = vmatpush.bf16.msra.mxu0 %v368
    %460 = vmatpush.bf16.msra.mxu0 %v367
    %461 = vmatmul.bf16.gmra.mxu0 %v190
    %v462 = vpop.f32.mrf.mxu0
    %v463 = vadd.f32 %v449, %v462
    %v464 = vpop.f32.mrf.mxu0
    %v465 = vadd.f32 %v451, %v464
    %466 = vdwg.mxu0
    %467 = vmatpush.bf16.msra.mxu0 %v382
    %468 = vmatpush.bf16.msra.mxu0 %v381
    %469 = vmatpush.bf16.msra.mxu0 %v380
    %470 = vmatpush.bf16.msra.mxu0 %v379
    %471 = vmatpush.bf16.msra.mxu0 %v378
    %472 = vmatpush.bf16.msra.mxu0 %v377
    %473 = vmatpush.bf16.msra.mxu0 %v376
    %474 = vmatpush.bf16.msra.mxu0 %v375
    %475 = vmatmul.bf16.gmra.mxu0 %v191
    %v476 = vpop.f32.mrf.mxu0
    %v477 = vadd.f32 %v463, %v476
    %v478 = vpop.f32.mrf.mxu0
    %v479 = vadd.f32 %v465, %v478
    %480 = vdwg.mxu0
    %481 = vmatpush.bf16.msra.mxu0 %v390
    %482 = vmatpush.bf16.msra.mxu0 %v389
    %483 = vmatpush.bf16.msra.mxu0 %v388
    %484 = vmatpush.bf16.msra.mxu0 %v387
    %485 = vmatpush.bf16.msra.mxu0 %v386
    %486 = vmatpush.bf16.msra.mxu0 %v385
    %487 = vmatpush.bf16.msra.mxu0 %v384
    %488 = vmatpush.bf16.msra.mxu0 %v383
    %489 = vmatmul.bf16.gmra.mxu0 %v192
    %v490 = vpop.f32.mrf.mxu0
    %v491 = vadd.f32 %v477, %v490
    %v492 = vpop.f32.mrf.mxu0
    %v493 = vadd.f32 %v479, %v492
    %494 = vdwg.mxu0
    %495 = vmatpush.bf16.msra.mxu0 %v398
    %496 = vmatpush.bf16.msra.mxu0 %v397
    %497 = vmatpush.bf16.msra.mxu0 %v396
    %498 = vmatpush.bf16.msra.mxu0 %v395
    %499 = vmatpush.bf16.msra.mxu0 %v394
    %500 = vmatpush.bf16.msra.mxu0 %v393
    %501 = vmatpush.bf16.msra.mxu0 %v392
    %502 = vmatpush.bf16.msra.mxu0 %v391
    %503 = vmatmul.bf16.gmra.mxu0 %v193
    %v504 = vpop.f32.mrf.mxu0
    %v505 = vadd.f32 %v491, %v504
    %v506 = vpop.f32.mrf.mxu0
    %v507 = vadd.f32 %v493, %v506
    %508 = vdwg.mxu0
    %v509 = vld [vmem:[%s3] sm:$0x1]
    %v510 = vld [vmem:[%s4] sm:$0x1]
    %vm511 = vcmask 261120
    %v512 = vsel %vm511, %v505, 0.0
    %513 = vadd.xlane.f32.xlu0 %v512
    %v514 = vpop.xlane.xlu0 %513
    %vm515 = vcmask 254976
    %v516 = vsel %vm515, %v507, 0.0
    %517 = vadd.xlane.f32.xlu0 %v516
    %v518 = vpop.xlane.xlu0 %517
    %v519 = vrcp.pop 32.0
    %v520 = vmul.f32 32.0, %v519
    %v521 = vsub.f32 1.0, %v520
    %v522 = vmul.f32 %v519, %v521
    %v523 = vadd.f32 %v519, %v522
    %vm524 = vweird.f32 %v519
    %v525 = vsel %vm524, %v519, %v523
    %v526 = vmul.f32 %v514, %v525
    %v527 = vmul.f32 %v518, %v525
    %v528 = vsub.f32 %v505, %v526
    %v529 = vsub.f32 %v507, %v527
    %v530 = vmul.f32 %v528, %v528
    %v531 = vmul.f32 %v529, %v529
    %v532 = vsel %vm511, %v530, 0.0
    %533 = vadd.xlane.f32.xlu0 %v532
    %v534 = vpop.xlane.xlu0 %533
    %v535 = vsel %vm515, %v531, 0.0
    %536 = vadd.xlane.f32.xlu0 %v535
    %v537 = vpop.xlane.xlu0 %536
    %v538 = vmul.f32 %v534, %v525
    %v539 = vmul.f32 %v537, %v525
    %v540 = vadd.f32 %v538, 1e-06
    %v541 = vadd.f32 %v539, 1e-06
    %v542 = vrsqrt.pop %v540
    %v543 = vmul.f32 %v542, %v540
    %v544 = vmul.f32 %v543, %v542
    %v545 = vmul.f32 0.5, %v544
    %v546 = vsub.f32 1.5, %v545
    %v547 = vmul.f32 %v542, %v546
    %vm548 = vweird.f32 %v540
    %vm549 = vweird.f32 %v542
    %vm550 = vmor %vm548, %vm549
    %v551 = vsel %vm550, %v542, %v547
    %v552 = vrsqrt.pop %v541
    %v553 = vmul.f32 %v552, %v541
    %v554 = vmul.f32 %v553, %v552
    %v555 = vmul.f32 0.5, %v554
    %v556 = vsub.f32 1.5, %v555
    %v557 = vmul.f32 %v552, %v556
    %vm558 = vweird.f32 %v541
    %vm559 = vweird.f32 %v552
    %vm560 = vmor %vm558, %vm559
    %v561 = vsel %vm560, %v552, %v557
    %v562 = vmul.f32 %v528, %v551
    %v563 = vmul.f32 %v529, %v561
    %v565 = vperm.slane %v509, 0
    %v567 = vmul.f32 %v562, %v565
    %v568 = vmul.f32 %v563, %v565
    %v570 = vperm.slane %v510, 0
    %v572 = vadd.f32 %v567, %v570
    %v573 = vadd.f32 %v568, %v570
    %v574 = vpack.c.bf16 %v573, %v572
    %v575 = vld [vmem:[%s5] sm:$0xf]
    %v576 = vld [vmem:[%s5 + $0x4] sm:$0xf]
    %v577 = vld [vmem:[%s5 + $0x8] sm:$0xf]
    %v578 = vld [vmem:[%s5 + $0xc] sm:$0xf]
    %v579 = vld [vmem:[%s6] sm:$0x1]
    %v581 = vperm.slane %v579, 0
    %v587 = vunpack.c.l.b16 %v575
    %v588 = vunpack.c.l.b16 %v576
    %v589 = vunpack.c.l.b16 %v577
    %v590 = vunpack.c.l.b16 %v578
    %v591 = vpack.c.b16 %v588, %v587
    %v592 = vpack.c.b16 %v590, %v589
    %v596 = vsel %vm511, %v574, 0
    %598 = vmatpush.bf16.msra.mxu0 0
    %599 = vmatpush.bf16.msra.mxu0 0
    %600 = vmatpush.bf16.msra.mxu0 0
    %601 = vmatpush.bf16.msra.mxu0 0
    %602 = vmatpush.bf16.msra.mxu0 0
    %603 = vmatpush.bf16.msra.mxu0 0
    %604 = vmatpush.bf16.msra.mxu0 %v592
    %605 = vmatpush.bf16.msra.mxu0 %v591
    %606 = vmatmul.bf16.gmra.mxu0 %v596
    %v607 = vpop.f32.mrf.mxu0
    %v608 = vadd.f32 %v581, %v607
    %v609 = vpop.f32.mrf.mxu0
    %v610 = vadd.f32 %v581, %v609
    %611 = vdwg.mxu0
    %v612 = vld [vmem:[%s7] sm:$0xf]
    %v613 = vld [vmem:[%s7 + $0x4] sm:$0xf]
    %v614 = vld [vmem:[%s7 + $0x8] sm:$0xf]
    %v615 = vld [vmem:[%s7 + $0xc] sm:$0xf]
    %v616 = vld [vmem:[%s8] sm:$0x1]
    %v618 = vperm.slane %v616, 0
    %v624 = vunpack.c.l.b16 %v612
    %v625 = vunpack.c.l.b16 %v613
    %v626 = vunpack.c.l.b16 %v614
    %v627 = vunpack.c.l.b16 %v615
    %v628 = vpack.c.b16 %v625, %v624
    %v629 = vpack.c.b16 %v627, %v626
    %632 = vmatpush.bf16.msra.mxu0 0
    %633 = vmatpush.bf16.msra.mxu0 0
    %634 = vmatpush.bf16.msra.mxu0 0
    %635 = vmatpush.bf16.msra.mxu0 0
    %636 = vmatpush.bf16.msra.mxu0 0
    %637 = vmatpush.bf16.msra.mxu0 0
    %638 = vmatpush.bf16.msra.mxu0 %v629
    %639 = vmatpush.bf16.msra.mxu0 %v628
    %640 = vmatmul.bf16.gmra.mxu0 %v596
    %v641 = vpop.f32.mrf.mxu0
    %v642 = vadd.f32 %v618, %v641
    %v643 = vpop.f32.mrf.mxu0
    %v644 = vadd.f32 %v618, %v643
    %645 = vdwg.mxu0
    %v646 = vld [vmem:[%s9] sm:$0xf]
    %v647 = vld [vmem:[%s9 + $0x4] sm:$0xf]
    %v648 = vld [vmem:[%s9 + $0x8] sm:$0xf]
    %v649 = vld [vmem:[%s9 + $0xc] sm:$0xf]
    %v650 = vld [vmem:[%s10] sm:$0x1]
    %v652 = vperm.slane %v650, 0
    %v658 = vunpack.c.l.b16 %v646
    %v659 = vunpack.c.l.b16 %v647
    %v660 = vunpack.c.l.b16 %v648
    %v661 = vunpack.c.l.b16 %v649
    %v662 = vpack.c.b16 %v659, %v658
    %v663 = vpack.c.b16 %v661, %v660
    %666 = vmatpush.bf16.msra.mxu0 0
    %667 = vmatpush.bf16.msra.mxu0 0
    %668 = vmatpush.bf16.msra.mxu0 0
    %669 = vmatpush.bf16.msra.mxu0 0
    %670 = vmatpush.bf16.msra.mxu0 0
    %671 = vmatpush.bf16.msra.mxu0 0
    %672 = vmatpush.bf16.msra.mxu0 %v663
    %673 = vmatpush.bf16.msra.mxu0 %v662
    %674 = vmatmul.bf16.gmra.mxu0 %v596
    %v675 = vpop.f32.mrf.mxu0
    %v676 = vadd.f32 %v652, %v675
    %v677 = vpop.f32.mrf.mxu0
    %v678 = vadd.f32 %v652, %v677
    %679 = vdwg.mxu0
    %v680 = vmul.f32 %v608, 0.25
    %v681 = vmul.f32 %v610, 0.25
    %v684 = vrot.slane %v680, 1
    %v685 = vrot.slane %v680, 2
    %v686 = vrot.slane %v680, 3
    %v687 = vrot.slane %v680, 4
    %v688 = vrot.slane %v680, 5
    %v689 = vrot.slane %v680, 6
    %v690 = vrot.slane %v680, 7
    %v691 = vrot.slane %v681, 1
    %692 = vst [vmem:[#allocation1] ss:$9 sm:$0xff] %v680
    %s693 = scalar_lea.vmem [#allocation1], 1
    %694 = vst [vmem:[%s693] ss:$9 sm:$0xff] %v684
    %s695 = scalar_lea.vmem [#allocation1], 2
    %696 = vst [vmem:[%s695] ss:$9 sm:$0xff] %v685
    %s697 = scalar_lea.vmem [#allocation1], 3
    %698 = vst [vmem:[%s697] ss:$9 sm:$0xff] %v686
    %s699 = scalar_lea.vmem [#allocation1], 4
    %700 = vst [vmem:[%s699] ss:$9 sm:$0xff] %v687
    %v701 = vld [vmem:[#allocation1] sm:$0xff]
    %702 = vst [vmem:[#allocation1] ss:$9 sm:$0xff] %v688
    %703 = vst [vmem:[%s693] ss:$9 sm:$0xff] %v689
    %704 = vst [vmem:[%s695] ss:$9 sm:$0xff] %v690
    %705 = vst [vmem:[%s697] ss:$9 sm:$0xff] %v681
    %706 = vst [vmem:[%s699] ss:$9 sm:$0xff] %v691
    %v707 = vld [vmem:[#allocation1] sm:$0xff]
    %v710 = vpack.c.bf16 %v701, %v701
    %v711 = vpack.c.bf16 %v707, %v707
    %v714 = vrot.slane %v642, 1
    %v715 = vrot.slane %v642, 2
    %v716 = vrot.slane %v642, 3
    %v717 = vrot.slane %v642, 4
    %v718 = vrot.slane %v642, 5
    %v719 = vrot.slane %v642, 6
    %v720 = vrot.slane %v642, 7
    %v721 = vrot.slane %v644, 1
    %722 = vst [vmem:[#allocation1] ss:$9 sm:$0xff] %v642
    %s723 = scalar_lea.vmem [#allocation1], 1
    %724 = vst [vmem:[%s723] ss:$9 sm:$0xff] %v714
    %s725 = scalar_lea.vmem [#allocation1], 2
    %726 = vst [vmem:[%s725] ss:$9 sm:$0xff] %v715
    %s727 = scalar_lea.vmem [#allocation1], 3
    %728 = vst [vmem:[%s727] ss:$9 sm:$0xff] %v716
    %s729 = scalar_lea.vmem [#allocation1], 4
    %730 = vst [vmem:[%s729] ss:$9 sm:$0xff] %v717
    %v731 = vld [vmem:[#allocation1] sm:$0xff]
    %732 = vst [vmem:[#allocation1] ss:$9 sm:$0xff] %v718
    %733 = vst [vmem:[%s723] ss:$9 sm:$0xff] %v719
    %734 = vst [vmem:[%s725] ss:$9 sm:$0xff] %v720
    %735 = vst [vmem:[%s727] ss:$9 sm:$0xff] %v644
    %736 = vst [vmem:[%s729] ss:$9 sm:$0xff] %v721
    %v737 = vld [vmem:[#allocation1] sm:$0xff]
    %v740 = vpack.c.bf16 %v731, %v731
    %v741 = vpack.c.bf16 %v737, %v737
    %v744 = vrot.slane %v676, 1
    %v745 = vrot.slane %v676, 2
    %v746 = vrot.slane %v676, 3
    %v747 = vrot.slane %v676, 4
    %v748 = vrot.slane %v676, 5
    %v749 = vrot.slane %v676, 6
    %v750 = vrot.slane %v676, 7
    %v751 = vrot.slane %v678, 1
    %752 = vst [vmem:[#allocation1] ss:$9 sm:$0xff] %v676
    %s753 = scalar_lea.vmem [#allocation1], 1
    %754 = vst [vmem:[%s753] ss:$9 sm:$0xff] %v744
    %s755 = scalar_lea.vmem [#allocation1], 2
    %756 = vst [vmem:[%s755] ss:$9 sm:$0xff] %v745
    %s757 = scalar_lea.vmem [#allocation1], 3
    %758 = vst [vmem:[%s757] ss:$9 sm:$0xff] %v746
    %s759 = scalar_lea.vmem [#allocation1], 4
    %760 = vst [vmem:[%s759] ss:$9 sm:$0xff] %v747
    %v761 = vld [vmem:[#allocation1] sm:$0xff]
    %762 = vst [vmem:[#allocation1] ss:$9 sm:$0xff] %v748
    %763 = vst [vmem:[%s753] ss:$9 sm:$0xff] %v749
    %764 = vst [vmem:[%s755] ss:$9 sm:$0xff] %v750
    %765 = vst [vmem:[%s757] ss:$9 sm:$0xff] %v678
    %766 = vst [vmem:[%s759] ss:$9 sm:$0xff] %v751
    %v767 = vld [vmem:[#allocation1] sm:$0xff]
    %v770 = vpack.c.bf16 %v761, %v761
    %v771 = vpack.c.bf16 %v767, %v767
    %vm772 = vcmask 130048
    %v774 = vsel %vm772, %v710, 0
    %v777 = vsel %vm772, %v740, 0
    %779 = vmatpush.bf16.xpose.msra.mxu0 0
    %780 = vmatpush.bf16.xpose.msra.mxu0 0
    %781 = vmatpush.bf16.xpose.msra.mxu0 0
    %782 = vmatpush.bf16.xpose.msra.mxu0 0
    %783 = vmatpush.bf16.xpose.msra.mxu0 0
    %784 = vmatpush.bf16.xpose.msra.mxu0 0
    %785 = vmatpush.bf16.xpose.msra.mxu0 0
    %786 = vmatpush.bf16.xpose.msra.mxu0 %v777
    %787 = vmatmul.bf16.gmra.mxu0 %v774
    %v788 = vpop.f32.mrf.mxu0
    %v789 = vadd.f32 0.0, %v788
    %v790 = vpop.f32.mrf.mxu0
    %791 = vdwg.mxu0
    %v793 = vsel %vm772, %v711, 0
    %v796 = vsel %vm772, %v741, 0
    %798 = vmatpush.bf16.xpose.msra.mxu0 0
    %799 = vmatpush.bf16.xpose.msra.mxu0 0
    %800 = vmatpush.bf16.xpose.msra.mxu0 0
    %801 = vmatpush.bf16.xpose.msra.mxu0 0
    %802 = vmatpush.bf16.xpose.msra.mxu0 0
    %803 = vmatpush.bf16.xpose.msra.mxu0 0
    %804 = vmatpush.bf16.xpose.msra.mxu0 0
    %805 = vmatpush.bf16.xpose.msra.mxu0 %v796
    %806 = vmatmul.bf16.gmra.mxu0 %v793
    %v807 = vpop.f32.mrf.mxu0
    %v808 = vadd.f32 0.0, %v807
    %v809 = vpop.f32.mrf.mxu0
    %810 = vdwg.mxu0
    %vm811 = vcmask 36864
    %v812 = vsel %vm811, %v789, -inf
    %813 = vmax.xlane.f32.xlu0 %v812
    %v814 = vpop.xlane.xlu0 %813
    %v815 = vsel %vm811, %v808, -inf
    %816 = vmax.xlane.f32.xlu0 %v815
    %v817 = vpop.xlane.xlu0 %816
    %v818 = vsub.f32 %v789, %v814
    %v819 = vsub.f32 %v808, %v817
    %v820 = vmul.f32 %v818, 1.442695
    %v821 = vpow.pop %v820
    %v822 = vmul.f32 %v819, 1.442695
    %v823 = vpow.pop %v822
    %v824 = vsel %vm811, %v821, 0.0
    %825 = vadd.xlane.f32.xlu0 %v824
    %v826 = vpop.xlane.xlu0 %825
    %v827 = vsel %vm811, %v823, 0.0
    %828 = vadd.xlane.f32.xlu0 %v827
    %v829 = vpop.xlane.xlu0 %828
    %v830 = vrcp.pop %v826
    %v831 = vrcp.pop %v829
    %v832 = vmul.f32 %v821, %v830
    %v833 = vmul.f32 %v823, %v831
    %v834 = vpack.c.bf16 %v832, %v832
    %v835 = vpack.c.bf16 %v833, %v833
    %vm836 = vcmask 39936
    %v838 = vsel %vm836, %v834, 0
    %vm840 = vcmask 1041408
    %vm841 = vcmask 1042432
    %v842 = vsel %vm840, 4294967295, 65535
    %v843 = vsel %vm841, %v842, 0
    %v845 = vand.u32 %v770, %v843
    %847 = vmatpush.bf16.msra.mxu0 0
    %848 = vmatpush.bf16.msra.mxu0 0
    %849 = vmatpush.bf16.msra.mxu0 0
    %850 = vmatpush.bf16.msra.mxu0 0
    %851 = vmatpush.bf16.msra.mxu0 0
    %852 = vmatpush.bf16.msra.mxu0 0
    %853 = vmatpush.bf16.msra.mxu0 0
    %854 = vmatpush.bf16.msra.mxu0 %v845
    %855 = vmatmul.bf16.gmra.mxu0 %v838
    %v856 = vpop.f32.mrf.mxu0
    %v857 = vadd.f32 0.0, %v856
    %v858 = vpop.f32.mrf.mxu0
    %859 = vdwg.mxu0
    %v861 = vsel %vm836, %v835, 0
    %v864 = vand.u32 %v771, %v843
    %866 = vmatpush.bf16.msra.mxu0 0
    %867 = vmatpush.bf16.msra.mxu0 0
    %868 = vmatpush.bf16.msra.mxu0 0
    %869 = vmatpush.bf16.msra.mxu0 0
    %870 = vmatpush.bf16.msra.mxu0 0
    %871 = vmatpush.bf16.msra.mxu0 0
    %872 = vmatpush.bf16.msra.mxu0 0
    %873 = vmatpush.bf16.msra.mxu0 %v864
    %874 = vmatmul.bf16.gmra.mxu0 %v861
    %v875 = vpop.f32.mrf.mxu0
    %v876 = vadd.f32 0.0, %v875
    %v877 = vpop.f32.mrf.mxu0
    %878 = vdwg.mxu0
    %v881 = vrot.slane %v857, 1
    %v882 = vrot.slane %v857, 2
    %v883 = vrot.slane %v857, 3
    %v884 = vrot.slane %v857, 4
    %v885 = vrot.slane %v876, 1
    %v886 = vrot.slane %v876, 2
    %v887 = vrot.slane %v876, 3
    %v888 = vrot.slane %v876, 4
    %889 = vst [vmem:[#allocation1] ss:$9 sm:$0xff] %v857
    %s890 = scalar_lea.vmem [#allocation1], 1
    %891 = vst [vmem:[%s890] ss:$9 sm:$0xff] %v881
    %s892 = scalar_lea.vmem [#allocation1], 2
    %893 = vst [vmem:[%s892] ss:$9 sm:$0xff] %v882
    %s894 = scalar_lea.vmem [#allocation1], 3
    %895 = vst [vmem:[%s894] ss:$9 sm:$0xff] %v883
    %s896 = scalar_lea.vmem [#allocation1], 4
    %897 = vst [vmem:[%s896] ss:$9 sm:$0xff] %v884
    %s898 = scalar_lea.vmem [#allocation1], 5
    %899 = vst [vmem:[%s898] ss:$9 sm:$0xff] %v876
    %s900 = scalar_lea.vmem [#allocation1], 6
    %901 = vst [vmem:[%s900] ss:$9 sm:$0xff] %v885
    %s902 = scalar_lea.vmem [#allocation1], 7
    %903 = vst [vmem:[%s902] ss:$9 sm:$0xff] %v886
    %v904 = vld [vmem:[#allocation1] sm:$0xff]
    %905 = vst [vmem:[#allocation1] ss:$9 sm:$0xff] %v887
    %906 = vst [vmem:[%s890] ss:$9 sm:$0xff] %v888
    %v907 = vld [vmem:[#allocation1] sm:$0xff]
    %v910 = vpack.c.bf16 %v907, %v904
    %v911 = vld [vmem:[%s11] sm:$0xf]
    %v912 = vld [vmem:[%s11 + $0x4] sm:$0xf]
    %s913 = scalar_lea.vmem %s5, 16
    %v914 = vld [vmem:[%s913] sm:$0xf]
    %v915 = vld [vmem:[%s913 + $0x4] sm:$0xf]
    %v916 = vld [vmem:[%s913 + $0x8] sm:$0xf]
    %v917 = vld [vmem:[%s913 + $0xc] sm:$0xf]
    %s918 = scalar_lea.vmem %s6, 1
    %v919 = vld [vmem:[%s918] sm:$0x1]
    %v921 = vperm.slane %v919, 0
    %v927 = vunpack.c.l.b16 %v914
    %v928 = vunpack.c.l.b16 %v915
    %v929 = vunpack.c.l.b16 %v916
    %v930 = vunpack.c.l.b16 %v917
    %v931 = vpack.c.b16 %v928, %v927
    %v932 = vpack.c.b16 %v930, %v929
    %935 = vmatpush.bf16.msra.mxu0 0
    %936 = vmatpush.bf16.msra.mxu0 0
    %937 = vmatpush.bf16.msra.mxu0 0
    %938 = vmatpush.bf16.msra.mxu0 0
    %939 = vmatpush.bf16.msra.mxu0 0
    %940 = vmatpush.bf16.msra.mxu0 0
    %941 = vmatpush.bf16.msra.mxu0 %v932
    %942 = vmatpush.bf16.msra.mxu0 %v931
    %943 = vmatmul.bf16.gmra.mxu0 %v596
    %v944 = vpop.f32.mrf.mxu0
    %v945 = vadd.f32 %v921, %v944
    %v946 = vpop.f32.mrf.mxu0
    %v947 = vadd.f32 %v921, %v946
    %948 = vdwg.mxu0
    %s949 = scalar_lea.vmem %s7, 16
    %v950 = vld [vmem:[%s949] sm:$0xf]
    %v951 = vld [vmem:[%s949 + $0x4] sm:$0xf]
    %v952 = vld [vmem:[%s949 + $0x8] sm:$0xf]
    %v953 = vld [vmem:[%s949 + $0xc] sm:$0xf]
    %s954 = scalar_lea.vmem %s8, 1
    %v955 = vld [vmem:[%s954] sm:$0x1]
    %v957 = vperm.slane %v955, 0
    %v963 = vunpack.c.l.b16 %v950
    %v964 = vunpack.c.l.b16 %v951
    %v965 = vunpack.c.l.b16 %v952
    %v966 = vunpack.c.l.b16 %v953
    %v967 = vpack.c.b16 %v964, %v963
    %v968 = vpack.c.b16 %v966, %v965
    %971 = vmatpush.bf16.msra.mxu0 0
    %972 = vmatpush.bf16.msra.mxu0 0
    %973 = vmatpush.bf16.msra.mxu0 0
    %974 = vmatpush.bf16.msra.mxu0 0
    %975 = vmatpush.bf16.msra.mxu0 0
    %976 = vmatpush.bf16.msra.mxu0 0
    %977 = vmatpush.bf16.msra.mxu0 %v968
    %978 = vmatpush.bf16.msra.mxu0 %v967
    %979 = vmatmul.bf16.gmra.mxu0 %v596
    %v980 = vpop.f32.mrf.mxu0
    %v981 = vadd.f32 %v957, %v980
    %v982 = vpop.f32.mrf.mxu0
    %v983 = vadd.f32 %v957, %v982
    %984 = vdwg.mxu0
    %s985 = scalar_lea.vmem %s9, 16
    %v986 = vld [vmem:[%s985] sm:$0xf]
    %v987 = vld [vmem:[%s985 + $0x4] sm:$0xf]
    %v988 = vld [vmem:[%s985 + $0x8] sm:$0xf]
    %v989 = vld [vmem:[%s985 + $0xc] sm:$0xf]
    %s990 = scalar_lea.vmem %s10, 1
    %v991 = vld [vmem:[%s990] sm:$0x1]
    %v993 = vperm.slane %v991, 0
    %v999 = vunpack.c.l.b16 %v986
    %v1000 = vunpack.c.l.b16 %v987
    %v1001 = vunpack.c.l.b16 %v988
    %v1002 = vunpack.c.l.b16 %v989
    %v1003 = vpack.c.b16 %v1000, %v999
    %v1004 = vpack.c.b16 %v1002, %v1001
    %1007 = vmatpush.bf16.msra.mxu0 0
    %1008 = vmatpush.bf16.msra.mxu0 0
    %1009 = vmatpush.bf16.msra.mxu0 0
    %1010 = vmatpush.bf16.msra.mxu0 0
    %1011 = vmatpush.bf16.msra.mxu0 0
    %1012 = vmatpush.bf16.msra.mxu0 0
    %1013 = vmatpush.bf16.msra.mxu0 %v1004
    %1014 = vmatpush.bf16.msra.mxu0 %v1003
    %1015 = vmatmul.bf16.gmra.mxu0 %v596
    %v1016 = vpop.f32.mrf.mxu0
    %v1017 = vadd.f32 %v993, %v1016
    %v1018 = vpop.f32.mrf.mxu0
    %v1019 = vadd.f32 %v993, %v1018
    %1020 = vdwg.mxu0
    %v1021 = vmul.f32 %v945, 0.25
    %v1022 = vmul.f32 %v947, 0.25
    %v1025 = vrot.slane %v1021, 1
    %v1026 = vrot.slane %v1021, 2
    %v1027 = vrot.slane %v1021, 3
    %v1028 = vrot.slane %v1021, 4
    %v1029 = vrot.slane %v1021, 5
    %v1030 = vrot.slane %v1021, 6
    %v1031 = vrot.slane %v1021, 7
    %v1032 = vrot.slane %v1022, 1
    %1033 = vst [vmem:[#allocation1] ss:$9 sm:$0xff] %v1021
    %s1034 = scalar_lea.vmem [#allocation1], 1
    %1035 = vst [vmem:[%s1034] ss:$9 sm:$0xff] %v1025
    %s1036 = scalar_lea.vmem [#allocation1], 2
    %1037 = vst [vmem:[%s1036] ss:$9 sm:$0xff] %v1026
    %s1038 = scalar_lea.vmem [#allocation1], 3
    %1039 = vst [vmem:[%s1038] ss:$9 sm:$0xff] %v1027
    %s1040 = scalar_lea.vmem [#allocation1], 4
    %1041 = vst [vmem:[%s1040] ss:$9 sm:$0xff] %v1028
    %v1042 = vld [vmem:[#allocation1] sm:$0xff]
    %1043 = vst [vmem:[#allocation1] ss:$9 sm:$0xff] %v1029
    %1044 = vst [vmem:[%s1034] ss:$9 sm:$0xff] %v1030
    %1045 = vst [vmem:[%s1036] ss:$9 sm:$0xff] %v1031
    %1046 = vst [vmem:[%s1038] ss:$9 sm:$0xff] %v1022
    %1047 = vst [vmem:[%s1040] ss:$9 sm:$0xff] %v1032
    %v1048 = vld [vmem:[#allocation1] sm:$0xff]
    %v1051 = vpack.c.bf16 %v1042, %v1042
    %v1052 = vpack.c.bf16 %v1048, %v1048
    %v1055 = vrot.slane %v981, 1
    %v1056 = vrot.slane %v981, 2
    %v1057 = vrot.slane %v981, 3
    %v1058 = vrot.slane %v981, 4
    %v1059 = vrot.slane %v981, 5
    %v1060 = vrot.slane %v981, 6
    %v1061 = vrot.slane %v981, 7
    %v1062 = vrot.slane %v983, 1
    %1063 = vst [vmem:[#allocation1] ss:$9 sm:$0xff] %v981
    %s1064 = scalar_lea.vmem [#allocation1], 1
    %1065 = vst [vmem:[%s1064] ss:$9 sm:$0xff] %v1055
    %s1066 = scalar_lea.vmem [#allocation1], 2
    %1067 = vst [vmem:[%s1066] ss:$9 sm:$0xff] %v1056
    %s1068 = scalar_lea.vmem [#allocation1], 3
    %1069 = vst [vmem:[%s1068] ss:$9 sm:$0xff] %v1057
    %s1070 = scalar_lea.vmem [#allocation1], 4
    %1071 = vst [vmem:[%s1070] ss:$9 sm:$0xff] %v1058
    %v1072 = vld [vmem:[#allocation1] sm:$0xff]
    %1073 = vst [vmem:[#allocation1] ss:$9 sm:$0xff] %v1059
    %1074 = vst [vmem:[%s1064] ss:$9 sm:$0xff] %v1060
    %1075 = vst [vmem:[%s1066] ss:$9 sm:$0xff] %v1061
    %1076 = vst [vmem:[%s1068] ss:$9 sm:$0xff] %v983
    %1077 = vst [vmem:[%s1070] ss:$9 sm:$0xff] %v1062
    %v1078 = vld [vmem:[#allocation1] sm:$0xff]
    %v1081 = vpack.c.bf16 %v1072, %v1072
    %v1082 = vpack.c.bf16 %v1078, %v1078
    %v1085 = vrot.slane %v1017, 1
    %v1086 = vrot.slane %v1017, 2
    %v1087 = vrot.slane %v1017, 3
    %v1088 = vrot.slane %v1017, 4
    %v1089 = vrot.slane %v1017, 5
    %v1090 = vrot.slane %v1017, 6
    %v1091 = vrot.slane %v1017, 7
    %v1092 = vrot.slane %v1019, 1
    %1093 = vst [vmem:[#allocation1] ss:$9 sm:$0xff] %v1017
    %s1094 = scalar_lea.vmem [#allocation1], 1
    %1095 = vst [vmem:[%s1094] ss:$9 sm:$0xff] %v1085
    %s1096 = scalar_lea.vmem [#allocation1], 2
    %1097 = vst [vmem:[%s1096] ss:$9 sm:$0xff] %v1086
    %s1098 = scalar_lea.vmem [#allocation1], 3
    %1099 = vst [vmem:[%s1098] ss:$9 sm:$0xff] %v1087
    %s1100 = scalar_lea.vmem [#allocation1], 4
    %1101 = vst [vmem:[%s1100] ss:$9 sm:$0xff] %v1088
    %v1102 = vld [vmem:[#allocation1] sm:$0xff]
    %1103 = vst [vmem:[#allocation1] ss:$9 sm:$0xff] %v1089
    %1104 = vst [vmem:[%s1094] ss:$9 sm:$0xff] %v1090
    %1105 = vst [vmem:[%s1096] ss:$9 sm:$0xff] %v1091
    %1106 = vst [vmem:[%s1098] ss:$9 sm:$0xff] %v1019
    %1107 = vst [vmem:[%s1100] ss:$9 sm:$0xff] %v1092
    %v1108 = vld [vmem:[#allocation1] sm:$0xff]
    %v1111 = vpack.c.bf16 %v1102, %v1102
    %v1112 = vpack.c.bf16 %v1108, %v1108
    %v1114 = vsel %vm772, %v1051, 0
    %v1117 = vsel %vm772, %v1081, 0
    %1119 = vmatpush.bf16.xpose.msra.mxu0 0
    %1120 = vmatpush.bf16.xpose.msra.mxu0 0
    %1121 = vmatpush.bf16.xpose.msra.mxu0 0
    %1122 = vmatpush.bf16.xpose.msra.mxu0 0
    %1123 = vmatpush.bf16.xpose.msra.mxu0 0
    %1124 = vmatpush.bf16.xpose.msra.mxu0 0
    %1125 = vmatpush.bf16.xpose.msra.mxu0 0
    %1126 = vmatpush.bf16.xpose.msra.mxu0 %v1117
    %1127 = vmatmul.bf16.gmra.mxu0 %v1114
    %v1128 = vpop.f32.mrf.mxu0
    %v1129 = vadd.f32 0.0, %v1128
    %v1130 = vpop.f32.mrf.mxu0
    %1131 = vdwg.mxu0
    %v1133 = vsel %vm772, %v1052, 0
    %v1136 = vsel %vm772, %v1082, 0
    %1138 = vmatpush.bf16.xpose.msra.mxu0 0
    %1139 = vmatpush.bf16.xpose.msra.mxu0 0
    %1140 = vmatpush.bf16.xpose.msra.mxu0 0
    %1141 = vmatpush.bf16.xpose.msra.mxu0 0
    %1142 = vmatpush.bf16.xpose.msra.mxu0 0
    %1143 = vmatpush.bf16.xpose.msra.mxu0 0
    %1144 = vmatpush.bf16.xpose.msra.mxu0 0
    %1145 = vmatpush.bf16.xpose.msra.mxu0 %v1136
    %1146 = vmatmul.bf16.gmra.mxu0 %v1133
    %v1147 = vpop.f32.mrf.mxu0
    %v1148 = vadd.f32 0.0, %v1147
    %v1149 = vpop.f32.mrf.mxu0
    %1150 = vdwg.mxu0
    %v1151 = vsel %vm811, %v1129, -inf
    %1152 = vmax.xlane.f32.xlu0 %v1151
    %v1153 = vpop.xlane.xlu0 %1152
    %v1154 = vsel %vm811, %v1148, -inf
    %1155 = vmax.xlane.f32.xlu0 %v1154
    %v1156 = vpop.xlane.xlu0 %1155
    %v1157 = vsub.f32 %v1129, %v1153
    %v1158 = vsub.f32 %v1148, %v1156
    %v1159 = vmul.f32 %v1157, 1.442695
    %v1160 = vpow.pop %v1159
    %v1161 = vmul.f32 %v1158, 1.442695
    %v1162 = vpow.pop %v1161
    %v1163 = vsel %vm811, %v1160, 0.0
    %1164 = vadd.xlane.f32.xlu0 %v1163
    %v1165 = vpop.xlane.xlu0 %1164
    %v1166 = vsel %vm811, %v1162, 0.0
    %1167 = vadd.xlane.f32.xlu0 %v1166
    %v1168 = vpop.xlane.xlu0 %1167
    %v1169 = vrcp.pop %v1165
    %v1170 = vrcp.pop %v1168
    %v1171 = vmul.f32 %v1160, %v1169
    %v1172 = vmul.f32 %v1162, %v1170
    %v1173 = vpack.c.bf16 %v1171, %v1171
    %v1174 = vpack.c.bf16 %v1172, %v1172
    %v1176 = vsel %vm836, %v1173, 0
    %v1179 = vand.u32 %v1111, %v843
    %1181 = vmatpush.bf16.msra.mxu0 0
    %1182 = vmatpush.bf16.msra.mxu0 0
    %1183 = vmatpush.bf16.msra.mxu0 0
    %1184 = vmatpush.bf16.msra.mxu0 0
    %1185 = vmatpush.bf16.msra.mxu0 0
    %1186 = vmatpush.bf16.msra.mxu0 0
    %1187 = vmatpush.bf16.msra.mxu0 0
    %1188 = vmatpush.bf16.msra.mxu0 %v1179
    %1189 = vmatmul.bf16.gmra.mxu0 %v1176
    %v1190 = vpop.f32.mrf.mxu0
    %v1191 = vadd.f32 0.0, %v1190
    %v1192 = vpop.f32.mrf.mxu0
    %1193 = vdwg.mxu0
    %v1195 = vsel %vm836, %v1174, 0
    %v1198 = vand.u32 %v1112, %v843
    %1200 = vmatpush.bf16.msra.mxu0 0
    %1201 = vmatpush.bf16.msra.mxu0 0
    %1202 = vmatpush.bf16.msra.mxu0 0
    %1203 = vmatpush.bf16.msra.mxu0 0
    %1204 = vmatpush.bf16.msra.mxu0 0
    %1205 = vmatpush.bf16.msra.mxu0 0
    %1206 = vmatpush.bf16.msra.mxu0 0
    %1207 = vmatpush.bf16.msra.mxu0 %v1198
    %1208 = vmatmul.bf16.gmra.mxu0 %v1195
    %v1209 = vpop.f32.mrf.mxu0
    %v1210 = vadd.f32 0.0, %v1209
    %v1211 = vpop.f32.mrf.mxu0
    %1212 = vdwg.mxu0
    %v1215 = vrot.slane %v1191, 1
    %v1216 = vrot.slane %v1191, 2
    %v1217 = vrot.slane %v1191, 3
    %v1218 = vrot.slane %v1191, 4
    %v1219 = vrot.slane %v1210, 1
    %v1220 = vrot.slane %v1210, 2
    %v1221 = vrot.slane %v1210, 3
    %v1222 = vrot.slane %v1210, 4
    %1223 = vst [vmem:[#allocation1] ss:$9 sm:$0xff] %v1191
    %s1224 = scalar_lea.vmem [#allocation1], 1
    %1225 = vst [vmem:[%s1224] ss:$9 sm:$0xff] %v1215
    %s1226 = scalar_lea.vmem [#allocation1], 2
    %1227 = vst [vmem:[%s1226] ss:$9 sm:$0xff] %v1216
    %s1228 = scalar_lea.vmem [#allocation1], 3
    %1229 = vst [vmem:[%s1228] ss:$9 sm:$0xff] %v1217
    %s1230 = scalar_lea.vmem [#allocation1], 4
    %1231 = vst [vmem:[%s1230] ss:$9 sm:$0xff] %v1218
    %s1232 = scalar_lea.vmem [#allocation1], 5
    %1233 = vst [vmem:[%s1232] ss:$9 sm:$0xff] %v1210
    %s1234 = scalar_lea.vmem [#allocation1], 6
    %1235 = vst [vmem:[%s1234] ss:$9 sm:$0xff] %v1219
    %s1236 = scalar_lea.vmem [#allocation1], 7
    %1237 = vst [vmem:[%s1236] ss:$9 sm:$0xff] %v1220
    %v1238 = vld [vmem:[#allocation1] sm:$0xff]
    %1239 = vst [vmem:[#allocation1] ss:$9 sm:$0xff] %v1221
    %1240 = vst [vmem:[%s1224] ss:$9 sm:$0xff] %v1222
    %v1241 = vld [vmem:[#allocation1] sm:$0xff]
    %v1244 = vpack.c.bf16 %v1241, %v1238
    %s1245 = scalar_lea.vmem %s11, 8
    %v1246 = vld [vmem:[%s1245] sm:$0xf]
    %v1247 = vld [vmem:[%s1245 + $0x4] sm:$0xf]
    %v1250 = vunpack.c.l.b16 %v1246
    %v1251 = vunpack.c.l.b16 %v1247
    %v1252 = vpack.c.b16 %v1251, %v1250
    %v1255 = vsel %vm772, %v1244, 0
    %1257 = vmatpush.bf16.msra.mxu0 0
    %1258 = vmatpush.bf16.msra.mxu0 0
    %1259 = vmatpush.bf16.msra.mxu0 0
    %1260 = vmatpush.bf16.msra.mxu0 0
    %1261 = vmatpush.bf16.msra.mxu0 0
    %1262 = vmatpush.bf16.msra.mxu0 0
    %1263 = vmatpush.bf16.msra.mxu0 0
    %1264 = vmatpush.bf16.msra.mxu0 %v1252
    %1265 = vmatmul.bf16.gmra.mxu0 %v1255
    %v1266 = vpop.f32.mrf.mxu0
    %v1267 = vadd.f32 0.0, %v1266
    %v1268 = vpop.f32.mrf.mxu0
    %v1269 = vadd.f32 0.0, %v1268
    %1270 = vdwg.mxu0
    %v1273 = vunpack.c.l.b16 %v911
    %v1274 = vunpack.c.l.b16 %v912
    %v1275 = vpack.c.b16 %v1274, %v1273
    %v1278 = vsel %vm772, %v910, 0
    %1280 = vmatpush.bf16.msra.mxu0 0
    %1281 = vmatpush.bf16.msra.mxu0 0
    %1282 = vmatpush.bf16.msra.mxu0 0
    %1283 = vmatpush.bf16.msra.mxu0 0
    %1284 = vmatpush.bf16.msra.mxu0 0
    %1285 = vmatpush.bf16.msra.mxu0 0
    %1286 = vmatpush.bf16.msra.mxu0 0
    %1287 = vmatpush.bf16.msra.mxu0 %v1275
    %1288 = vmatmul.bf16.gmra.mxu0 %v1278
    %v1289 = vpop.f32.mrf.mxu0
    %v1290 = vadd.f32 %v1267, %v1289
    %v1291 = vpop.f32.mrf.mxu0
    %v1292 = vadd.f32 %v1269, %v1291
    %1293 = vdwg.mxu0
    %v1294 = vld [vmem:[%s12] sm:$0x1]
    %v1296 = vperm.slane %v1294, 0
    %v1298 = vadd.f32 %v1290, %v1296
    %v1299 = vadd.f32 %v1292, %v1296
    %v1300 = vld [vmem:[%s13] sm:$0x1]
    %v1302 = vperm.slane %v1300, 0
    %v1304 = vmul.f32 %v1302, %v1298
    %v1305 = vmul.f32 %v1302, %v1299
    %v1306 = vadd.f32 %v505, %v1304
    %v1307 = vadd.f32 %v507, %v1305
    %v1308 = vld [vmem:[%s14] sm:$0x1]
    %v1309 = vld [vmem:[%s15] sm:$0x1]
    %v1310 = vsel %vm511, %v1306, 0.0
    %1311 = vadd.xlane.f32.xlu0 %v1310
    %v1312 = vpop.xlane.xlu0 %1311
    %v1313 = vsel %vm515, %v1307, 0.0
    %1314 = vadd.xlane.f32.xlu0 %v1313
    %v1315 = vpop.xlane.xlu0 %1314
    %v1316 = vmul.f32 %v1312, %v525
    %v1317 = vmul.f32 %v1315, %v525
    %v1318 = vsub.f32 %v1306, %v1316
    %v1319 = vsub.f32 %v1307, %v1317
    %v1320 = vmul.f32 %v1318, %v1318
    %v1321 = vmul.f32 %v1319, %v1319
    %v1322 = vsel %vm511, %v1320, 0.0
    %1323 = vadd.xlane.f32.xlu0 %v1322
    %v1324 = vpop.xlane.xlu0 %1323
    %v1325 = vsel %vm515, %v1321, 0.0
    %1326 = vadd.xlane.f32.xlu0 %v1325
    %v1327 = vpop.xlane.xlu0 %1326
    %v1328 = vmul.f32 %v1324, %v525
    %v1329 = vmul.f32 %v1327, %v525
    %v1330 = vadd.f32 %v1328, 1e-06
    %v1331 = vadd.f32 %v1329, 1e-06
    %v1332 = vrsqrt.pop %v1330
    %v1333 = vmul.f32 %v1332, %v1330
    %v1334 = vmul.f32 %v1333, %v1332
    %v1335 = vmul.f32 0.5, %v1334
    %v1336 = vsub.f32 1.5, %v1335
    %v1337 = vmul.f32 %v1332, %v1336
    %vm1338 = vweird.f32 %v1330
    %vm1339 = vweird.f32 %v1332
    %vm1340 = vmor %vm1338, %vm1339
    %v1341 = vsel %vm1340, %v1332, %v1337
    %v1342 = vrsqrt.pop %v1331
    %v1343 = vmul.f32 %v1342, %v1331
    %v1344 = vmul.f32 %v1343, %v1342
    %v1345 = vmul.f32 0.5, %v1344
    %v1346 = vsub.f32 1.5, %v1345
    %v1347 = vmul.f32 %v1342, %v1346
    %vm1348 = vweird.f32 %v1331
    %vm1349 = vweird.f32 %v1342
    %vm1350 = vmor %vm1348, %vm1349
    %v1351 = vsel %vm1350, %v1342, %v1347
    %v1352 = vmul.f32 %v1318, %v1341
    %v1353 = vmul.f32 %v1319, %v1351
    %v1355 = vperm.slane %v1308, 0
    %v1357 = vmul.f32 %v1352, %v1355
    %v1358 = vmul.f32 %v1353, %v1355
    %v1360 = vperm.slane %v1309, 0
    %v1362 = vadd.f32 %v1357, %v1360
    %v1363 = vadd.f32 %v1358, %v1360
    %v1364 = vpack.c.bf16 %v1363, %v1362
    %v1365 = vld [vmem:[%s16] sm:$0xf]
    %v1366 = vld [vmem:[%s16 + $0x4] sm:$0xf]
    %v1367 = vld [vmem:[%s16 + $0x8] sm:$0xf]
    %v1368 = vld [vmem:[%s16 + $0xc] sm:$0xf]
    %v1369 = vld [vmem:[%s17] sm:$0x1]
    %v1371 = vperm.slane %v1369, 0
    %v1377 = vunpack.c.l.b16 %v1365
    %v1378 = vunpack.c.l.b16 %v1366
    %v1379 = vunpack.c.l.b16 %v1367
    %v1380 = vunpack.c.l.b16 %v1368
    %v1381 = vpack.c.b16 %v1378, %v1377
    %v1382 = vpack.c.b16 %v1380, %v1379
    %v1386 = vsel %vm511, %v1364, 0
    %1388 = vmatpush.bf16.msra.mxu0 0
    %1389 = vmatpush.bf16.msra.mxu0 0
    %1390 = vmatpush.bf16.msra.mxu0 0
    %1391 = vmatpush.bf16.msra.mxu0 0
    %1392 = vmatpush.bf16.msra.mxu0 0
    %1393 = vmatpush.bf16.msra.mxu0 0
    %1394 = vmatpush.bf16.msra.mxu0 %v1382
    %1395 = vmatpush.bf16.msra.mxu0 %v1381
    %1396 = vmatmul.bf16.gmra.mxu0 %v1386
    %v1397 = vpop.f32.mrf.mxu0
    %v1398 = vadd.f32 %v1371, %v1397
    %v1399 = vpop.f32.mrf.mxu0
    %v1400 = vadd.f32 %v1371, %v1399
    %1401 = vdwg.mxu0
    %v1402 = vmul.f32 %v1398, %v1398
    %v1403 = vmul.f32 %v1400, %v1400
    %v1404 = vmul.f32 %v1398, %v1402
    %v1405 = vmul.f32 %v1400, %v1403
    %v1406 = vmul.f32 %v1404, 0.044715
    %v1407 = vmul.f32 %v1405, 0.044715
    %v1408 = vadd.f32 %v1398, %v1406
    %v1409 = vadd.f32 %v1400, %v1407
    %v1410 = vmul.f32 %v1408, 0.7978846
    %v1411 = vmul.f32 %v1409, 0.7978846
    %v1412 = vtanh.pop %v1410
    %v1413 = vtanh.pop %v1411
    %v1414 = vadd.f32 %v1412, 1.0
    %v1415 = vadd.f32 %v1413, 1.0
    %v1416 = vmul.f32 %v1414, 0.5
    %v1417 = vmul.f32 %v1415, 0.5
    %v1418 = vmul.f32 %v1398, %v1416
    %v1419 = vmul.f32 %v1400, %v1417
    %v1420 = vpack.c.bf16 %v1419, %v1418
    %v1421 = vld [vmem:[%s18] sm:$0xf]
    %v1422 = vld [vmem:[%s18 + $0x4] sm:$0xf]
    %v1423 = vld [vmem:[%s18 + $0x8] sm:$0xf]
    %v1424 = vld [vmem:[%s18 + $0xc] sm:$0xf]
    %v1425 = vld [vmem:[%s18 + $0x10] sm:$0xf]
    %v1426 = vld [vmem:[%s18 + $0x14] sm:$0xf]
    %v1427 = vld [vmem:[%s18 + $0x18] sm:$0xf]
    %v1428 = vld [vmem:[%s18 + $0x1c] sm:$0xf]
    %v1429 = vld [vmem:[%s18 + $0x20] sm:$0xf]
    %v1430 = vld [vmem:[%s18 + $0x24] sm:$0xf]
    %v1431 = vld [vmem:[%s18 + $0x28] sm:$0xf]
    %v1432 = vld [vmem:[%s18 + $0x2c] sm:$0xf]
    %v1433 = vld [vmem:[%s18 + $0x30] sm:$0xf]
    %v1434 = vld [vmem:[%s18 + $0x34] sm:$0xf]
    %v1435 = vld [vmem:[%s18 + $0x38] sm:$0xf]
    %v1436 = vld [vmem:[%s18 + $0x3c] sm:$0xf]
    %v1437 = vld [vmem:[%s19] sm:$0x1]
    %v1439 = vperm.slane %v1437, 0
    %v1457 = vunpack.c.l.b16 %v1421
    %v1458 = vunpack.c.l.b16 %v1422
    %v1459 = vunpack.c.l.b16 %v1423
    %v1460 = vunpack.c.l.b16 %v1424
    %v1461 = vunpack.c.l.b16 %v1425
    %v1462 = vunpack.c.l.b16 %v1426
    %v1463 = vunpack.c.l.b16 %v1427
    %v1464 = vunpack.c.l.b16 %v1428
    %v1465 = vunpack.c.l.b16 %v1429
    %v1466 = vunpack.c.l.b16 %v1430
    %v1467 = vunpack.c.l.b16 %v1431
    %v1468 = vunpack.c.l.b16 %v1432
    %v1469 = vunpack.c.l.b16 %v1433
    %v1470 = vunpack.c.l.b16 %v1434
    %v1471 = vunpack.c.l.b16 %v1435
    %v1472 = vunpack.c.l.b16 %v1436
    %v1473 = vpack.c.b16 %v1458, %v1457
    %v1474 = vpack.c.b16 %v1460, %v1459
    %v1475 = vpack.c.b16 %v1462, %v1461
    %v1476 = vpack.c.b16 %v1464, %v1463
    %v1477 = vpack.c.b16 %v1466, %v1465
    %v1478 = vpack.c.b16 %v1468, %v1467
    %v1479 = vpack.c.b16 %v1470, %v1469
    %v1480 = vpack.c.b16 %v1472, %v1471
    %1489 = vmatpush.bf16.msra.mxu0 %v1480
    %1490 = vmatpush.bf16.msra.mxu0 %v1479
    %1491 = vmatpush.bf16.msra.mxu0 %v1478
    %1492 = vmatpush.bf16.msra.mxu0 %v1477
    %1493 = vmatpush.bf16.msra.mxu0 %v1476
    %1494 = vmatpush.bf16.msra.mxu0 %v1475
    %1495 = vmatpush.bf16.msra.mxu0 %v1474
    %1496 = vmatpush.bf16.msra.mxu0 %v1473
    %1497 = vmatmul.bf16.gmra.mxu0 %v1420
    %v1498 = vpop.f32.mrf.mxu0
    %v1499 = vadd.f32 %v1439, %v1498
    %v1500 = vpop.f32.mrf.mxu0
    %v1501 = vadd.f32 %v1439, %v1500
    %1502 = vdwg.mxu0
    %v1503 = vld [vmem:[%s20] sm:$0x1]
    %v1505 = vperm.slane %v1503, 0
    %v1507 = vmul.f32 %v1505, %v1499
    %v1508 = vmul.f32 %v1505, %v1501
    %v1509 = vadd.f32 %v1306, %v1507
    %v1510 = vadd.f32 %v1307, %v1508
    %s1511 = scalar_lea.vmem %s3, 1
    %v1512 = vld [vmem:[%s1511] sm:$0x1]
    %s1513 = scalar_lea.vmem %s4, 1
    %v1514 = vld [vmem:[%s1513] sm:$0x1]
    %v1515 = vsel %vm511, %v1509, 0.0
    %1516 = vadd.xlane.f32.xlu0 %v1515
    %v1517 = vpop.xlane.xlu0 %1516
    %v1518 = vsel %vm515, %v1510, 0.0
    %1519 = vadd.xlane.f32.xlu0 %v1518
    %v1520 = vpop.xlane.xlu0 %1519
    %v1521 = vmul.f32 %v1517, %v525
    %v1522 = vmul.f32 %v1520, %v525
    %v1523 = vsub.f32 %v1509, %v1521
    %v1524 = vsub.f32 %v1510, %v1522
    %v1525 = vmul.f32 %v1523, %v1523
    %v1526 = vmul.f32 %v1524, %v1524
    %v1527 = vsel %vm511, %v1525, 0.0
    %1528 = vadd.xlane.f32.xlu0 %v1527
    %v1529 = vpop.xlane.xlu0 %1528
    %v1530 = vsel %vm515, %v1526, 0.0
    %1531 = vadd.xlane.f32.xlu0 %v1530
    %v1532 = vpop.xlane.xlu0 %1531
    %v1533 = vmul.f32 %v1529, %v525
    %v1534 = vmul.f32 %v1532, %v525
    %v1535 = vadd.f32 %v1533, 1e-06
    %v1536 = vadd.f32 %v1534, 1e-06
    %v1537 = vrsqrt.pop %v1535
    %v1538 = vmul.f32 %v1537, %v1535
    %v1539 = vmul.f32 %v1538, %v1537
    %v1540 = vmul.f32 0.5, %v1539
    %v1541 = vsub.f32 1.5, %v1540
    %v1542 = vmul.f32 %v1537, %v1541
    %vm1543 = vweird.f32 %v1535
    %vm1544 = vweird.f32 %v1537
    %vm1545 = vmor %vm1543, %vm1544
    %v1546 = vsel %vm1545, %v1537, %v1542
    %v1547 = vrsqrt.pop %v1536
    %v1548 = vmul.f32 %v1547, %v1536
    %v1549 = vmul.f32 %v1548, %v1547
    %v1550 = vmul.f32 0.5, %v1549
    %v1551 = vsub.f32 1.5, %v1550
    %v1552 = vmul.f32 %v1547, %v1551
    %vm1553 = vweird.f32 %v1536
    %vm1554 = vweird.f32 %v1547
    %vm1555 = vmor %vm1553, %vm1554
    %v1556 = vsel %vm1555, %v1547, %v1552
    %v1557 = vmul.f32 %v1523, %v1546
    %v1558 = vmul.f32 %v1524, %v1556
    %v1560 = vperm.slane %v1512, 0
    %v1562 = vmul.f32 %v1557, %v1560
    %v1563 = vmul.f32 %v1558, %v1560
    %v1565 = vperm.slane %v1514, 0
    %v1567 = vadd.f32 %v1562, %v1565
    %v1568 = vadd.f32 %v1563, %v1565
    %v1569 = vpack.c.bf16 %v1568, %v1567
    %s1570 = scalar_lea.vmem %s5, 32
    %v1571 = vld [vmem:[%s1570] sm:$0xf]
    %v1572 = vld [vmem:[%s1570 + $0x4] sm:$0xf]
    %v1573 = vld [vmem:[%s1570 + $0x8] sm:$0xf]
    %v1574 = vld [vmem:[%s1570 + $0xc] sm:$0xf]
    %s1575 = scalar_lea.vmem %s6, 2
    %v1576 = vld [vmem:[%s1575] sm:$0x1]
    %v1578 = vperm.slane %v1576, 0
    %v1584 = vunpack.c.l.b16 %v1571
    %v1585 = vunpack.c.l.b16 %v1572
    %v1586 = vunpack.c.l.b16 %v1573
    %v1587 = vunpack.c.l.b16 %v1574
    %v1588 = vpack.c.b16 %v1585, %v1584
    %v1589 = vpack.c.b16 %v1587, %v1586
    %v1593 = vsel %vm511, %v1569, 0
    %1595 = vmatpush.bf16.msra.mxu0 0
    %1596 = vmatpush.bf16.msra.mxu0 0
    %1597 = vmatpush.bf16.msra.mxu0 0
    %1598 = vmatpush.bf16.msra.mxu0 0
    %1599 = vmatpush.bf16.msra.mxu0 0
    %1600 = vmatpush.bf16.msra.mxu0 0
    %1601 = vmatpush.bf16.msra.mxu0 %v1589
    %1602 = vmatpush.bf16.msra.mxu0 %v1588
    %1603 = vmatmul.bf16.gmra.mxu0 %v1593
    %v1604 = vpop.f32.mrf.mxu0
    %v1605 = vadd.f32 %v1578, %v1604
    %v1606 = vpop.f32.mrf.mxu0
    %v1607 = vadd.f32 %v1578, %v1606
    %1608 = vdwg.mxu0
    %s1609 = scalar_lea.vmem %s7, 32
    %v1610 = vld [vmem:[%s1609] sm:$0xf]
    %v1611 = vld [vmem:[%s1609 + $0x4] sm:$0xf]
    %v1612 = vld [vmem:[%s1609 + $0x8] sm:$0xf]
    %v1613 = vld [vmem:[%s1609 + $0xc] sm:$0xf]
    %s1614 = scalar_lea.vmem %s8, 2
    %v1615 = vld [vmem:[%s1614] sm:$0x1]
    %v1617 = vperm.slane %v1615, 0
    %v1623 = vunpack.c.l.b16 %v1610
    %v1624 = vunpack.c.l.b16 %v1611
    %v1625 = vunpack.c.l.b16 %v1612
    %v1626 = vunpack.c.l.b16 %v1613
    %v1627 = vpack.c.b16 %v1624, %v1623
    %v1628 = vpack.c.b16 %v1626, %v1625
    %1631 = vmatpush.bf16.msra.mxu0 0
    %1632 = vmatpush.bf16.msra.mxu0 0
    %1633 = vmatpush.bf16.msra.mxu0 0
    %1634 = vmatpush.bf16.msra.mxu0 0
    %1635 = vmatpush.bf16.msra.mxu0 0
    %1636 = vmatpush.bf16.msra.mxu0 0
    %1637 = vmatpush.bf16.msra.mxu0 %v1628
    %1638 = vmatpush.bf16.msra.mxu0 %v1627
    %1639 = vmatmul.bf16.gmra.mxu0 %v1593
    %v1640 = vpop.f32.mrf.mxu0
    %v1641 = vadd.f32 %v1617, %v1640
    %v1642 = vpop.f32.mrf.mxu0
    %v1643 = vadd.f32 %v1617, %v1642
    %1644 = vdwg.mxu0
    %s1645 = scalar_lea.vmem %s9, 32
    %v1646 = vld [vmem:[%s1645] sm:$0xf]
    %v1647 = vld [vmem:[%s1645 + $0x4] sm:$0xf]
    %v1648 = vld [vmem:[%s1645 + $0x8] sm:$0xf]
    %v1649 = vld [vmem:[%s1645 + $0xc] sm:$0xf]
    %s1650 = scalar_lea.vmem %s10, 2
    %v1651 = vld [vmem:[%s1650] sm:$0x1]
    %v1653 = vperm.slane %v1651, 0
    %v1659 = vunpack.c.l.b16 %v1646
    %v1660 = vunpack.c.l.b16 %v1647
    %v1661 = vunpack.c.l.b16 %v1648
    %v1662 = vunpack.c.l.b16 %v1649
    %v1663 = vpack.c.b16 %v1660, %v1659
    %v1664 = vpack.c.b16 %v1662, %v1661
    %1667 = vmatpush.bf16.msra.mxu0 0
    %1668 = vmatpush.bf16.msra.mxu0 0
    %1669 = vmatpush.bf16.msra.mxu0 0
    %1670 = vmatpush.bf16.msra.mxu0 0
    %1671 = vmatpush.bf16.msra.mxu0 0
    %1672 = vmatpush.bf16.msra.mxu0 0
    %1673 = vmatpush.bf16.msra.mxu0 %v1664
    %1674 = vmatpush.bf16.msra.mxu0 %v1663
    %1675 = vmatmul.bf16.gmra.mxu0 %v1593
    %v1676 = vpop.f32.mrf.mxu0
    %v1677 = vadd.f32 %v1653, %v1676
    %v1678 = vpop.f32.mrf.mxu0
    %v1679 = vadd.f32 %v1653, %v1678
    %1680 = vdwg.mxu0
    %v1681 = vmul.f32 %v1605, 0.25
    %v1682 = vmul.f32 %v1607, 0.25
    %v1685 = vrot.slane %v1681, 1
    %v1686 = vrot.slane %v1681, 2
    %v1687 = vrot.slane %v1681, 3
    %v1688 = vrot.slane %v1681, 4
    %v1689 = vrot.slane %v1681, 5
    %v1690 = vrot.slane %v1681, 6
    %v1691 = vrot.slane %v1681, 7
    %v1692 = vrot.slane %v1682, 1
    %1693 = vst [vmem:[#allocation1] ss:$9 sm:$0xff] %v1681
    %s1694 = scalar_lea.vmem [#allocation1], 1
    %1695 = vst [vmem:[%s1694] ss:$9 sm:$0xff] %v1685
    %s1696 = scalar_lea.vmem [#allocation1], 2
    %1697 = vst [vmem:[%s1696] ss:$9 sm:$0xff] %v1686
    %s1698 = scalar_lea.vmem [#allocation1], 3
    %1699 = vst [vmem:[%s1698] ss:$9 sm:$0xff] %v1687
    %s1700 = scalar_lea.vmem [#allocation1], 4
    %1701 = vst [vmem:[%s1700] ss:$9 sm:$0xff] %v1688
    %v1702 = vld [vmem:[#allocation1] sm:$0xff]
    %1703 = vst [vmem:[#allocation1] ss:$9 sm:$0xff] %v1689
    %1704 = vst [vmem:[%s1694] ss:$9 sm:$0xff] %v1690
    %1705 = vst [vmem:[%s1696] ss:$9 sm:$0xff] %v1691
    %1706 = vst [vmem:[%s1698] ss:$9 sm:$0xff] %v1682
    %1707 = vst [vmem:[%s1700] ss:$9 sm:$0xff] %v1692
    %v1708 = vld [vmem:[#allocation1] sm:$0xff]
    %v1711 = vpack.c.bf16 %v1702, %v1702
    %v1712 = vpack.c.bf16 %v1708, %v1708
    %v1715 = vrot.slane %v1641, 1
    %v1716 = vrot.slane %v1641, 2
    %v1717 = vrot.slane %v1641, 3
    %v1718 = vrot.slane %v1641, 4
    %v1719 = vrot.slane %v1641, 5
    %v1720 = vrot.slane %v1641, 6
    %v1721 = vrot.slane %v1641, 7
    %v1722 = vrot.slane %v1643, 1
    %1723 = vst [vmem:[#allocation1] ss:$9 sm:$0xff] %v1641
    %s1724 = scalar_lea.vmem [#allocation1], 1
    %1725 = vst [vmem:[%s1724] ss:$9 sm:$0xff] %v1715
    %s1726 = scalar_lea.vmem [#allocation1], 2
    %1727 = vst [vmem:[%s1726] ss:$9 sm:$0xff] %v1716
    %s1728 = scalar_lea.vmem [#allocation1], 3
    %1729 = vst [vmem:[%s1728] ss:$9 sm:$0xff] %v1717
    %s1730 = scalar_lea.vmem [#allocation1], 4
    %1731 = vst [vmem:[%s1730] ss:$9 sm:$0xff] %v1718
    %v1732 = vld [vmem:[#allocation1] sm:$0xff]
    %1733 = vst [vmem:[#allocation1] ss:$9 sm:$0xff] %v1719
    %1734 = vst [vmem:[%s1724] ss:$9 sm:$0xff] %v1720
    %1735 = vst [vmem:[%s1726] ss:$9 sm:$0xff] %v1721
    %1736 = vst [vmem:[%s1728] ss:$9 sm:$0xff] %v1643
    %1737 = vst [vmem:[%s1730] ss:$9 sm:$0xff] %v1722
    %v1738 = vld [vmem:[#allocation1] sm:$0xff]
    %v1741 = vpack.c.bf16 %v1732, %v1732
    %v1742 = vpack.c.bf16 %v1738, %v1738
    %v1745 = vrot.slane %v1677, 1
    %v1746 = vrot.slane %v1677, 2
    %v1747 = vrot.slane %v1677, 3
    %v1748 = vrot.slane %v1677, 4
    %v1749 = vrot.slane %v1677, 5
    %v1750 = vrot.slane %v1677, 6
    %v1751 = vrot.slane %v1677, 7
    %v1752 = vrot.slane %v1679, 1
    %1753 = vst [vmem:[#allocation1] ss:$9 sm:$0xff] %v1677
    %s1754 = scalar_lea.vmem [#allocation1], 1
    %1755 = vst [vmem:[%s1754] ss:$9 sm:$0xff] %v1745
    %s1756 = scalar_lea.vmem [#allocation1], 2
    %1757 = vst [vmem:[%s1756] ss:$9 sm:$0xff] %v1746
    %s1758 = scalar_lea.vmem [#allocation1], 3
    %1759 = vst [vmem:[%s1758] ss:$9 sm:$0xff] %v1747
    %s1760 = scalar_lea.vmem [#allocation1], 4
    %1761 = vst [vmem:[%s1760] ss:$9 sm:$0xff] %v1748
    %v1762 = vld [vmem:[#allocation1] sm:$0xff]
    %1763 = vst [vmem:[#allocation1] ss:$9 sm:$0xff] %v1749
    %1764 = vst [vmem:[%s1754] ss:$9 sm:$0xff] %v1750
    %1765 = vst [vmem:[%s1756] ss:$9 sm:$0xff] %v1751
    %1766 = vst [vmem:[%s1758] ss:$9 sm:$0xff] %v1679
    %1767 = vst [vmem:[%s1760] ss:$9 sm:$0xff] %v1752
    %v1768 = vld [vmem:[#allocation1] sm:$0xff]
    %v1771 = vpack.c.bf16 %v1762, %v1762
    %v1772 = vpack.c.bf16 %v1768, %v1768
    %v1774 = vsel %vm772, %v1711, 0
    %v1777 = vsel %vm772, %v1741, 0
    %1779 = vmatpush.bf16.xpose.msra.mxu0 0
    %1780 = vmatpush.bf16.xpose.msra.mxu0 0
    %1781 = vmatpush.bf16.xpose.msra.mxu0 0
    %1782 = vmatpush.bf16.xpose.msra.mxu0 0
    %1783 = vmatpush.bf16.xpose.msra.mxu0 0
    %1784 = vmatpush.bf16.xpose.msra.mxu0 0
    %1785 = vmatpush.bf16.xpose.msra.mxu0 0
    %1786 = vmatpush.bf16.xpose.msra.mxu0 %v1777
    %1787 = vmatmul.bf16.gmra.mxu0 %v1774
    %v1788 = vpop.f32.mrf.mxu0
    %v1789 = vadd.f32 0.0, %v1788
    %v1790 = vpop.f32.mrf.mxu0
    %1791 = vdwg.mxu0
    %v1793 = vsel %vm772, %v1712, 0
    %v1796 = vsel %vm772, %v1742, 0
    %1798 = vmatpush.bf16.xpose.msra.mxu0 0
    %1799 = vmatpush.bf16.xpose.msra.mxu0 0
    %1800 = vmatpush.bf16.xpose.msra.mxu0 0
    %1801 = vmatpush.bf16.xpose.msra.mxu0 0
    %1802 = vmatpush.bf16.xpose.msra.mxu0 0
    %1803 = vmatpush.bf16.xpose.msra.mxu0 0
    %1804 = vmatpush.bf16.xpose.msra.mxu0 0
    %1805 = vmatpush.bf16.xpose.msra.mxu0 %v1796
    %1806 = vmatmul.bf16.gmra.mxu0 %v1793
    %v1807 = vpop.f32.mrf.mxu0
    %v1808 = vadd.f32 0.0, %v1807
    %v1809 = vpop.f32.mrf.mxu0
    %1810 = vdwg.mxu0
    %v1811 = vsel %vm811, %v1789, -inf
    %1812 = vmax.xlane.f32.xlu0 %v1811
    %v1813 = vpop.xlane.xlu0 %1812
    %v1814 = vsel %vm811, %v1808, -inf
    %1815 = vmax.xlane.f32.xlu0 %v1814
    %v1816 = vpop.xlane.xlu0 %1815
    %v1817 = vsub.f32 %v1789, %v1813
    %v1818 = vsub.f32 %v1808, %v1816
    %v1819 = vmul.f32 %v1817, 1.442695
    %v1820 = vpow.pop %v1819
    %v1821 = vmul.f32 %v1818, 1.442695
    %v1822 = vpow.pop %v1821
    %v1823 = vsel %vm811, %v1820, 0.0
    %1824 = vadd.xlane.f32.xlu0 %v1823
    %v1825 = vpop.xlane.xlu0 %1824
    %v1826 = vsel %vm811, %v1822, 0.0
    %1827 = vadd.xlane.f32.xlu0 %v1826
    %v1828 = vpop.xlane.xlu0 %1827
    %v1829 = vrcp.pop %v1825
    %v1830 = vrcp.pop %v1828
    %v1831 = vmul.f32 %v1820, %v1829
    %v1832 = vmul.f32 %v1822, %v1830
    %v1833 = vpack.c.bf16 %v1831, %v1831
    %v1834 = vpack.c.bf16 %v1832, %v1832
    %v1836 = vsel %vm836, %v1833, 0
    %v1839 = vand.u32 %v1771, %v843
    %1841 = vmatpush.bf16.msra.mxu0 0
    %1842 = vmatpush.bf16.msra.mxu0 0
    %1843 = vmatpush.bf16.msra.mxu0 0
    %1844 = vmatpush.bf16.msra.mxu0 0
    %1845 = vmatpush.bf16.msra.mxu0 0
    %1846 = vmatpush.bf16.msra.mxu0 0
    %1847 = vmatpush.bf16.msra.mxu0 0
    %1848 = vmatpush.bf16.msra.mxu0 %v1839
    %1849 = vmatmul.bf16.gmra.mxu0 %v1836
    %v1850 = vpop.f32.mrf.mxu0
    %v1851 = vadd.f32 0.0, %v1850
    %v1852 = vpop.f32.mrf.mxu0
    %1853 = vdwg.mxu0
    %v1855 = vsel %vm836, %v1834, 0
    %v1858 = vand.u32 %v1772, %v843
    %1860 = vmatpush.bf16.msra.mxu0 0
    %1861 = vmatpush.bf16.msra.mxu0 0
    %1862 = vmatpush.bf16.msra.mxu0 0
    %1863 = vmatpush.bf16.msra.mxu0 0
    %1864 = vmatpush.bf16.msra.mxu0 0
    %1865 = vmatpush.bf16.msra.mxu0 0
    %1866 = vmatpush.bf16.msra.mxu0 0
    %1867 = vmatpush.bf16.msra.mxu0 %v1858
    %1868 = vmatmul.bf16.gmra.mxu0 %v1855
    %v1869 = vpop.f32.mrf.mxu0
    %v1870 = vadd.f32 0.0, %v1869
    %v1871 = vpop.f32.mrf.mxu0
    %1872 = vdwg.mxu0
    %v1875 = vrot.slane %v1851, 1
    %v1876 = vrot.slane %v1851, 2
    %v1877 = vrot.slane %v1851, 3
    %v1878 = vrot.slane %v1851, 4
    %v1879 = vrot.slane %v1870, 1
    %v1880 = vrot.slane %v1870, 2
    %v1881 = vrot.slane %v1870, 3
    %v1882 = vrot.slane %v1870, 4
    %1883 = vst [vmem:[#allocation1] ss:$9 sm:$0xff] %v1851
    %s1884 = scalar_lea.vmem [#allocation1], 1
    %1885 = vst [vmem:[%s1884] ss:$9 sm:$0xff] %v1875
    %s1886 = scalar_lea.vmem [#allocation1], 2
    %1887 = vst [vmem:[%s1886] ss:$9 sm:$0xff] %v1876
    %s1888 = scalar_lea.vmem [#allocation1], 3
    %1889 = vst [vmem:[%s1888] ss:$9 sm:$0xff] %v1877
    %s1890 = scalar_lea.vmem [#allocation1], 4
    %1891 = vst [vmem:[%s1890] ss:$9 sm:$0xff] %v1878
    %s1892 = scalar_lea.vmem [#allocation1], 5
    %1893 = vst [vmem:[%s1892] ss:$9 sm:$0xff] %v1870
    %s1894 = scalar_lea.vmem [#allocation1], 6
    %1895 = vst [vmem:[%s1894] ss:$9 sm:$0xff] %v1879
    %s1896 = scalar_lea.vmem [#allocation1], 7
    %1897 = vst [vmem:[%s1896] ss:$9 sm:$0xff] %v1880
    %v1898 = vld [vmem:[#allocation1] sm:$0xff]
    %1899 = vst [vmem:[#allocation1] ss:$9 sm:$0xff] %v1881
    %1900 = vst [vmem:[%s1884] ss:$9 sm:$0xff] %v1882
    %v1901 = vld [vmem:[#allocation1] sm:$0xff]
    %v1904 = vpack.c.bf16 %v1901, %v1898
    %s1905 = scalar_lea.vmem %s11, 16
    %v1906 = vld [vmem:[%s1905] sm:$0xf]
    %v1907 = vld [vmem:[%s1905 + $0x4] sm:$0xf]
    %s1908 = scalar_lea.vmem %s5, 48
    %v1909 = vld [vmem:[%s1908] sm:$0xf]
    %v1910 = vld [vmem:[%s1908 + $0x4] sm:$0xf]
    %v1911 = vld [vmem:[%s1908 + $0x8] sm:$0xf]
    %v1912 = vld [vmem:[%s1908 + $0xc] sm:$0xf]
    %s1913 = scalar_lea.vmem %s6, 3
    %v1914 = vld [vmem:[%s1913] sm:$0x1]
    %v1916 = vperm.slane %v1914, 0
    %v1922 = vunpack.c.l.b16 %v1909
    %v1923 = vunpack.c.l.b16 %v1910
    %v1924 = vunpack.c.l.b16 %v1911
    %v1925 = vunpack.c.l.b16 %v1912
    %v1926 = vpack.c.b16 %v1923, %v1922
    %v1927 = vpack.c.b16 %v1925, %v1924
    %1930 = vmatpush.bf16.msra.mxu0 0
    %1931 = vmatpush.bf16.msra.mxu0 0
    %1932 = vmatpush.bf16.msra.mxu0 0
    %1933 = vmatpush.bf16.msra.mxu0 0
    %1934 = vmatpush.bf16.msra.mxu0 0
    %1935 = vmatpush.bf16.msra.mxu0 0
    %1936 = vmatpush.bf16.msra.mxu0 %v1927
    %1937 = vmatpush.bf16.msra.mxu0 %v1926
    %1938 = vmatmul.bf16.gmra.mxu0 %v1593
    %v1939 = vpop.f32.mrf.mxu0
    %v1940 = vadd.f32 %v1916, %v1939
    %v1941 = vpop.f32.mrf.mxu0
    %v1942 = vadd.f32 %v1916, %v1941
    %1943 = vdwg.mxu0
    %s1944 = scalar_lea.vmem %s7, 48
    %v1945 = vld [vmem:[%s1944] sm:$0xf]
    %v1946 = vld [vmem:[%s1944 + $0x4] sm:$0xf]
    %v1947 = vld [vmem:[%s1944 + $0x8] sm:$0xf]
    %v1948 = vld [vmem:[%s1944 + $0xc] sm:$0xf]
    %s1949 = scalar_lea.vmem %s8, 3
    %v1950 = vld [vmem:[%s1949] sm:$0x1]
    %v1952 = vperm.slane %v1950, 0
    %v1958 = vunpack.c.l.b16 %v1945
    %v1959 = vunpack.c.l.b16 %v1946
    %v1960 = vunpack.c.l.b16 %v1947
    %v1961 = vunpack.c.l.b16 %v1948
    %v1962 = vpack.c.b16 %v1959, %v1958
    %v1963 = vpack.c.b16 %v1961, %v1960
    %1966 = vmatpush.bf16.msra.mxu0 0
    %1967 = vmatpush.bf16.msra.mxu0 0
    %1968 = vmatpush.bf16.msra.mxu0 0
    %1969 = vmatpush.bf16.msra.mxu0 0
    %1970 = vmatpush.bf16.msra.mxu0 0
    %1971 = vmatpush.bf16.msra.mxu0 0
    %1972 = vmatpush.bf16.msra.mxu0 %v1963
    %1973 = vmatpush.bf16.msra.mxu0 %v1962
    %1974 = vmatmul.bf16.gmra.mxu0 %v1593
    %v1975 = vpop.f32.mrf.mxu0
    %v1976 = vadd.f32 %v1952, %v1975
    %v1977 = vpop.f32.mrf.mxu0
    %v1978 = vadd.f32 %v1952, %v1977
    %1979 = vdwg.mxu0
    %s1980 = scalar_lea.vmem %s9, 48
    %v1981 = vld [vmem:[%s1980] sm:$0xf]
    %v1982 = vld [vmem:[%s1980 + $0x4] sm:$0xf]
    %v1983 = vld [vmem:[%s1980 + $0x8] sm:$0xf]
    %v1984 = vld [vmem:[%s1980 + $0xc] sm:$0xf]
    %s1985 = scalar_lea.vmem %s10, 3
    %v1986 = vld [vmem:[%s1985] sm:$0x1]
    %v1988 = vperm.slane %v1986, 0
    %v1994 = vunpack.c.l.b16 %v1981
    %v1995 = vunpack.c.l.b16 %v1982
    %v1996 = vunpack.c.l.b16 %v1983
    %v1997 = vunpack.c.l.b16 %v1984
    %v1998 = vpack.c.b16 %v1995, %v1994
    %v1999 = vpack.c.b16 %v1997, %v1996
    %2002 = vmatpush.bf16.msra.mxu0 0
    %2003 = vmatpush.bf16.msra.mxu0 0
    %2004 = vmatpush.bf16.msra.mxu0 0
    %2005 = vmatpush.bf16.msra.mxu0 0
    %2006 = vmatpush.bf16.msra.mxu0 0
    %2007 = vmatpush.bf16.msra.mxu0 0
    %2008 = vmatpush.bf16.msra.mxu0 %v1999
    %2009 = vmatpush.bf16.msra.mxu0 %v1998
    %2010 = vmatmul.bf16.gmra.mxu0 %v1593
    %v2011 = vpop.f32.mrf.mxu0
    %v2012 = vadd.f32 %v1988, %v2011
    %v2013 = vpop.f32.mrf.mxu0
    %v2014 = vadd.f32 %v1988, %v2013
    %2015 = vdwg.mxu0
    %v2016 = vmul.f32 %v1940, 0.25
    %v2017 = vmul.f32 %v1942, 0.25
    %v2020 = vrot.slane %v2016, 1
    %v2021 = vrot.slane %v2016, 2
    %v2022 = vrot.slane %v2016, 3
    %v2023 = vrot.slane %v2016, 4
    %v2024 = vrot.slane %v2016, 5
    %v2025 = vrot.slane %v2016, 6
    %v2026 = vrot.slane %v2016, 7
    %v2027 = vrot.slane %v2017, 1
    %2028 = vst [vmem:[#allocation1] ss:$9 sm:$0xff] %v2016
    %s2029 = scalar_lea.vmem [#allocation1], 1
    %2030 = vst [vmem:[%s2029] ss:$9 sm:$0xff] %v2020
    %s2031 = scalar_lea.vmem [#allocation1], 2
    %2032 = vst [vmem:[%s2031] ss:$9 sm:$0xff] %v2021
    %s2033 = scalar_lea.vmem [#allocation1], 3
    %2034 = vst [vmem:[%s2033] ss:$9 sm:$0xff] %v2022
    %s2035 = scalar_lea.vmem [#allocation1], 4
    %2036 = vst [vmem:[%s2035] ss:$9 sm:$0xff] %v2023
    %v2037 = vld [vmem:[#allocation1] sm:$0xff]
    %2038 = vst [vmem:[#allocation1] ss:$9 sm:$0xff] %v2024
    %2039 = vst [vmem:[%s2029] ss:$9 sm:$0xff] %v2025
    %2040 = vst [vmem:[%s2031] ss:$9 sm:$0xff] %v2026
    %2041 = vst [vmem:[%s2033] ss:$9 sm:$0xff] %v2017
    %2042 = vst [vmem:[%s2035] ss:$9 sm:$0xff] %v2027
    %v2043 = vld [vmem:[#allocation1] sm:$0xff]
    %v2046 = vpack.c.bf16 %v2037, %v2037
    %v2047 = vpack.c.bf16 %v2043, %v2043
    %v2050 = vrot.slane %v1976, 1
    %v2051 = vrot.slane %v1976, 2
    %v2052 = vrot.slane %v1976, 3
    %v2053 = vrot.slane %v1976, 4
    %v2054 = vrot.slane %v1976, 5
    %v2055 = vrot.slane %v1976, 6
    %v2056 = vrot.slane %v1976, 7
    %v2057 = vrot.slane %v1978, 1
    %2058 = vst [vmem:[#allocation1] ss:$9 sm:$0xff] %v1976
    %s2059 = scalar_lea.vmem [#allocation1], 1
    %2060 = vst [vmem:[%s2059] ss:$9 sm:$0xff] %v2050
    %s2061 = scalar_lea.vmem [#allocation1], 2
    %2062 = vst [vmem:[%s2061] ss:$9 sm:$0xff] %v2051
    %s2063 = scalar_lea.vmem [#allocation1], 3
    %2064 = vst [vmem:[%s2063] ss:$9 sm:$0xff] %v2052
    %s2065 = scalar_lea.vmem [#allocation1], 4
    %2066 = vst [vmem:[%s2065] ss:$9 sm:$0xff] %v2053
    %v2067 = vld [vmem:[#allocation1] sm:$0xff]
    %2068 = vst [vmem:[#allocation1] ss:$9 sm:$0xff] %v2054
    %2069 = vst [vmem:[%s2059] ss:$9 sm:$0xff] %v2055
    %2070 = vst [vmem:[%s2061] ss:$9 sm:$0xff] %v2056
    %2071 = vst [vmem:[%s2063] ss:$9 sm:$0xff] %v1978
    %2072 = vst [vmem:[%s2065] ss:$9 sm:$0xff] %v2057
    %v2073 = vld [vmem:[#allocation1] sm:$0xff]
    %v2076 = vpack.c.bf16 %v2067, %v2067
    %v2077 = vpack.c.bf16 %v2073, %v2073
    %v2080 = vrot.slane %v2012, 1
    %v2081 = vrot.slane %v2012, 2
    %v2082 = vrot.slane %v2012, 3
    %v2083 = vrot.slane %v2012, 4
    %v2084 = vrot.slane %v2012, 5
    %v2085 = vrot.slane %v2012, 6
    %v2086 = vrot.slane %v2012, 7
    %v2087 = vrot.slane %v2014, 1
    %2088 = vst [vmem:[#allocation1] ss:$9 sm:$0xff] %v2012
    %s2089 = scalar_lea.vmem [#allocation1], 1
    %2090 = vst [vmem:[%s2089] ss:$9 sm:$0xff] %v2080
    %s2091 = scalar_lea.vmem [#allocation1], 2
    %2092 = vst [vmem:[%s2091] ss:$9 sm:$0xff] %v2081
    %s2093 = scalar_lea.vmem [#allocation1], 3
    %2094 = vst [vmem:[%s2093] ss:$9 sm:$0xff] %v2082
    %s2095 = scalar_lea.vmem [#allocation1], 4
    %2096 = vst [vmem:[%s2095] ss:$9 sm:$0xff] %v2083
    %v2097 = vld [vmem:[#allocation1] sm:$0xff]
    %2098 = vst [vmem:[#allocation1] ss:$9 sm:$0xff] %v2084
    %2099 = vst [vmem:[%s2089] ss:$9 sm:$0xff] %v2085
    %2100 = vst [vmem:[%s2091] ss:$9 sm:$0xff] %v2086
    %2101 = vst [vmem:[%s2093] ss:$9 sm:$0xff] %v2014
    %2102 = vst [vmem:[%s2095] ss:$9 sm:$0xff] %v2087
    %v2103 = vld [vmem:[#allocation1] sm:$0xff]
    %v2106 = vpack.c.bf16 %v2097, %v2097
    %v2107 = vpack.c.bf16 %v2103, %v2103
    %v2109 = vsel %vm772, %v2046, 0
    %v2112 = vsel %vm772, %v2076, 0
    %2114 = vmatpush.bf16.xpose.msra.mxu0 0
    %2115 = vmatpush.bf16.xpose.msra.mxu0 0
    %2116 = vmatpush.bf16.xpose.msra.mxu0 0
    %2117 = vmatpush.bf16.xpose.msra.mxu0 0
    %2118 = vmatpush.bf16.xpose.msra.mxu0 0
    %2119 = vmatpush.bf16.xpose.msra.mxu0 0
    %2120 = vmatpush.bf16.xpose.msra.mxu0 0
    %2121 = vmatpush.bf16.xpose.msra.mxu0 %v2112
    %2122 = vmatmul.bf16.gmra.mxu0 %v2109
    %v2123 = vpop.f32.mrf.mxu0
    %v2124 = vadd.f32 0.0, %v2123
    %v2125 = vpop.f32.mrf.mxu0
    %2126 = vdwg.mxu0
    %v2128 = vsel %vm772, %v2047, 0
    %v2131 = vsel %vm772, %v2077, 0
    %2133 = vmatpush.bf16.xpose.msra.mxu0 0
    %2134 = vmatpush.bf16.xpose.msra.mxu0 0
    %2135 = vmatpush.bf16.xpose.msra.mxu0 0
    %2136 = vmatpush.bf16.xpose.msra.mxu0 0
    %2137 = vmatpush.bf16.xpose.msra.mxu0 0
    %2138 = vmatpush.bf16.xpose.msra.mxu0 0
    %2139 = vmatpush.bf16.xpose.msra.mxu0 0
    %2140 = vmatpush.bf16.xpose.msra.mxu0 %v2131
    %2141 = vmatmul.bf16.gmra.mxu0 %v2128
    %v2142 = vpop.f32.mrf.mxu0
    %v2143 = vadd.f32 0.0, %v2142
    %v2144 = vpop.f32.mrf.mxu0
    %2145 = vdwg.mxu0
    %v2146 = vsel %vm811, %v2124, -inf
    %2147 = vmax.xlane.f32.xlu0 %v2146
    %v2148 = vpop.xlane.xlu0 %2147
    %v2149 = vsel %vm811, %v2143, -inf
    %2150 = vmax.xlane.f32.xlu0 %v2149
    %v2151 = vpop.xlane.xlu0 %2150
    %v2152 = vsub.f32 %v2124, %v2148
    %v2153 = vsub.f32 %v2143, %v2151
    %v2154 = vmul.f32 %v2152, 1.442695
    %v2155 = vpow.pop %v2154
    %v2156 = vmul.f32 %v2153, 1.442695
    %v2157 = vpow.pop %v2156
    %v2158 = vsel %vm811, %v2155, 0.0
    %2159 = vadd.xlane.f32.xlu0 %v2158
    %v2160 = vpop.xlane.xlu0 %2159
    %v2161 = vsel %vm811, %v2157, 0.0
    %2162 = vadd.xlane.f32.xlu0 %v2161
    %v2163 = vpop.xlane.xlu0 %2162
    %v2164 = vrcp.pop %v2160
    %v2165 = vrcp.pop %v2163
    %v2166 = vmul.f32 %v2155, %v2164
    %v2167 = vmul.f32 %v2157, %v2165
    %v2168 = vpack.c.bf16 %v2166, %v2166
    %v2169 = vpack.c.bf16 %v2167, %v2167
    %v2171 = vsel %vm836, %v2168, 0
    %v2174 = vand.u32 %v2106, %v843
    %2176 = vmatpush.bf16.msra.mxu0 0
    %2177 = vmatpush.bf16.msra.mxu0 0
    %2178 = vmatpush.bf16.msra.mxu0 0
    %2179 = vmatpush.bf16.msra.mxu0 0
    %2180 = vmatpush.bf16.msra.mxu0 0
    %2181 = vmatpush.bf16.msra.mxu0 0
    %2182 = vmatpush.bf16.msra.mxu0 0
    %2183 = vmatpush.bf16.msra.mxu0 %v2174
    %2184 = vmatmul.bf16.gmra.mxu0 %v2171
    %v2185 = vpop.f32.mrf.mxu0
    %v2186 = vadd.f32 0.0, %v2185
    %v2187 = vpop.f32.mrf.mxu0
    %2188 = vdwg.mxu0
    %v2190 = vsel %vm836, %v2169, 0
    %v2193 = vand.u32 %v2107, %v843
    %2195 = vmatpush.bf16.msra.mxu0 0
    %2196 = vmatpush.bf16.msra.mxu0 0
    %2197 = vmatpush.bf16.msra.mxu0 0
    %2198 = vmatpush.bf16.msra.mxu0 0
    %2199 = vmatpush.bf16.msra.mxu0 0
    %2200 = vmatpush.bf16.msra.mxu0 0
    %2201 = vmatpush.bf16.msra.mxu0 0
    %2202 = vmatpush.bf16.msra.mxu0 %v2193
    %2203 = vmatmul.bf16.gmra.mxu0 %v2190
    %v2204 = vpop.f32.mrf.mxu0
    %v2205 = vadd.f32 0.0, %v2204
    %v2206 = vpop.f32.mrf.mxu0
    %2207 = vdwg.mxu0
    %v2210 = vrot.slane %v2186, 1
    %v2211 = vrot.slane %v2186, 2
    %v2212 = vrot.slane %v2186, 3
    %v2213 = vrot.slane %v2186, 4
    %v2214 = vrot.slane %v2205, 1
    %v2215 = vrot.slane %v2205, 2
    %v2216 = vrot.slane %v2205, 3
    %v2217 = vrot.slane %v2205, 4
    %2218 = vst [vmem:[#allocation1] ss:$9 sm:$0xff] %v2186
    %s2219 = scalar_lea.vmem [#allocation1], 1
    %2220 = vst [vmem:[%s2219] ss:$9 sm:$0xff] %v2210
    %s2221 = scalar_lea.vmem [#allocation1], 2
    %2222 = vst [vmem:[%s2221] ss:$9 sm:$0xff] %v2211
    %s2223 = scalar_lea.vmem [#allocation1], 3
    %2224 = vst [vmem:[%s2223] ss:$9 sm:$0xff] %v2212
    %s2225 = scalar_lea.vmem [#allocation1], 4
    %2226 = vst [vmem:[%s2225] ss:$9 sm:$0xff] %v2213
    %s2227 = scalar_lea.vmem [#allocation1], 5
    %2228 = vst [vmem:[%s2227] ss:$9 sm:$0xff] %v2205
    %s2229 = scalar_lea.vmem [#allocation1], 6
    %2230 = vst [vmem:[%s2229] ss:$9 sm:$0xff] %v2214
    %s2231 = scalar_lea.vmem [#allocation1], 7
    %2232 = vst [vmem:[%s2231] ss:$9 sm:$0xff] %v2215
    %v2233 = vld [vmem:[#allocation1] sm:$0xff]
    %2234 = vst [vmem:[#allocation1] ss:$9 sm:$0xff] %v2216
    %2235 = vst [vmem:[%s2219] ss:$9 sm:$0xff] %v2217
    %v2236 = vld [vmem:[#allocation1] sm:$0xff]
    %v2239 = vpack.c.bf16 %v2236, %v2233
    %s2240 = scalar_lea.vmem %s11, 24
    %v2241 = vld [vmem:[%s2240] sm:$0xf]
    %v2242 = vld [vmem:[%s2240 + $0x4] sm:$0xf]
    %v2245 = vunpack.c.l.b16 %v2241
    %v2246 = vunpack.c.l.b16 %v2242
    %v2247 = vpack.c.b16 %v2246, %v2245
    %v2250 = vsel %vm772, %v2239, 0
    %2252 = vmatpush.bf16.msra.mxu0 0
    %2253 = vmatpush.bf16.msra.mxu0 0
    %2254 = vmatpush.bf16.msra.mxu0 0
    %2255 = vmatpush.bf16.msra.mxu0 0
    %2256 = vmatpush.bf16.msra.mxu0 0
    %2257 = vmatpush.bf16.msra.mxu0 0
    %2258 = vmatpush.bf16.msra.mxu0 0
    %2259 = vmatpush.bf16.msra.mxu0 %v2247
    %2260 = vmatmul.bf16.gmra.mxu0 %v2250
    %v2261 = vpop.f32.mrf.mxu0
    %v2262 = vadd.f32 0.0, %v2261
    %v2263 = vpop.f32.mrf.mxu0
    %v2264 = vadd.f32 0.0, %v2263
    %2265 = vdwg.mxu0
    %v2268 = vunpack.c.l.b16 %v1906
    %v2269 = vunpack.c.l.b16 %v1907
    %v2270 = vpack.c.b16 %v2269, %v2268
    %v2273 = vsel %vm772, %v1904, 0
    %2275 = vmatpush.bf16.msra.mxu0 0
    %2276 = vmatpush.bf16.msra.mxu0 0
    %2277 = vmatpush.bf16.msra.mxu0 0
    %2278 = vmatpush.bf16.msra.mxu0 0
    %2279 = vmatpush.bf16.msra.mxu0 0
    %2280 = vmatpush.bf16.msra.mxu0 0
    %2281 = vmatpush.bf16.msra.mxu0 0
    %2282 = vmatpush.bf16.msra.mxu0 %v2270
    %2283 = vmatmul.bf16.gmra.mxu0 %v2273
    %v2284 = vpop.f32.mrf.mxu0
    %v2285 = vadd.f32 %v2262, %v2284
    %v2286 = vpop.f32.mrf.mxu0
    %v2287 = vadd.f32 %v2264, %v2286
    %2288 = vdwg.mxu0
    %s2289 = scalar_lea.vmem %s12, 1
    %v2290 = vld [vmem:[%s2289] sm:$0x1]
    %v2292 = vperm.slane %v2290, 0
    %v2294 = vadd.f32 %v2285, %v2292
    %v2295 = vadd.f32 %v2287, %v2292
    %s2296 = scalar_lea.vmem %s13, 1
    %v2297 = vld [vmem:[%s2296] sm:$0x1]
    %v2299 = vperm.slane %v2297, 0
    %v2301 = vmul.f32 %v2299, %v2294
    %v2302 = vmul.f32 %v2299, %v2295
    %v2303 = vadd.f32 %v1509, %v2301
    %v2304 = vadd.f32 %v1510, %v2302
    %s2305 = scalar_lea.vmem %s14, 1
    %v2306 = vld [vmem:[%s2305] sm:$0x1]
    %s2307 = scalar_lea.vmem %s15, 1
    %v2308 = vld [vmem:[%s2307] sm:$0x1]
    %v2309 = vsel %vm511, %v2303, 0.0
    %2310 = vadd.xlane.f32.xlu0 %v2309
    %v2311 = vpop.xlane.xlu0 %2310
    %v2312 = vsel %vm515, %v2304, 0.0
    %2313 = vadd.xlane.f32.xlu0 %v2312
    %v2314 = vpop.xlane.xlu0 %2313
    %v2315 = vmul.f32 %v2311, %v525
    %v2316 = vmul.f32 %v2314, %v525
    %v2317 = vsub.f32 %v2303, %v2315
    %v2318 = vsub.f32 %v2304, %v2316
    %v2319 = vmul.f32 %v2317, %v2317
    %v2320 = vmul.f32 %v2318, %v2318
    %v2321 = vsel %vm511, %v2319, 0.0
    %2322 = vadd.xlane.f32.xlu0 %v2321
    %v2323 = vpop.xlane.xlu0 %2322
    %v2324 = vsel %vm515, %v2320, 0.0
    %2325 = vadd.xlane.f32.xlu0 %v2324
    %v2326 = vpop.xlane.xlu0 %2325
    %v2327 = vmul.f32 %v2323, %v525
    %v2328 = vmul.f32 %v2326, %v525
    %v2329 = vadd.f32 %v2327, 1e-06
    %v2330 = vadd.f32 %v2328, 1e-06
    %v2331 = vrsqrt.pop %v2329
    %v2332 = vmul.f32 %v2331, %v2329
    %v2333 = vmul.f32 %v2332, %v2331
    %v2334 = vmul.f32 0.5, %v2333
    %v2335 = vsub.f32 1.5, %v2334
    %v2336 = vmul.f32 %v2331, %v2335
    %vm2337 = vweird.f32 %v2329
    %vm2338 = vweird.f32 %v2331
    %vm2339 = vmor %vm2337, %vm2338
    %v2340 = vsel %vm2339, %v2331, %v2336
    %v2341 = vrsqrt.pop %v2330
    %v2342 = vmul.f32 %v2341, %v2330
    %v2343 = vmul.f32 %v2342, %v2341
    %v2344 = vmul.f32 0.5, %v2343
    %v2345 = vsub.f32 1.5, %v2344
    %v2346 = vmul.f32 %v2341, %v2345
    %vm2347 = vweird.f32 %v2330
    %vm2348 = vweird.f32 %v2341
    %vm2349 = vmor %vm2347, %vm2348
    %v2350 = vsel %vm2349, %v2341, %v2346
    %v2351 = vmul.f32 %v2317, %v2340
    %v2352 = vmul.f32 %v2318, %v2350
    %v2354 = vperm.slane %v2306, 0
    %v2356 = vmul.f32 %v2351, %v2354
    %v2357 = vmul.f32 %v2352, %v2354
    %v2359 = vperm.slane %v2308, 0
    %v2361 = vadd.f32 %v2356, %v2359
    %v2362 = vadd.f32 %v2357, %v2359
    %v2363 = vpack.c.bf16 %v2362, %v2361
    %s2364 = scalar_lea.vmem %s16, 16
    %v2365 = vld [vmem:[%s2364] sm:$0xf]
    %v2366 = vld [vmem:[%s2364 + $0x4] sm:$0xf]
    %v2367 = vld [vmem:[%s2364 + $0x8] sm:$0xf]
    %v2368 = vld [vmem:[%s2364 + $0xc] sm:$0xf]
    %s2369 = scalar_lea.vmem %s17, 1
    %v2370 = vld [vmem:[%s2369] sm:$0x1]
    %v2372 = vperm.slane %v2370, 0
    %v2378 = vunpack.c.l.b16 %v2365
    %v2379 = vunpack.c.l.b16 %v2366
    %v2380 = vunpack.c.l.b16 %v2367
    %v2381 = vunpack.c.l.b16 %v2368
    %v2382 = vpack.c.b16 %v2379, %v2378
    %v2383 = vpack.c.b16 %v2381, %v2380
    %v2387 = vsel %vm511, %v2363, 0
    %2389 = vmatpush.bf16.msra.mxu0 0
    %2390 = vmatpush.bf16.msra.mxu0 0
    %2391 = vmatpush.bf16.msra.mxu0 0
    %2392 = vmatpush.bf16.msra.mxu0 0
    %2393 = vmatpush.bf16.msra.mxu0 0
    %2394 = vmatpush.bf16.msra.mxu0 0
    %2395 = vmatpush.bf16.msra.mxu0 %v2383
    %2396 = vmatpush.bf16.msra.mxu0 %v2382
    %2397 = vmatmul.bf16.gmra.mxu0 %v2387
    %v2398 = vpop.f32.mrf.mxu0
    %v2399 = vadd.f32 %v2372, %v2398
    %v2400 = vpop.f32.mrf.mxu0
    %v2401 = vadd.f32 %v2372, %v2400
    %2402 = vdwg.mxu0
    %v2403 = vmul.f32 %v2399, %v2399
    %v2404 = vmul.f32 %v2401, %v2401
    %v2405 = vmul.f32 %v2399, %v2403
    %v2406 = vmul.f32 %v2401, %v2404
    %v2407 = vmul.f32 %v2405, 0.044715
    %v2408 = vmul.f32 %v2406, 0.044715
    %v2409 = vadd.f32 %v2399, %v2407
    %v2410 = vadd.f32 %v2401, %v2408
    %v2411 = vmul.f32 %v2409, 0.7978846
    %v2412 = vmul.f32 %v2410, 0.7978846
    %v2413 = vtanh.pop %v2411
    %v2414 = vtanh.pop %v2412
    %v2415 = vadd.f32 %v2413, 1.0
    %v2416 = vadd.f32 %v2414, 1.0
    %v2417 = vmul.f32 %v2415, 0.5
    %v2418 = vmul.f32 %v2416, 0.5
    %v2419 = vmul.f32 %v2399, %v2417
    %v2420 = vmul.f32 %v2401, %v2418
    %v2421 = vpack.c.bf16 %v2420, %v2419
    %s2422 = scalar_lea.vmem %s18, 64
    %v2423 = vld [vmem:[%s2422] sm:$0xf]
    %v2424 = vld [vmem:[%s2422 + $0x4] sm:$0xf]
    %v2425 = vld [vmem:[%s2422 + $0x8] sm:$0xf]
    %v2426 = vld [vmem:[%s2422 + $0xc] sm:$0xf]
    %v2427 = vld [vmem:[%s2422 + $0x10] sm:$0xf]
    %v2428 = vld [vmem:[%s2422 + $0x14] sm:$0xf]
    %v2429 = vld [vmem:[%s2422 + $0x18] sm:$0xf]
    %v2430 = vld [vmem:[%s2422 + $0x1c] sm:$0xf]
    %v2431 = vld [vmem:[%s2422 + $0x20] sm:$0xf]
    %v2432 = vld [vmem:[%s2422 + $0x24] sm:$0xf]
    %v2433 = vld [vmem:[%s2422 + $0x28] sm:$0xf]
    %v2434 = vld [vmem:[%s2422 + $0x2c] sm:$0xf]
    %v2435 = vld [vmem:[%s2422 + $0x30] sm:$0xf]
    %v2436 = vld [vmem:[%s2422 + $0x34] sm:$0xf]
    %v2437 = vld [vmem:[%s2422 + $0x38] sm:$0xf]
    %v2438 = vld [vmem:[%s2422 + $0x3c] sm:$0xf]
    %s2439 = scalar_lea.vmem %s19, 1
    %v2440 = vld [vmem:[%s2439] sm:$0x1]
    %v2442 = vperm.slane %v2440, 0
    %v2460 = vunpack.c.l.b16 %v2423
    %v2461 = vunpack.c.l.b16 %v2424
    %v2462 = vunpack.c.l.b16 %v2425
    %v2463 = vunpack.c.l.b16 %v2426
    %v2464 = vunpack.c.l.b16 %v2427
    %v2465 = vunpack.c.l.b16 %v2428
    %v2466 = vunpack.c.l.b16 %v2429
    %v2467 = vunpack.c.l.b16 %v2430
    %v2468 = vunpack.c.l.b16 %v2431
    %v2469 = vunpack.c.l.b16 %v2432
    %v2470 = vunpack.c.l.b16 %v2433
    %v2471 = vunpack.c.l.b16 %v2434
    %v2472 = vunpack.c.l.b16 %v2435
    %v2473 = vunpack.c.l.b16 %v2436
    %v2474 = vunpack.c.l.b16 %v2437
    %v2475 = vunpack.c.l.b16 %v2438
    %v2476 = vpack.c.b16 %v2461, %v2460
    %v2477 = vpack.c.b16 %v2463, %v2462
    %v2478 = vpack.c.b16 %v2465, %v2464
    %v2479 = vpack.c.b16 %v2467, %v2466
    %v2480 = vpack.c.b16 %v2469, %v2468
    %v2481 = vpack.c.b16 %v2471, %v2470
    %v2482 = vpack.c.b16 %v2473, %v2472
    %v2483 = vpack.c.b16 %v2475, %v2474
    %2492 = vmatpush.bf16.msra.mxu0 %v2483
    %2493 = vmatpush.bf16.msra.mxu0 %v2482
    %2494 = vmatpush.bf16.msra.mxu0 %v2481
    %2495 = vmatpush.bf16.msra.mxu0 %v2480
    %2496 = vmatpush.bf16.msra.mxu0 %v2479
    %2497 = vmatpush.bf16.msra.mxu0 %v2478
    %2498 = vmatpush.bf16.msra.mxu0 %v2477
    %2499 = vmatpush.bf16.msra.mxu0 %v2476
    %2500 = vmatmul.bf16.gmra.mxu0 %v2421
    %v2501 = vpop.f32.mrf.mxu0
    %v2502 = vadd.f32 %v2442, %v2501
    %v2503 = vpop.f32.mrf.mxu0
    %v2504 = vadd.f32 %v2442, %v2503
    %2505 = vdwg.mxu0
    %s2506 = scalar_lea.vmem %s20, 1
    %v2507 = vld [vmem:[%s2506] sm:$0x1]
    %v2509 = vperm.slane %v2507, 0
    %v2511 = vmul.f32 %v2509, %v2502
    %v2512 = vmul.f32 %v2509, %v2504
    %v2513 = vadd.f32 %v2303, %v2511
    %v2514 = vadd.f32 %v2304, %v2512
    %v2515 = vld [vmem:[%s21] sm:$0x1]
    %v2516 = vld [vmem:[%s22] sm:$0x1]
    %v2517 = vsel %vm511, %v2513, 0.0
    %2518 = vadd.xlane.f32.xlu0 %v2517
    %v2519 = vpop.xlane.xlu0 %2518
    %v2520 = vsel %vm515, %v2514, 0.0
    %2521 = vadd.xlane.f32.xlu0 %v2520
    %v2522 = vpop.xlane.xlu0 %2521
    %v2523 = vmul.f32 %v2519, %v525
    %v2524 = vmul.f32 %v2522, %v525
    %v2525 = vsub.f32 %v2513, %v2523
    %v2526 = vsub.f32 %v2514, %v2524
    %v2527 = vmul.f32 %v2525, %v2525
    %v2528 = vmul.f32 %v2526, %v2526
    %v2529 = vsel %vm511, %v2527, 0.0
    %2530 = vadd.xlane.f32.xlu0 %v2529
    %v2531 = vpop.xlane.xlu0 %2530
    %v2532 = vsel %vm515, %v2528, 0.0
    %2533 = vadd.xlane.f32.xlu0 %v2532
    %v2534 = vpop.xlane.xlu0 %2533
    %v2535 = vmul.f32 %v2531, %v525
    %v2536 = vmul.f32 %v2534, %v525
    %v2537 = vadd.f32 %v2535, 1e-06
    %v2538 = vadd.f32 %v2536, 1e-06
    %v2539 = vrsqrt.pop %v2537
    %v2540 = vmul.f32 %v2539, %v2537
    %v2541 = vmul.f32 %v2540, %v2539
    %v2542 = vmul.f32 0.5, %v2541
    %v2543 = vsub.f32 1.5, %v2542
    %v2544 = vmul.f32 %v2539, %v2543
    %vm2545 = vweird.f32 %v2537
    %vm2546 = vweird.f32 %v2539
    %vm2547 = vmor %vm2545, %vm2546
    %v2548 = vsel %vm2547, %v2539, %v2544
    %v2549 = vrsqrt.pop %v2538
    %v2550 = vmul.f32 %v2549, %v2538
    %v2551 = vmul.f32 %v2550, %v2549
    %v2552 = vmul.f32 0.5, %v2551
    %v2553 = vsub.f32 1.5, %v2552
    %v2554 = vmul.f32 %v2549, %v2553
    %vm2555 = vweird.f32 %v2538
    %vm2556 = vweird.f32 %v2549
    %vm2557 = vmor %vm2555, %vm2556
    %v2558 = vsel %vm2557, %v2549, %v2554
    %v2559 = vmul.f32 %v2525, %v2548
    %v2560 = vmul.f32 %v2526, %v2558
    %v2562 = vperm.slane %v2515, 0
    %v2564 = vmul.f32 %v2559, %v2562
    %v2565 = vmul.f32 %v2560, %v2562
    %v2567 = vperm.slane %v2516, 0
    %v2569 = vadd.f32 %v2564, %v2567
    %v2570 = vadd.f32 %v2565, %v2567
    %v2573 = vrot.slane %v2569, 1
    %v2574 = vrot.slane %v2569, 2
    %v2575 = vrot.slane %v2569, 3
    %v2576 = vrot.slane %v2569, 4
    %v2577 = vrot.slane %v2569, 5
    %v2578 = vrot.slane %v2569, 6
    %v2579 = vrot.slane %v2569, 7
    %v2580 = vrot.slane %v2570, 1
    %v2581 = vlaneseq
    %v2582 = vshrl.u32 %v2581, 7
    %vm2583 = vcmp.eq.s32.totalorder %v2582, 0
    %2584 = vst [vmem:[#allocation1] ss:$9 sm:$0xff] %v2569
    %s2585 = scalar_lea.vmem [#allocation1], 1
    %2586 = vst [vmem:[%s2585] ss:$9 sm:$0xff] %v2573
    %s2587 = scalar_lea.vmem [#allocation1], 2
    %2588 = vst [vmem:[%s2587] ss:$9 sm:$0xff] %v2574
    %s2589 = scalar_lea.vmem [#allocation1], 3
    %2590 = vst [vmem:[%s2589] ss:$9 sm:$0xff] %v2575
    %s2591 = scalar_lea.vmem [#allocation1], 4
    %2592 = vst [vmem:[%s2591] ss:$9 sm:$0xff] %v2576
    %v2593 = vld [vmem:[#allocation1] sm:$0xff]
    %2594 = vst [vmem:[#allocation1] ss:$9 sm:$0xff] %v2577
    %2595 = vst [vmem:[%s2585] ss:$9 sm:$0xff] %v2578
    %2596 = vst [vmem:[%s2587] ss:$9 sm:$0xff] %v2579
    %2597 = vst [vmem:[%s2589] ss:$9 sm:$0xff] %v2570
    %2598 = vst [vmem:[%s2591] ss:$9 sm:$0xff] %v2580
    %v2599 = vld [vmem:[#allocation1] sm:$0xff]
    %v2602 = vsel %vm2583, %v2593, 0.0
    %v2603 = vsel %vm2583, %v2599, 0.0
    %vm2604 = vcmask 258048
    %v2605 = vsel %vm2604, %v2602, 0.0
    %v2606 = vrot.slane %v2605, 4
    %v2607 = vadd.f32 %v2605, %v2606
    %v2608 = vrot.slane %v2607, 2
    %v2609 = vadd.f32 %v2607, %v2608
    %v2610 = vrot.slane %v2609, 1
    %v2611 = vadd.f32 %v2609, %v2610
    %v2612 = vsel %vm2604, %v2603, 0.0
    %v2613 = vrot.slane %v2612, 4
    %v2614 = vadd.f32 %v2612, %v2613
    %v2615 = vrot.slane %v2614, 2
    %v2616 = vadd.f32 %v2614, %v2615
    %v2617 = vrot.slane %v2616, 1
    %v2618 = vadd.f32 %v2616, %v2617
    %2619 = vst [vmem:[#allocation1] ss:$9 sm:$0xff] %v2569
    %s2620 = scalar_lea.vmem [#allocation1], 1
    %2621 = vst [vmem:[%s2620] ss:$9 sm:$0xff] %v2573
    %s2622 = scalar_lea.vmem [#allocation1], 2
    %2623 = vst [vmem:[%s2622] ss:$9 sm:$0xff] %v2574
    %s2624 = scalar_lea.vmem [#allocation1], 3
    %2625 = vst [vmem:[%s2624] ss:$9 sm:$0xff] %v2575
    %s2626 = scalar_lea.vmem [#allocation1], 4
    %2627 = vst [vmem:[%s2626] ss:$9 sm:$0xff] %v2576
    %v2628 = vld [vmem:[#allocation1] sm:$0xff]
    %2629 = vst [vmem:[#allocation1] ss:$9 sm:$0xff] %v2577
    %2630 = vst [vmem:[%s2620] ss:$9 sm:$0xff] %v2578
    %2631 = vst [vmem:[%s2622] ss:$9 sm:$0xff] %v2579
    %2632 = vst [vmem:[%s2624] ss:$9 sm:$0xff] %v2570
    %2633 = vst [vmem:[%s2626] ss:$9 sm:$0xff] %v2580
    %v2634 = vld [vmem:[#allocation1] sm:$0xff]
    %v2637 = vsel %vm2604, %v2628, 0.0
    %v2638 = vrot.slane %v2637, 4
    %v2639 = vadd.f32 %v2637, %v2638
    %v2640 = vrot.slane %v2639, 2
    %v2641 = vadd.f32 %v2639, %v2640
    %v2642 = vrot.slane %v2641, 1
    %v2643 = vadd.f32 %v2641, %v2642
    %v2644 = vsel %vm2604, %v2634, 0.0
    %v2645 = vrot.slane %v2644, 4
    %v2646 = vadd.f32 %v2644, %v2645
    %v2647 = vrot.slane %v2646, 2
    %v2648 = vadd.f32 %v2646, %v2647
    %v2649 = vrot.slane %v2648, 1
    %v2650 = vadd.f32 %v2648, %v2649
    %v2651 = vsub.f32 %v2643, %v2611
    %v2652 = vsub.f32 %v2650, %v2618
    %v2653 = vmul.f32 %v2651, 0.25
    %v2654 = vmul.f32 %v2652, 0.25
    %v2655 = vpack.c.bf16 %v2611, %v2611
    %v2656 = vpack.c.bf16 %v2618, %v2618
    %v2657 = vld [vmem:[%s23] sm:$0xff]
    %v2658 = vld [vmem:[%s23 + $0x8] sm:$0xff]
    %v2659 = vld [vmem:[%s23 + $0x10] sm:$0xff]
    %v2660 = vld [vmem:[%s23 + $0x18] sm:$0xff]
    %v2661 = vld [vmem:[%s23 + $0x20] sm:$0xff]
    %v2662 = vld [vmem:[%s23 + $0x28] sm:$0xff]
    %v2663 = vld [vmem:[%s23 + $0x30] sm:$0xff]
    %v2664 = vld [vmem:[%s23 + $0x38] sm:$0xff]
    %v2665 = vld [vmem:[%s23 + $0x40] sm:$0xff]
    %v2666 = vld [vmem:[%s23 + $0x48] sm:$0xff]
    %v2667 = vld [vmem:[%s23 + $0x50] sm:$0xff]
    %v2668 = vld [vmem:[%s23 + $0x58] sm:$0xff]
    %v2669 = vld [vmem:[%s23 + $0x60] sm:$0xff]
    %v2670 = vld [vmem:[%s23 + $0x68] sm:$0xff]
    %v2671 = vld [vmem:[%s23 + $0x70] sm:$0xff]
    %v2672 = vld [vmem:[%s23 + $0x78] sm:$0xff]
    %v2673 = vpack.c.bf16 %v2653, %v2653
    %v2674 = vpack.c.bf16 %v2654, %v2654
    %v2675 = vld [vmem:[%s24] sm:$0xff]
    %v2676 = vld [vmem:[%s24 + $0x8] sm:$0xff]
    %v2677 = vld [vmem:[%s24 + $0x10] sm:$0xff]
    %v2678 = vld [vmem:[%s24 + $0x18] sm:$0xff]
    %v2679 = vld [vmem:[%s24 + $0x20] sm:$0xff]
    %v2680 = vld [vmem:[%s24 + $0x28] sm:$0xff]
    %v2681 = vld [vmem:[%s24 + $0x30] sm:$0xff]
    %v2682 = vld [vmem:[%s24 + $0x38] sm:$0xff]
    %v2683 = vld [vmem:[%s24 + $0x40] sm:$0xff]
    %v2684 = vld [vmem:[%s24 + $0x48] sm:$0xff]
    %v2685 = vld [vmem:[%s24 + $0x50] sm:$0xff]
    %v2686 = vld [vmem:[%s24 + $0x58] sm:$0xff]
    %v2687 = vld [vmem:[%s24 + $0x60] sm:$0xff]
    %v2688 = vld [vmem:[%s24 + $0x68] sm:$0xff]
    %v2689 = vld [vmem:[%s24 + $0x70] sm:$0xff]
    %v2690 = vld [vmem:[%s24 + $0x78] sm:$0xff]
    %v2693 = vunpack.c.l.b16 %v2673
    %v2694 = vunpack.c.l.b16 %v2674
    %vm2695 = vcmask 1041409
    %v2696 = vsel %vm2695, %v2694, %v2693
    %v2697 = vpack.c.b16 %v2696, %v2696
    %v2714 = vunpack.c.l.b16 %v2675
    %v2715 = vunpack.c.h.b16 %v2675
    %v2716 = vunpack.c.l.b16 %v2676
    %v2717 = vunpack.c.h.b16 %v2676
    %v2718 = vunpack.c.l.b16 %v2677
    %v2719 = vunpack.c.h.b16 %v2677
    %v2720 = vunpack.c.l.b16 %v2678
    %v2721 = vunpack.c.h.b16 %v2678
    %v2722 = vunpack.c.l.b16 %v2679
    %v2723 = vunpack.c.h.b16 %v2679
    %v2724 = vunpack.c.l.b16 %v2680
    %v2725 = vunpack.c.h.b16 %v2680
    %v2726 = vunpack.c.l.b16 %v2681
    %v2727 = vunpack.c.h.b16 %v2681
    %v2728 = vunpack.c.l.b16 %v2682
    %v2729 = vunpack.c.h.b16 %v2682
    %v2730 = vunpack.c.l.b16 %v2683
    %v2731 = vunpack.c.h.b16 %v2683
    %v2732 = vunpack.c.l.b16 %v2684
    %v2733 = vunpack.c.h.b16 %v2684
    %v2734 = vunpack.c.l.b16 %v2685
    %v2735 = vunpack.c.h.b16 %v2685
    %v2736 = vunpack.c.l.b16 %v2686
    %v2737 = vunpack.c.h.b16 %v2686
    %v2738 = vunpack.c.l.b16 %v2687
    %v2739 = vunpack.c.h.b16 %v2687
    %v2740 = vunpack.c.l.b16 %v2688
    %v2741 = vunpack.c.h.b16 %v2688
    %v2742 = vunpack.c.l.b16 %v2689
    %v2743 = vunpack.c.h.b16 %v2689
    %v2744 = vunpack.c.l.b16 %v2690
    %v2745 = vunpack.c.h.b16 %v2690
    %v2746 = vpack.c.b16 %v2722, %v2714
    %v2747 = vpack.c.b16 %v2723, %v2715
    %v2748 = vpack.c.b16 %v2724, %v2716
    %v2749 = vpack.c.b16 %v2725, %v2717
    %v2750 = vpack.c.b16 %v2726, %v2718
    %v2751 = vpack.c.b16 %v2727, %v2719
    %v2752 = vpack.c.b16 %v2728, %v2720
    %v2753 = vpack.c.b16 %v2729, %v2721
    %v2754 = vpack.c.b16 %v2738, %v2730
    %v2755 = vpack.c.b16 %v2739, %v2731
    %v2756 = vpack.c.b16 %v2740, %v2732
    %v2757 = vpack.c.b16 %v2741, %v2733
    %v2758 = vpack.c.b16 %v2742, %v2734
    %v2759 = vpack.c.b16 %v2743, %v2735
    %v2760 = vpack.c.b16 %v2744, %v2736
    %v2761 = vpack.c.b16 %v2745, %v2737
    %v2779 = vsel %vm511, %v2697, 0
    %2781 = vmatpush.bf16.msra.mxu0 0
    %2782 = vmatpush.bf16.msra.mxu0 0
    %2783 = vmatpush.bf16.msra.mxu0 0
    %2784 = vmatpush.bf16.msra.mxu0 0
    %2785 = vmatpush.bf16.msra.mxu0 0
    %2786 = vmatpush.bf16.msra.mxu0 0
    %2787 = vmatpush.bf16.msra.mxu0 %v2754
    %2788 = vmatpush.bf16.msra.mxu0 %v2746
    %2789 = vmatmul.bf16.gmra.mxu0 %v2779
    %v2790 = vpop.f32.mrf.mxu0
    %v2791 = vadd.f32 0.0, %v2790
    %v2792 = vpop.f32.mrf.mxu0
    %2793 = vdwg.mxu0
    %2794 = vmatpush.bf16.msra.mxu0 0
    %2795 = vmatpush.bf16.msra.mxu0 0
    %2796 = vmatpush.bf16.msra.mxu0 0
    %2797 = vmatpush.bf16.msra.mxu0 0
    %2798 = vmatpush.bf16.msra.mxu0 0
    %2799 = vmatpush.bf16.msra.mxu0 0
    %2800 = vmatpush.bf16.msra.mxu0 %v2755
    %2801 = vmatpush.bf16.msra.mxu0 %v2747
    %2802 = vmatmul.bf16.gmra.mxu0 %v2779
    %v2803 = vpop.f32.mrf.mxu0
    %v2804 = vadd.f32 0.0, %v2803
    %v2805 = vpop.f32.mrf.mxu0
    %2806 = vdwg.mxu0
    %2807 = vmatpush.bf16.msra.mxu0 0
    %2808 = vmatpush.bf16.msra.mxu0 0
    %2809 = vmatpush.bf16.msra.mxu0 0
    %2810 = vmatpush.bf16.msra.mxu0 0
    %2811 = vmatpush.bf16.msra.mxu0 0
    %2812 = vmatpush.bf16.msra.mxu0 0
    %2813 = vmatpush.bf16.msra.mxu0 %v2756
    %2814 = vmatpush.bf16.msra.mxu0 %v2748
    %2815 = vmatmul.bf16.gmra.mxu0 %v2779
    %v2816 = vpop.f32.mrf.mxu0
    %v2817 = vadd.f32 0.0, %v2816
    %v2818 = vpop.f32.mrf.mxu0
    %2819 = vdwg.mxu0
    %2820 = vmatpush.bf16.msra.mxu0 0
    %2821 = vmatpush.bf16.msra.mxu0 0
    %2822 = vmatpush.bf16.msra.mxu0 0
    %2823 = vmatpush.bf16.msra.mxu0 0
    %2824 = vmatpush.bf16.msra.mxu0 0
    %2825 = vmatpush.bf16.msra.mxu0 0
    %2826 = vmatpush.bf16.msra.mxu0 %v2757
    %2827 = vmatpush.bf16.msra.mxu0 %v2749
    %2828 = vmatmul.bf16.gmra.mxu0 %v2779
    %v2829 = vpop.f32.mrf.mxu0
    %v2830 = vadd.f32 0.0, %v2829
    %v2831 = vpop.f32.mrf.mxu0
    %2832 = vdwg.mxu0
    %2833 = vmatpush.bf16.msra.mxu0 0
    %2834 = vmatpush.bf16.msra.mxu0 0
    %2835 = vmatpush.bf16.msra.mxu0 0
    %2836 = vmatpush.bf16.msra.mxu0 0
    %2837 = vmatpush.bf16.msra.mxu0 0
    %2838 = vmatpush.bf16.msra.mxu0 0
    %2839 = vmatpush.bf16.msra.mxu0 %v2758
    %2840 = vmatpush.bf16.msra.mxu0 %v2750
    %2841 = vmatmul.bf16.gmra.mxu0 %v2779
    %v2842 = vpop.f32.mrf.mxu0
    %v2843 = vadd.f32 0.0, %v2842
    %v2844 = vpop.f32.mrf.mxu0
    %2845 = vdwg.mxu0
    %2846 = vmatpush.bf16.msra.mxu0 0
    %2847 = vmatpush.bf16.msra.mxu0 0
    %2848 = vmatpush.bf16.msra.mxu0 0
    %2849 = vmatpush.bf16.msra.mxu0 0
    %2850 = vmatpush.bf16.msra.mxu0 0
    %2851 = vmatpush.bf16.msra.mxu0 0
    %2852 = vmatpush.bf16.msra.mxu0 %v2759
    %2853 = vmatpush.bf16.msra.mxu0 %v2751
    %2854 = vmatmul.bf16.gmra.mxu0 %v2779
    %v2855 = vpop.f32.mrf.mxu0
    %v2856 = vadd.f32 0.0, %v2855
    %v2857 = vpop.f32.mrf.mxu0
    %2858 = vdwg.mxu0
    %2859 = vmatpush.bf16.msra.mxu0 0
    %2860 = vmatpush.bf16.msra.mxu0 0
    %2861 = vmatpush.bf16.msra.mxu0 0
    %2862 = vmatpush.bf16.msra.mxu0 0
    %2863 = vmatpush.bf16.msra.mxu0 0
    %2864 = vmatpush.bf16.msra.mxu0 0
    %2865 = vmatpush.bf16.msra.mxu0 %v2760
    %2866 = vmatpush.bf16.msra.mxu0 %v2752
    %2867 = vmatmul.bf16.gmra.mxu0 %v2779
    %v2868 = vpop.f32.mrf.mxu0
    %v2869 = vadd.f32 0.0, %v2868
    %v2870 = vpop.f32.mrf.mxu0
    %2871 = vdwg.mxu0
    %2872 = vmatpush.bf16.msra.mxu0 0
    %2873 = vmatpush.bf16.msra.mxu0 0
    %2874 = vmatpush.bf16.msra.mxu0 0
    %2875 = vmatpush.bf16.msra.mxu0 0
    %2876 = vmatpush.bf16.msra.mxu0 0
    %2877 = vmatpush.bf16.msra.mxu0 0
    %2878 = vmatpush.bf16.msra.mxu0 %v2761
    %2879 = vmatpush.bf16.msra.mxu0 %v2753
    %2880 = vmatmul.bf16.gmra.mxu0 %v2779
    %v2881 = vpop.f32.mrf.mxu0
    %v2882 = vadd.f32 0.0, %v2881
    %v2883 = vpop.f32.mrf.mxu0
    %2884 = vdwg.mxu0
    %v2887 = vunpack.c.l.b16 %v2655
    %v2888 = vunpack.c.l.b16 %v2656
    %v2889 = vsel %vm2695, %v2888, %v2887
    %v2890 = vpack.c.b16 %v2889, %v2889
    %v2907 = vunpack.c.l.b16 %v2657
    %v2908 = vunpack.c.h.b16 %v2657
    %v2909 = vunpack.c.l.b16 %v2658
    %v2910 = vunpack.c.h.b16 %v2658
    %v2911 = vunpack.c.l.b16 %v2659
    %v2912 = vunpack.c.h.b16 %v2659
    %v2913 = vunpack.c.l.b16 %v2660
    %v2914 = vunpack.c.h.b16 %v2660
    %v2915 = vunpack.c.l.b16 %v2661
    %v2916 = vunpack.c.h.b16 %v2661
    %v2917 = vunpack.c.l.b16 %v2662
    %v2918 = vunpack.c.h.b16 %v2662
    %v2919 = vunpack.c.l.b16 %v2663
    %v2920 = vunpack.c.h.b16 %v2663
    %v2921 = vunpack.c.l.b16 %v2664
    %v2922 = vunpack.c.h.b16 %v2664
    %v2923 = vunpack.c.l.b16 %v2665
    %v2924 = vunpack.c.h.b16 %v2665
    %v2925 = vunpack.c.l.b16 %v2666
    %v2926 = vunpack.c.h.b16 %v2666
    %v2927 = vunpack.c.l.b16 %v2667
    %v2928 = vunpack.c.h.b16 %v2667
    %v2929 = vunpack.c.l.b16 %v2668
    %v2930 = vunpack.c.h.b16 %v2668
    %v2931 = vunpack.c.l.b16 %v2669
    %v2932 = vunpack.c.h.b16 %v2669
    %v2933 = vunpack.c.l.b16 %v2670
    %v2934 = vunpack.c.h.b16 %v2670
    %v2935 = vunpack.c.l.b16 %v2671
    %v2936 = vunpack.c.h.b16 %v2671
    %v2937 = vunpack.c.l.b16 %v2672
    %v2938 = vunpack.c.h.b16 %v2672
    %v2939 = vpack.c.b16 %v2915, %v2907
    %v2940 = vpack.c.b16 %v2916, %v2908
    %v2941 = vpack.c.b16 %v2917, %v2909
    %v2942 = vpack.c.b16 %v2918, %v2910
    %v2943 = vpack.c.b16 %v2919, %v2911
    %v2944 = vpack.c.b16 %v2920, %v2912
    %v2945 = vpack.c.b16 %v2921, %v2913
    %v2946 = vpack.c.b16 %v2922, %v2914
    %v2947 = vpack.c.b16 %v2931, %v2923
    %v2948 = vpack.c.b16 %v2932, %v2924
    %v2949 = vpack.c.b16 %v2933, %v2925
    %v2950 = vpack.c.b16 %v2934, %v2926
    %v2951 = vpack.c.b16 %v2935, %v2927
    %v2952 = vpack.c.b16 %v2936, %v2928
    %v2953 = vpack.c.b16 %v2937, %v2929
    %v2954 = vpack.c.b16 %v2938, %v2930
    %v2972 = vsel %vm511, %v2890, 0
    %2974 = vmatpush.bf16.msra.mxu0 0
    %2975 = vmatpush.bf16.msra.mxu0 0
    %2976 = vmatpush.bf16.msra.mxu0 0
    %2977 = vmatpush.bf16.msra.mxu0 0
    %2978 = vmatpush.bf16.msra.mxu0 0
    %2979 = vmatpush.bf16.msra.mxu0 0
    %2980 = vmatpush.bf16.msra.mxu0 %v2947
    %2981 = vmatpush.bf16.msra.mxu0 %v2939
    %2982 = vmatmul.bf16.gmra.mxu0 %v2972
    %v2983 = vpop.f32.mrf.mxu0
    %v2984 = vadd.f32 %v2791, %v2983
    %v2985 = vpop.f32.mrf.mxu0
    %2986 = vdwg.mxu0
    %2987 = vmatpush.bf16.msra.mxu0 0
    %2988 = vmatpush.bf16.msra.mxu0 0
    %2989 = vmatpush.bf16.msra.mxu0 0
    %2990 = vmatpush.bf16.msra.mxu0 0
    %2991 = vmatpush.bf16.msra.mxu0 0
    %2992 = vmatpush.bf16.msra.mxu0 0
    %2993 = vmatpush.bf16.msra.mxu0 %v2948
    %2994 = vmatpush.bf16.msra.mxu0 %v2940
    %2995 = vmatmul.bf16.gmra.mxu0 %v2972
    %v2996 = vpop.f32.mrf.mxu0
    %v2997 = vadd.f32 %v2804, %v2996
    %v2998 = vpop.f32.mrf.mxu0
    %2999 = vdwg.mxu0
    %3000 = vmatpush.bf16.msra.mxu0 0
    %3001 = vmatpush.bf16.msra.mxu0 0
    %3002 = vmatpush.bf16.msra.mxu0 0
    %3003 = vmatpush.bf16.msra.mxu0 0
    %3004 = vmatpush.bf16.msra.mxu0 0
    %3005 = vmatpush.bf16.msra.mxu0 0
    %3006 = vmatpush.bf16.msra.mxu0 %v2949
    %3007 = vmatpush.bf16.msra.mxu0 %v2941
    %3008 = vmatmul.bf16.gmra.mxu0 %v2972
    %v3009 = vpop.f32.mrf.mxu0
    %v3010 = vadd.f32 %v2817, %v3009
    %v3011 = vpop.f32.mrf.mxu0
    %3012 = vdwg.mxu0
    %3013 = vmatpush.bf16.msra.mxu0 0
    %3014 = vmatpush.bf16.msra.mxu0 0
    %3015 = vmatpush.bf16.msra.mxu0 0
    %3016 = vmatpush.bf16.msra.mxu0 0
    %3017 = vmatpush.bf16.msra.mxu0 0
    %3018 = vmatpush.bf16.msra.mxu0 0
    %3019 = vmatpush.bf16.msra.mxu0 %v2950
    %3020 = vmatpush.bf16.msra.mxu0 %v2942
    %3021 = vmatmul.bf16.gmra.mxu0 %v2972
    %v3022 = vpop.f32.mrf.mxu0
    %v3023 = vadd.f32 %v2830, %v3022
    %v3024 = vpop.f32.mrf.mxu0
    %3025 = vdwg.mxu0
    %3026 = vmatpush.bf16.msra.mxu0 0
    %3027 = vmatpush.bf16.msra.mxu0 0
    %3028 = vmatpush.bf16.msra.mxu0 0
    %3029 = vmatpush.bf16.msra.mxu0 0
    %3030 = vmatpush.bf16.msra.mxu0 0
    %3031 = vmatpush.bf16.msra.mxu0 0
    %3032 = vmatpush.bf16.msra.mxu0 %v2951
    %3033 = vmatpush.bf16.msra.mxu0 %v2943
    %3034 = vmatmul.bf16.gmra.mxu0 %v2972
    %v3035 = vpop.f32.mrf.mxu0
    %v3036 = vadd.f32 %v2843, %v3035
    %v3037 = vpop.f32.mrf.mxu0
    %3038 = vdwg.mxu0
    %3039 = vmatpush.bf16.msra.mxu0 0
    %3040 = vmatpush.bf16.msra.mxu0 0
    %3041 = vmatpush.bf16.msra.mxu0 0
    %3042 = vmatpush.bf16.msra.mxu0 0
    %3043 = vmatpush.bf16.msra.mxu0 0
    %3044 = vmatpush.bf16.msra.mxu0 0
    %3045 = vmatpush.bf16.msra.mxu0 %v2952
    %3046 = vmatpush.bf16.msra.mxu0 %v2944
    %3047 = vmatmul.bf16.gmra.mxu0 %v2972
    %v3048 = vpop.f32.mrf.mxu0
    %v3049 = vadd.f32 %v2856, %v3048
    %v3050 = vpop.f32.mrf.mxu0
    %3051 = vdwg.mxu0
    %3052 = vmatpush.bf16.msra.mxu0 0
    %3053 = vmatpush.bf16.msra.mxu0 0
    %3054 = vmatpush.bf16.msra.mxu0 0
    %3055 = vmatpush.bf16.msra.mxu0 0
    %3056 = vmatpush.bf16.msra.mxu0 0
    %3057 = vmatpush.bf16.msra.mxu0 0
    %3058 = vmatpush.bf16.msra.mxu0 %v2953
    %3059 = vmatpush.bf16.msra.mxu0 %v2945
    %3060 = vmatmul.bf16.gmra.mxu0 %v2972
    %v3061 = vpop.f32.mrf.mxu0
    %v3062 = vadd.f32 %v2869, %v3061
    %v3063 = vpop.f32.mrf.mxu0
    %3064 = vdwg.mxu0
    %3065 = vmatpush.bf16.msra.mxu0 0
    %3066 = vmatpush.bf16.msra.mxu0 0
    %3067 = vmatpush.bf16.msra.mxu0 0
    %3068 = vmatpush.bf16.msra.mxu0 0
    %3069 = vmatpush.bf16.msra.mxu0 0
    %3070 = vmatpush.bf16.msra.mxu0 0
    %3071 = vmatpush.bf16.msra.mxu0 %v2954
    %3072 = vmatpush.bf16.msra.mxu0 %v2946
    %3073 = vmatmul.bf16.gmra.mxu0 %v2972
    %v3074 = vpop.f32.mrf.mxu0
    %v3075 = vadd.f32 %v2882, %v3074
    %v3076 = vpop.f32.mrf.mxu0
    %3077 = vdwg.mxu0
    %v3078 = vld [vmem:[%s25] sm:$0xff]
    %v3080 = vperm.slane %v3078, 0
    %v3081 = vperm.slane %v3078, 1
    %v3082 = vperm.slane %v3078, 2
    %v3083 = vperm.slane %v3078, 3
    %v3084 = vperm.slane %v3078, 4
    %v3085 = vperm.slane %v3078, 5
    %v3086 = vperm.slane %v3078, 6
    %v3087 = vperm.slane %v3078, 7
    %v3096 = vadd.f32 %v2984, %v3080
    %v3097 = vadd.f32 %v2997, %v3081
    %v3098 = vadd.f32 %v3010, %v3082
    %v3099 = vadd.f32 %v3023, %v3083
    %v3100 = vadd.f32 %v3036, %v3084
    %v3101 = vadd.f32 %v3049, %v3085
    %v3102 = vadd.f32 %v3062, %v3086
    %v3103 = vadd.f32 %v3075, %v3087
    %v3112 = vrot.slane %v3097, 6
    %v3113 = vrot.slane %v3098, 4
    %v3114 = vrot.slane %v3099, 2
    %v3115 = vrot.slane %v3101, 6
    %v3116 = vrot.slane %v3102, 4
    %v3117 = vrot.slane %v3103, 2
    %v3118 = vsel %vm840, %v3096, %v3112
    %vm3119 = vcmask 1045508
    %v3120 = vsel %vm3119, %v3113, %v3114
    %vm3121 = vcmask 1043456
    %v3122 = vsel %vm3121, %v3118, %v3120
    %v3123 = vsel %vm840, %v3100, %v3115
    %v3124 = vsel %vm3119, %v3116, %v3117
    %v3125 = vsel %vm3121, %v3123, %v3124
    %3128 = vst [vmem:[#allocation2] sm:$0xff] %v3122
    %3129 = vst [vmem:[#allocation2 + $0x8] sm:$0xff] %v3125
    // Predicated region
    $region106: #{dinov2_forward.1} parent=1 // pred_check
      _
    $region107: #{dinov2_forward.1} parent=1 // pred_check_branch
      %3131 = sbr.rel (0) target = $region109
    $region108: #{dinov2_forward.1} parent=1 // pred_region
      %3133 = vsyncadd [#allocation3], 0
      %s3135 = sshll.u32 [#allocation2], 4
      %s3136 = int_to_ptr.vmem [resolvable:$true] %s3135
      %s3137 = sshll.u32 %s26, 4
      %s3138 = int_to_ptr.hbm [resolvable:$true] %s3137
      %3140 = dma.vmem_to_hbm [thread:$0]  %s3136, 256, %s3138, [#allocation3]
    $region109: #{dinov2_forward.1} parent=1 // pred_fallthru
      _
    // Predicated region
    $region110: #{dinov2_forward.1} parent=1 // pred_check
      _
    $region111: #{dinov2_forward.1} parent=1 // pred_check_branch
      %3142 = sbr.rel (0) target = $region113
    $region112: #{dinov2_forward.1} parent=1 // pred_region
      %3144 = dma.done [#allocation3], 256
    $region113: #{dinov2_forward.1} parent=1 // pred_fallthru
      _
    %3145 = vsyncpa [#allocation3], 1

</llo_original>
